<compile_context>
chip_gen: v7x
topology: tpu7x:2x2x1
jax: 0.10.0
libtpu: 0.0.40
codegen_flags: <defaults>
</compile_context>

<pallas_src>
import numpy as np
import jax
import jax.numpy as jnp
from jax.experimental import pallas as pl
from jax.experimental.pallas import tpu as pltpu


def _pick_block_pixels(H: int, W: int, target: int = 256) -> int:
    """Largest whole-row pixel block <= target that evenly tiles H*W and satisfies the
    lane-tiling constraint (block % 128 == 0, or block == full H*W)."""
    total = H * W
    candidates = []
    for rows in range(1, H + 1):
        m = rows * W
        if total % m == 0 and (m % 128 == 0 or m == total):
            candidates.append(m)
    small = [m for m in candidates if m <= target]
    return max(small) if small else min(candidates)


def _scatter_matrix(W: int, mblk: int) -> np.ndarray:
    """E[t, m, p] = 1 iff input pixel m of a whole-row block writes flat output position p
    for tap t = (kh, kw):  p = 4*W*(m//W) + 2*W*kh + 2*(m%W) + kw  (block-relative)."""
    m = np.arange(mblk)
    h, w = m // W, m % W
    e = np.zeros((4, mblk, 4 * mblk), np.float32)
    for kh in range(2):
        for kw in range(2):
            t = 2 * kh + kw
            e[t, m, 4 * W * h + 2 * W * kh + 2 * w + kw] = 1.0
    return e


def _upsample_concat_kernel(w_ref, e_ref, x_ref, conv_ref, o_ref):
    # w_ref    : [4, Cout, Cin]        tap-major 2x2 weights (resident, constant index map)
    # e_ref    : [4, Mblk, 4*Mblk]     0/1 scatter matrices (resident)
    # x_ref    : [1, Cin, Mblk]        whole input rows, pixels on lanes
    # conv_ref : [1, Cout, 4*Mblk]     matching skip-connection pixels
    # o_ref    : [1, 2, Cout, 4*Mblk]  half 0: upsample result, half 1: concat copy
    x2 = x_ref[0]                                    # [Cin, Mblk]
    cout = w_ref.shape[1]
    nout = e_ref.shape[2]
    acc = jnp.zeros((cout, nout), jnp.float32)
    for t in range(4):                               # static unroll over the 2x2 taps
        y = jnp.dot(w_ref[t], x2, preferred_element_type=jnp.float32)          # [Cout, Mblk]
        acc = acc + jnp.dot(y, e_ref[t], preferred_element_type=jnp.float32)   # [Cout, 4*Mblk]
    o_ref[0, 0] = acc.astype(o_ref.dtype)            # upsampled channels (lane-dense store)
    o_ref[0, 1] = conv_ref[0].astype(o_ref.dtype)    # fused torch.cat: copy conv_result


def upsample_forward(x, conv_result, weight, *, block_pixels=256):
    """Equivalent of UpSample.forward.

    Args:
      x:           [B, Cin, H, W]      (NCHW, like PyTorch)
      conv_result: [B, Cout, 2H, 2W]
      weight:      [Cin, Cout, 2, 2]   (ConvTranspose2d weight layout)

    Returns:
      [B, 2*Cout, 2H, 2W]
    """
    B, Cin, H, W = x.shape
    Cout = weight.shape[1]
    HW = H * W

    mblk = _pick_block_pixels(H, W, target=block_pixels)
    n_blk = HW // mblk

    # Tiny one-time reorders / constants (O(Cin*Cout), O(mblk^2) -- not per-pixel traffic).
    w_all = jnp.transpose(weight, (2, 3, 1, 0)).reshape(4, Cout, Cin)  # [tap, Cout, Cin]
    e = jnp.asarray(_scatter_matrix(W, mblk))                          # [4, mblk, 4*mblk]

    # Free (pure-metadata) reshapes of the NCHW tensors.
    x_v = x.reshape(B, Cin, HW)
    conv_v = conv_result.reshape(B, Cout, 4 * HW)

    out_v = pl.pallas_call(
        _upsample_concat_kernel,
        out_shape=jax.ShapeDtypeStruct((B, 2, Cout, 4 * HW), x.dtype),
        grid_spec=pltpu.PrefetchScalarGridSpec(
            num_scalar_prefetch=0,
            grid=(B, n_blk),
            in_specs=[
                pl.BlockSpec((4, Cout, Cin), lambda b, i: (0, 0, 0)),       # weights (resident)
                pl.BlockSpec((4, mblk, 4 * mblk), lambda b, i: (0, 0, 0)),  # scatter E (resident)
                pl.BlockSpec((1, Cin, mblk), lambda b, i: (b, 0, i)),       # x rows
                pl.BlockSpec((1, Cout, 4 * mblk), lambda b, i: (b, 0, i)),  # skip connection
            ],
            out_specs=pl.BlockSpec((1, 2, Cout, 4 * mblk), lambda b, i: (b, 0, 0, i)),
        ),
        compiler_params=pltpu.CompilerParams(
            dimension_semantics=("parallel", "parallel"),
            vmem_limit_bytes=32 * 1024 * 1024,
        ),
    )(w_all, e, x_v, conv_v)

    # Free reshape back to NCHW [B, 2*Cout, 2H, 2W]; channel order = [upsampled, conv_result].
    return out_v.reshape(B, 2 * Cout, 2 * H, 2 * W)


def _reference_forward(x, conv_result, weight):
    # out[b,co,2h+kh,2w+kw] = sum_ci x[b,ci,h,w] * weight[ci,co,kh,kw]
    B, Cin, H, W = x.shape
    Cout = weight.shape[1]
    up = jnp.einsum("bchw,cokl->bohkwl", x, weight)
    up = up.reshape(B, Cout, 2 * H, 2 * W)
    return jnp.concatenate([up, conv_result], axis=1)


if __name__ == "__main__":
    key = jax.random.PRNGKey(0)
    k_x, k_c, k_w = jax.random.split(key, 3)

    B, Cin, Cout, H, W = 2, 8, 4, 16, 16
    x = jax.random.normal(k_x, (B, Cin, H, W), dtype=jnp.float32)
    conv_result = jax.random.normal(k_c, (B, Cout, 2 * H, 2 * W), dtype=jnp.float32)
    fan_in = Cin * 2 * 2
    bound = 1.0 / float(np.sqrt(fan_in))
    weight = jax.random.uniform(
        k_w, (Cin, Cout, 2, 2), dtype=jnp.float32, minval=-bound, maxval=bound
    )

    fwd = jax.jit(upsample_forward)
    out = jax.block_until_ready(fwd(x, conv_result, weight))
    ref = _reference_forward(x, conv_result, weight)

    assert out.shape == (B, 2 * Cout, 2 * H, 2 * W), out.shape
    assert jnp.allclose(out, ref, atol=1e-4, rtol=1e-4), "mismatch vs reference"
    print("KERNEL_OK")
</pallas_src>

<mosaic_0001>
module attributes {stable_mosaic.version = 11 : i64} {
  func.func @_upsample_concat_kernel(%arg0: i32, %arg1: i32, %arg2: memref<4x4x8xf32, #tpu.memory_space<vmem>>, %arg3: memref<4x256x1024xf32, #tpu.memory_space<vmem>>, %arg4: memref<1x8x256xf32, #tpu.memory_space<vmem>>, %arg5: memref<1x4x1024xf32, #tpu.memory_space<vmem>>, %arg6: memref<1x2x4x1024xf32, #tpu.memory_space<vmem>>) attributes {dimension_semantics = [#tpu.dimension_semantics<parallel>, #tpu.dimension_semantics<parallel>], iteration_bounds = array<i64: 2, 1>, scalar_prefetch = 0 : i64, scratch_operands = 0 : i64, tpu.core_type = #tpu.core_type<tc>, window_params = [{pipeline_mode = #tpu.pipeline_mode<synchronous>, transform_indices = @transform_0, window_bounds = array<i64: 4, 4, 8>}, {pipeline_mode = #tpu.pipeline_mode<synchronous>, transform_indices = @transform_1, window_bounds = array<i64: 4, 256, 1024>}, {transform_indices = @transform_2, window_bounds = array<i64: 1, 8, 256>}, {transform_indices = @transform_3, window_bounds = array<i64: 1, 4, 1024>}, {transform_indices = @transform_4, window_bounds = array<i64: 1, 2, 4, 1024>}]} {
    %c0 = arith.constant 0 : index
    %c0_0 = arith.constant 0 : index
    %c0_1 = arith.constant 0 : index
    %0 = vector.load %arg4[%c0, %c0_0, %c0_1] : memref<1x8x256xf32, #tpu.memory_space<vmem>>, vector<1x8x256xf32>
    %1 = vector.shape_cast %0 : vector<1x8x256xf32> to vector<8x256xf32>
    %cst = arith.constant 0.000000e+00 : f32
    %2 = vector.broadcast %cst : f32 to vector<4x1024xf32>
    %c0_2 = arith.constant 0 : index
    %c0_3 = arith.constant 0 : index
    %c0_4 = arith.constant 0 : index
    %3 = vector.load %arg2[%c0_2, %c0_3, %c0_4] : memref<4x4x8xf32, #tpu.memory_space<vmem>>, vector<1x4x8xf32>
    %4 = vector.shape_cast %3 : vector<1x4x8xf32> to vector<4x8xf32>
    %cst_5 = arith.constant dense<0.000000e+00> : vector<4x256xf32>
    %5 = tpu.matmul %4, %1, %cst_5 {dimension_numbers = #tpu.dot_dimension_numbers<[1], [0], [0], [1], [0, 0, 1, 1], [], []>} : vector<4x8xf32>, vector<8x256xf32>, vector<4x256xf32> -> vector<4x256xf32>
    %c0_6 = arith.constant 0 : index
    %c0_7 = arith.constant 0 : index
    %c0_8 = arith.constant 0 : index
    %6 = vector.load %arg3[%c0_6, %c0_7, %c0_8] : memref<4x256x1024xf32, #tpu.memory_space<vmem>>, vector<1x256x1024xf32>
    %7 = vector.shape_cast %6 : vector<1x256x1024xf32> to vector<256x1024xf32>
    %cst_9 = arith.constant dense<0.000000e+00> : vector<4x1024xf32>
    %8 = tpu.matmul %5, %7, %cst_9 {dimension_numbers = #tpu.dot_dimension_numbers<[1], [0], [0], [1], [0, 0, 1, 1], [], []>} : vector<4x256xf32>, vector<256x1024xf32>, vector<4x1024xf32> -> vector<4x1024xf32>
    %9 = arith.addf %2, %8 : vector<4x1024xf32>
    %c1 = arith.constant 1 : index
    %c0_10 = arith.constant 0 : index
    %c0_11 = arith.constant 0 : index
    %10 = vector.load %arg2[%c1, %c0_10, %c0_11] : memref<4x4x8xf32, #tpu.memory_space<vmem>>, vector<1x4x8xf32>
    %11 = vector.shape_cast %10 : vector<1x4x8xf32> to vector<4x8xf32>
    %cst_12 = arith.constant dense<0.000000e+00> : vector<4x256xf32>
    %12 = tpu.matmul %11, %1, %cst_12 {dimension_numbers = #tpu.dot_dimension_numbers<[1], [0], [0], [1], [0, 0, 1, 1], [], []>} : vector<4x8xf32>, vector<8x256xf32>, vector<4x256xf32> -> vector<4x256xf32>
    %c1_13 = arith.constant 1 : index
    %c0_14 = arith.constant 0 : index
    %c0_15 = arith.constant 0 : index
    %13 = vector.load %arg3[%c1_13, %c0_14, %c0_15] : memref<4x256x1024xf32, #tpu.memory_space<vmem>>, vector<1x256x1024xf32>
    %14 = vector.shape_cast %13 : vector<1x256x1024xf32> to vector<256x1024xf32>
    %cst_16 = arith.constant dense<0.000000e+00> : vector<4x1024xf32>
    %15 = tpu.matmul %12, %14, %cst_16 {dimension_numbers = #tpu.dot_dimension_numbers<[1], [0], [0], [1], [0, 0, 1, 1], [], []>} : vector<4x256xf32>, vector<256x1024xf32>, vector<4x1024xf32> -> vector<4x1024xf32>
    %16 = arith.addf %9, %15 : vector<4x1024xf32>
    %c2 = arith.constant 2 : index
    %c0_17 = arith.constant 0 : index
    %c0_18 = arith.constant 0 : index
    %17 = vector.load %arg2[%c2, %c0_17, %c0_18] : memref<4x4x8xf32, #tpu.memory_space<vmem>>, vector<1x4x8xf32>
    %18 = vector.shape_cast %17 : vector<1x4x8xf32> to vector<4x8xf32>
    %cst_19 = arith.constant dense<0.000000e+00> : vector<4x256xf32>
    %19 = tpu.matmul %18, %1, %cst_19 {dimension_numbers = #tpu.dot_dimension_numbers<[1], [0], [0], [1], [0, 0, 1, 1], [], []>} : vector<4x8xf32>, vector<8x256xf32>, vector<4x256xf32> -> vector<4x256xf32>
    %c2_20 = arith.constant 2 : index
    %c0_21 = arith.constant 0 : index
    %c0_22 = arith.constant 0 : index
    %20 = vector.load %arg3[%c2_20, %c0_21, %c0_22] : memref<4x256x1024xf32, #tpu.memory_space<vmem>>, vector<1x256x1024xf32>
    %21 = vector.shape_cast %20 : vector<1x256x1024xf32> to vector<256x1024xf32>
    %cst_23 = arith.constant dense<0.000000e+00> : vector<4x1024xf32>
    %22 = tpu.matmul %19, %21, %cst_23 {dimension_numbers = #tpu.dot_dimension_numbers<[1], [0], [0], [1], [0, 0, 1, 1], [], []>} : vector<4x256xf32>, vector<256x1024xf32>, vector<4x1024xf32> -> vector<4x1024xf32>
    %23 = arith.addf %16, %22 : vector<4x1024xf32>
    %c3 = arith.constant 3 : index
    %c0_24 = arith.constant 0 : index
    %c0_25 = arith.constant 0 : index
    %24 = vector.load %arg2[%c3, %c0_24, %c0_25] : memref<4x4x8xf32, #tpu.memory_space<vmem>>, vector<1x4x8xf32>
    %25 = vector.shape_cast %24 : vector<1x4x8xf32> to vector<4x8xf32>
    %cst_26 = arith.constant dense<0.000000e+00> : vector<4x256xf32>
    %26 = tpu.matmul %25, %1, %cst_26 {dimension_numbers = #tpu.dot_dimension_numbers<[1], [0], [0], [1], [0, 0, 1, 1], [], []>} : vector<4x8xf32>, vector<8x256xf32>, vector<4x256xf32> -> vector<4x256xf32>
    %c3_27 = arith.constant 3 : index
    %c0_28 = arith.constant 0 : index
    %c0_29 = arith.constant 0 : index
    %27 = vector.load %arg3[%c3_27, %c0_28, %c0_29] : memref<4x256x1024xf32, #tpu.memory_space<vmem>>, vector<1x256x1024xf32>
    %28 = vector.shape_cast %27 : vector<1x256x1024xf32> to vector<256x1024xf32>
    %cst_30 = arith.constant dense<0.000000e+00> : vector<4x1024xf32>
    %29 = tpu.matmul %26, %28, %cst_30 {dimension_numbers = #tpu.dot_dimension_numbers<[1], [0], [0], [1], [0, 0, 1, 1], [], []>} : vector<4x256xf32>, vector<256x1024xf32>, vector<4x1024xf32> -> vector<4x1024xf32>
    %30 = arith.addf %23, %29 : vector<4x1024xf32>
    %c0_31 = arith.constant 0 : index
    %c0_32 = arith.constant 0 : index
    %c0_33 = arith.constant 0 : index
    %c0_34 = arith.constant 0 : index
    %31 = vector.load %arg6[%c0_31, %c0_32, %c0_33, %c0_34] : memref<1x2x4x1024xf32, #tpu.memory_space<vmem>>, vector<1x1x4x1024xf32>
    %32 = vector.shape_cast %31 : vector<1x1x4x1024xf32> to vector<4x1024xf32>
    %33 = vector.shape_cast %30 : vector<4x1024xf32> to vector<1x1x4x1024xf32>
    tpu.vector_store %arg6[%c0_31, %c0_32, %c0_33, %c0_34], %33 {strides = array<i32>} : memref<1x2x4x1024xf32, #tpu.memory_space<vmem>>, vector<1x1x4x1024xf32>,
    %c0_35 = arith.constant 0 : index
    %c0_36 = arith.constant 0 : index
    %c0_37 = arith.constant 0 : index
    %34 = vector.load %arg5[%c0_35, %c0_36, %c0_37] : memref<1x4x1024xf32, #tpu.memory_space<vmem>>, vector<1x4x1024xf32>
    %35 = vector.shape_cast %34 : vector<1x4x1024xf32> to vector<4x1024xf32>
    %c0_38 = arith.constant 0 : index
    %c1_39 = arith.constant 1 : index
    %c0_40 = arith.constant 0 : index
    %c0_41 = arith.constant 0 : index
    %36 = vector.load %arg6[%c0_38, %c1_39, %c0_40, %c0_41] : memref<1x2x4x1024xf32, #tpu.memory_space<vmem>>, vector<1x1x4x1024xf32>
    %37 = vector.shape_cast %36 : vector<1x1x4x1024xf32> to vector<4x1024xf32>
    %38 = vector.shape_cast %35 : vector<4x1024xf32> to vector<1x1x4x1024xf32>
    tpu.vector_store %arg6[%c0_38, %c1_39, %c0_40, %c0_41], %38 {strides = array<i32>} : memref<1x2x4x1024xf32, #tpu.memory_space<vmem>>, vector<1x1x4x1024xf32>,
    return
  }
  func.func @transform_0(%arg0: i32, %arg1: i32) -> (i32, i32, i32) {
    %c0_i32 = arith.constant 0 : i32
    %c0_i32_0 = arith.constant 0 : i32
    %c0_i32_1 = arith.constant 0 : i32
    %c0_i32_2 = arith.constant 0 : i32
    return %c0_i32, %c0_i32_0, %c0_i32_1 : i32, i32, i32
  }
  func.func @transform_1(%arg0: i32, %arg1: i32) -> (i32, i32, i32) {
    %c0_i32 = arith.constant 0 : i32
    %c0_i32_0 = arith.constant 0 : i32
    %c0_i32_1 = arith.constant 0 : i32
    %c0_i32_2 = arith.constant 0 : i32
    return %c0_i32, %c0_i32_0, %c0_i32_1 : i32, i32, i32
  }
  func.func @transform_2(%arg0: i32, %arg1: i32) -> (i32, i32, i32) {
    %c0_i32 = arith.constant 0 : i32
    %c0_i32_0 = arith.constant 0 : i32
    return %arg0, %c0_i32, %arg1 : i32, i32, i32
  }
  func.func @transform_3(%arg0: i32, %arg1: i32) -> (i32, i32, i32) {
    %c0_i32 = arith.constant 0 : i32
    %c0_i32_0 = arith.constant 0 : i32
    return %arg0, %c0_i32, %arg1 : i32, i32, i32
  }
  func.func @transform_4(%arg0: i32, %arg1: i32) -> (i32, i32, i32, i32) {
    %c0_i32 = arith.constant 0 : i32
    %c0_i32_0 = arith.constant 0 : i32
    %c0_i32_1 = arith.constant 0 : i32
    return %arg0, %c0_i32, %c0_i32_0, %arg1 : i32, i32, i32, i32
  }
}

</mosaic_0001>

<llo_original>
// kernel: upsample_forward.1
$region0: #{upsample_forward.1}
  #allocation0 [shape = 'u32[]', space=smem, size = 0x4, offset = 0x4, fixed_abs, tag = 'smem constant byte address 0x4 - core index']
  #allocation1 [shape = 'u32[144,128]{1,0:T(1,128)}', space=vmem, size = 0x12000, scoped, tag = 'internal scratch']
  %s0 = inlined_call_operand.vmem [shape: f32[4,4,8], index: 0, kind: input, shape index: {}]
  %s1 = inlined_call_operand.hbm [shape: f32[4,256,1024], index: 1, kind: input, shape index: {}]
  %s2 = inlined_call_operand.vmem [shape: f32[2,8,256], index: 2, kind: input, shape index: {}]
  %s3 = inlined_call_operand.vmem [shape: f32[2,4,1024], index: 3, kind: input, shape index: {}]
  %s4 = inlined_call_operand.vmem [shape: f32[2,2,4,1024], index: 4, kind: output, shape index: {}]
  %s5 = sld [smem:[#allocation0]]
  $region53: #{upsample_forward.1} parent=0
    _
  %s7 = ssub.s32 1, %s5
  %s8 = scalar_select 0, %s7, %s5
  $region1: #{upsample_forward.1} parent=0
    #allocation2 [shape = 'u8[4194304]{0}', space=vmem, size = 0x400000, scoped, tag = 'input window, operand 1, single buffered']
    #allocation3 [shape = 's32[2]{0}', space=sflag, size = 0x8, scoped, tag = 'scoped memory for upsample_forward.1']
    %9 = vsyncpa [#allocation3], 0
    loop: start=0, step=1, limit=4
    $region2: #{upsample_forward.1} parent=1 // loop_pre_header
      _
    $region3: #{upsample_forward.1} parent=1 // loop_header
      %s11 = sphi 0, %s15
      %p12 = scmp.ge.s32.totalorder %s11, 4
      %s18 = sphi 0, %s30
      %s19 = sphi 0, %s26
      %s20 = sphi 0, %s18
      %s21 = sphi 0, %s19
      %s22 = sphi 0, %s20
      %s23 = sphi 0, %s21
      %s31 = sphi 0, %s31
      %s33 = sphi 0, %s31
      %s34 = sphi 0, %s33
      %s48 = sphi 0, %s34
      %s52 = sphi 0, %s52
      %s54 = sphi 0, %s52
      %s55 = sphi 0, %s54
      %s69 = sphi 0, %s55
      %s77 = sphi 0, %s79
      %s80 = sphi 0, %s77
      %s81 = sphi 0, %s80
      %s97 = sphi 0, %s81
      %s105 = sphi 0, %s107
      %s108 = sphi 0, %s105
      %s109 = sphi 0, %s108
      %s125 = sphi 0, %s109
      %s133 = sphi 0, %s135
      %s136 = sphi 0, %s133
      %s137 = sphi 0, %s136
      %s153 = sphi 0, %s137
    $region4: #{upsample_forward.1} parent=1 // loop_header_branch
      %14 = sbr.rel (%p12) target = $region8
    $region5: #{upsample_forward.1} parent=1 // loop_body
      %s16 = ssub.s32 %s11, 1
      %s17 = ssub.s32 %s11, 2
      %s24 = sadd.s32 1, %s19
      %p25 = scmp.ge.s32.totalorder %s24, 1
      %s26 = scalar_select %p25, 0, %s24
      %s27 = sadd.s32 1, %s18
      %s28 = scalar_select %p25, %s27, %s18
      %p29 = scmp.ge.s32.totalorder %s28, 2
      %s30 = scalar_select %p29, 0, %s28
      %s32 = sadd.s32 %s31, 1
      %p35 = scmp.eq.s32.totalorder %s11, 1
      %p36 = scmp.ne.s32.totalorder %s31, %s33
      %p37 = scmp.eq.s32.totalorder %s11, 0
      %p38 = por %p36, %p37
      %p39 = scmp.ne.s32.totalorder %s31, %s33
      %p40 = scmp.eq.s32.totalorder %s16, 1
      %p41 = por %p39, %p40
      %p42 = scmp.ne.s32.totalorder %s33, %s34
      %p43 = scmp.eq.s32.totalorder %s16, 0
      %p44 = por %p42, %p43
      %p45 = scmp.ne.s32.totalorder %s33, %s34
      %p46 = scmp.eq.s32.totalorder %s17, 1
      %p47 = por %p45, %p46
      %p49 = scmp.ne.s32.totalorder %s34, %s48
      %p50 = scmp.eq.s32.totalorder %s17, 0
      %p51 = por %p49, %p50
      %s53 = sadd.s32 %s52, 1
      %p56 = scmp.eq.s32.totalorder %s11, 1
      %p57 = scmp.ne.s32.totalorder %s52, %s54
      %p58 = scmp.eq.s32.totalorder %s11, 0
      %p59 = por %p57, %p58
      %p60 = scmp.ne.s32.totalorder %s52, %s54
      %p61 = scmp.eq.s32.totalorder %s16, 1
      %p62 = por %p60, %p61
      %p63 = scmp.ne.s32.totalorder %s54, %s55
      %p64 = scmp.eq.s32.totalorder %s16, 0
      %p65 = por %p63, %p64
      %p66 = scmp.ne.s32.totalorder %s54, %s55
      %p67 = scmp.eq.s32.totalorder %s17, 1
      %p68 = por %p66, %p67
      %p70 = scmp.ne.s32.totalorder %s55, %s69
      %p71 = scmp.eq.s32.totalorder %s17, 0
      %p72 = por %p70, %p71
      %s73 = ssub.s32 %s18, %s30
      %s74 = ssub.s32 %s19, %s26
      %s75 = sor.u32 %s73, %s74
      %p76 = scmp.eq.s32.totalorder %s75, 0
      %s78 = sadd.s32 %s77, 1
      %s79 = scalar_select %p76, %s77, %s78
      %p82 = pneg %p76
      %p83 = scmp.eq.s32.totalorder %s11, 1
      %p84 = por %p82, %p83
      %p85 = scmp.ne.s32.totalorder %s77, %s80
      %p86 = scmp.eq.s32.totalorder %s11, 0
      %p87 = por %p85, %p86
      %p88 = scmp.ne.s32.totalorder %s77, %s80
      %p89 = scmp.eq.s32.totalorder %s16, 1
      %p90 = por %p88, %p89
      %p91 = scmp.ne.s32.totalorder %s80, %s81
      %p92 = scmp.eq.s32.totalorder %s16, 0
      %p93 = por %p91, %p92
      %p94 = scmp.ne.s32.totalorder %s80, %s81
      %p95 = scmp.eq.s32.totalorder %s17, 1
      %p96 = por %p94, %p95
      %p98 = scmp.ne.s32.totalorder %s81, %s97
      %p99 = scmp.eq.s32.totalorder %s17, 0
      %p100 = por %p98, %p99
      %s101 = ssub.s32 %s18, %s30
      %s102 = ssub.s32 %s19, %s26
      %s103 = sor.u32 %s101, %s102
      %p104 = scmp.eq.s32.totalorder %s103, 0
      %s106 = sadd.s32 %s105, 1
      %s107 = scalar_select %p104, %s105, %s106
      %p110 = pneg %p104
      %p111 = scmp.eq.s32.totalorder %s11, 1
      %p112 = por %p110, %p111
      %p113 = scmp.ne.s32.totalorder %s105, %s108
      %p114 = scmp.eq.s32.totalorder %s11, 0
      %p115 = por %p113, %p114
      %p116 = scmp.ne.s32.totalorder %s105, %s108
      %p117 = scmp.eq.s32.totalorder %s16, 1
      %p118 = por %p116, %p117
      %p119 = scmp.ne.s32.totalorder %s108, %s109
      %p120 = scmp.eq.s32.totalorder %s16, 0
      %p121 = por %p119, %p120
      %p122 = scmp.ne.s32.totalorder %s108, %s109
      %p123 = scmp.eq.s32.totalorder %s17, 1
      %p124 = por %p122, %p123
      %p126 = scmp.ne.s32.totalorder %s109, %s125
      %p127 = scmp.eq.s32.totalorder %s17, 0
      %p128 = por %p126, %p127
      %s129 = ssub.s32 %s18, %s30
      %s130 = ssub.s32 %s19, %s26
      %s131 = sor.u32 %s129, %s130
      %p132 = scmp.eq.s32.totalorder %s131, 0
      %s134 = sadd.s32 %s133, 1
      %s135 = scalar_select %p132, %s133, %s134
      %p138 = pneg %p132
      %p139 = scmp.eq.s32.totalorder %s11, 1
      %p140 = por %p138, %p139
      %p141 = scmp.ne.s32.totalorder %s133, %s136
      %p142 = scmp.eq.s32.totalorder %s11, 0
      %p143 = por %p141, %p142
      %p144 = scmp.ne.s32.totalorder %s133, %s136
      %p145 = scmp.eq.s32.totalorder %s16, 1
      %p146 = por %p144, %p145
      %p147 = scmp.ne.s32.totalorder %s136, %s137
      %p148 = scmp.eq.s32.totalorder %s16, 0
      %p149 = por %p147, %p148
      %p150 = scmp.ne.s32.totalorder %s136, %s137
      %p151 = scmp.eq.s32.totalorder %s17, 1
      %p152 = por %p150, %p151
      %p154 = scmp.ne.s32.totalorder %s137, %s153
      %p155 = scmp.eq.s32.totalorder %s17, 0
      %p156 = por %p154, %p155
      %p157 = scmp.le.s32.totalorder 1, %s11
      %p158 = scmp.lt.s32.totalorder %s11, 3
      %p159 = pnand %p157, %p158
      %p160 = pneg %p159
      // Predicated region
      $region9: #{upsample_forward.1} parent=5 // pred_check
        _
      $region10: #{upsample_forward.1} parent=5 // pred_check_branch
        %162 = sbr.rel (%p159) target = $region12
      $region11: #{upsample_forward.1} parent=5 // pred_region
        %s163 = ssub.s32 %s11, 1
        // Predicated region
        $region13: #{upsample_forward.1} parent=11 // pred_check
          %p164 = pneg %p44
        $region14: #{upsample_forward.1} parent=11 // pred_check_branch
          %166 = sbr.rel (%p164) target = $region16
        $region15: #{upsample_forward.1} parent=11 // pred_region
          _
        $region16: #{upsample_forward.1} parent=11 // pred_fallthru
          _
        // Predicated region
        $region17: #{upsample_forward.1} parent=11 // pred_check
          %p167 = pneg %p65
        $region18: #{upsample_forward.1} parent=11 // pred_check_branch
          %169 = sbr.rel (%p167) target = $region20
        $region19: #{upsample_forward.1} parent=11 // pred_region
          %s171 = ssub.s32 131072, 131072
          %172 = vsyncadd [#allocation3], %s171
          %s173 = sshll.u32 [#allocation2], 4
          %s174 = int_to_ptr.vmem [resolvable:$true] %s173
          %179 = dma.hbm_to_vmem [thread:$0]  %s1, 131072, %s174, [#allocation3], 1024, 1024, 64
        $region20: #{upsample_forward.1} parent=11 // pred_fallthru
          _
      $region12: #{upsample_forward.1} parent=5 // pred_fallthru
        _
      %p180 = scmp.lt.s32.totalorder %s11, 2
      // Predicated region
      $region21: #{upsample_forward.1} parent=5 // pred_check
        %p181 = pneg %p180
      $region22: #{upsample_forward.1} parent=5 // pred_check_branch
        %183 = sbr.rel (%p181) target = $region24
      $region23: #{upsample_forward.1} parent=5 // pred_region
        // Predicated region
        $region25: #{upsample_forward.1} parent=23 // pred_check
          %p184 = pneg %p87
        $region26: #{upsample_forward.1} parent=23 // pred_check_branch
          %186 = sbr.rel (%p184) target = $region28
        $region27: #{upsample_forward.1} parent=23 // pred_region
          %s187 = smul.u32 2, %s19
          %p188 = scmp.lt.s32.totalorder %s18, 1
          %s189 = scalar_select %p188, %s18, 1
          %p190 = scmp.lt.s32.totalorder %s187, 1
          %s191 = scalar_select %p190, %s187, 1
          %s192 = smul.addr %s189, 2
          %s193 = sadd.s32 %s191, %s192
          %s194 = smul.addr %s193, 8
          %s195 = scalar_lea.vmem %s2, %s194
          %s196 = smul.u32 2, %s19
        $region28: #{upsample_forward.1} parent=23 // pred_fallthru
          _
        // Predicated region
        $region29: #{upsample_forward.1} parent=23 // pred_check
          %p197 = pneg %p115
        $region30: #{upsample_forward.1} parent=23 // pred_check_branch
          %199 = sbr.rel (%p197) target = $region32
        $region31: #{upsample_forward.1} parent=23 // pred_region
          %s200 = smul.u32 8, %s19
          %p201 = scmp.lt.s32.totalorder %s18, 1
          %s202 = scalar_select %p201, %s18, 1
          %p203 = scmp.lt.s32.totalorder %s200, 7
          %s204 = scalar_select %p203, %s200, 7
          %s205 = smul.addr %s202, 8
          %s206 = sadd.s32 %s204, %s205
          %s207 = smul.addr %s206, 4
          %s208 = scalar_lea.vmem %s3, %s207
          %s209 = smul.u32 8, %s19
        $region32: #{upsample_forward.1} parent=23 // pred_fallthru
          _
      $region24: #{upsample_forward.1} parent=5 // pred_fallthru
        _
      %p210 = scmp.le.s32.totalorder 1, %s11
      %p211 = scmp.lt.s32.totalorder %s11, 3
      %p212 = pnand %p210, %p211
      %p213 = pneg %p212
      // Predicated region
      $region33: #{upsample_forward.1} parent=5 // pred_check
        _
      $region34: #{upsample_forward.1} parent=5 // pred_check_branch
        %215 = sbr.rel (%p212) target = $region36
      $region35: #{upsample_forward.1} parent=5 // pred_region
        %s216 = ssub.s32 %s11, 1
        // Predicated region
        $region37: #{upsample_forward.1} parent=35 // pred_check
          %p217 = pneg %p65
        $region38: #{upsample_forward.1} parent=35 // pred_check_branch
          %219 = sbr.rel (%p217) target = $region40
        $region39: #{upsample_forward.1} parent=35 // pred_region
          %220 = dma.done [#allocation3], 131072
        $region40: #{upsample_forward.1} parent=35 // pred_fallthru
          _
        %p221 = pneg %p44
        %p222 = pneg %p41
        %p223 = pneg %p65
        %p224 = pneg %p62
        %s225 = smul.u32 2, %s21
        %p226 = scmp.lt.s32.totalorder %s20, 1
        %s227 = scalar_select %p226, %s20, 1
        %p228 = scmp.lt.s32.totalorder %s225, 1
        %s229 = scalar_select %p228, %s225, 1
        %s230 = smul.addr %s227, 2
        %s231 = sadd.s32 %s229, %s230
        %s232 = smul.addr %s231, 8
        %s233 = scalar_lea.vmem %s2, %s232
        %p234 = pneg %p93
        %p235 = pneg %p90
        %s236 = smul.u32 8, %s21
        %p237 = scmp.lt.s32.totalorder %s20, 1
        %s238 = scalar_select %p237, %s20, 1
        %p239 = scmp.lt.s32.totalorder %s236, 7
        %s240 = scalar_select %p239, %s236, 7
        %s241 = smul.addr %s238, 8
        %s242 = sadd.s32 %s240, %s241
        %s243 = smul.addr %s242, 4
        %s244 = scalar_lea.vmem %s3, %s243
        %p245 = pneg %p121
        %p246 = pneg %p118
        %p247 = pneg %p149
        %p248 = pneg %p146
        %s249 = smul.u32 8, %s21
        %p250 = scmp.lt.s32.totalorder %s20, 1
        %s251 = scalar_select %p250, %s20, 1
        %p252 = scmp.lt.s32.totalorder %s249, 7
        %s253 = scalar_select %p252, %s249, 7
        %s254 = smul.addr %s251, 16
        %s255 = sadd.s32 %s253, %s254
        %s256 = smul.addr %s255, 4
        %s257 = scalar_lea.vmem %s4, %s256
        %s258 = smul.u32 2, %s21
        %p259 = scmp.lt.s32.totalorder %s20, 1
        %s260 = scalar_select %p259, %s20, 1
        %p261 = scmp.lt.s32.totalorder %s258, 1
        %s262 = scalar_select %p261, %s258, 1
        %s263 = smul.addr %s260, 2
        %s264 = sadd.s32 %s262, %s263
        %s265 = smul.addr %s264, 8
        %s266 = scalar_lea.vmem %s2, %s265
        %s267 = smul.u32 2, %s21
        %s268 = smul.u32 8, %s21
        %p269 = scmp.lt.s32.totalorder %s20, 1
        %s270 = scalar_select %p269, %s20, 1
        %p271 = scmp.lt.s32.totalorder %s268, 7
        %s272 = scalar_select %p271, %s268, 7
        %s273 = smul.addr %s270, 8
        %s274 = sadd.s32 %s272, %s273
        %s275 = smul.addr %s274, 4
        %s276 = scalar_lea.vmem %s3, %s275
        %s277 = smul.u32 8, %s21
        %s278 = smul.u32 8, %s21
        %p279 = scmp.lt.s32.totalorder %s20, 1
        %s280 = scalar_select %p279, %s20, 1
        %p281 = scmp.lt.s32.totalorder %s278, 7
        %s282 = scalar_select %p281, %s278, 7
        %s283 = smul.addr %s280, 16
        %s284 = sadd.s32 %s282, %s283
        %s285 = smul.addr %s284, 4
        %s286 = scalar_lea.vmem %s4, %s285
        %s287 = smul.u32 8, %s21
        %v288 = vld [vmem:[%s266] sm:$0xff]
        %v289 = vld [vmem:[%s266 + $0x8] sm:$0xff]
        %v290 = vld [vmem:[%s0] sm:$0xf]
        %vm291 = vcmask 64512
        %v293 = vsel %vm291, %v290, 0
        %295 = vmatprep.subr.mxu0 %v289
        %296 = vmatpush1.msra.mxu0 %v288
        %297 = vmatprep.subr.mxu0 0.0
        %298 = vmatpush1.msra.mxu0 0.0
        %299 = vmatprep.subr.mxu0 0.0
        %300 = vmatpush1.msra.mxu0 0.0
        %301 = vmatprep.subr.mxu0 0.0
        %302 = vmatpush1.msra.mxu0 0.0
        %303 = vmatprep.subr.mxu0 0.0
        %304 = vmatpush1.msra.mxu0 0.0
        %305 = vmatprep.subr.mxu0 0.0
        %306 = vmatpush1.msra.mxu0 0.0
        %307 = vmatprep.subr.mxu0 0.0
        %308 = vmatpush1.msra.mxu0 0.0
        %309 = vmatprep.subr.mxu0 0.0
        %310 = vmatpush1.msra.mxu0 0.0
        %311 = vmatprep.subr.mxu0 0.0
        %312 = vmatpush1.msra.mxu0 0.0
        %313 = vmatprep.subr.mxu0 0.0
        %314 = vmatpush1.msra.mxu0 0.0
        %315 = vmatprep.subr.mxu0 0.0
        %316 = vmatpush1.msra.mxu0 0.0
        %317 = vmatprep.subr.mxu0 0.0
        %318 = vmatpush1.msra.mxu0 0.0
        %319 = vmatprep.subr.mxu0 0.0
        %320 = vmatpush1.msra.mxu0 0.0
        %321 = vmatprep.subr.mxu0 0.0
        %322 = vmatpush1.msra.mxu0 0.0
        %323 = vmatprep.subr.mxu0 0.0
        %324 = vmatpush1.msra.mxu0 0.0
        %325 = vmatprep.subr.mxu0 0.0
        %326 = vmatpush1.msra.mxu0 0.0
        %327 = vmatprep.subr.mxu0 0.0
        %328 = vmatpush1.msra.mxu0 0.0
        %329 = vmatprep.subr.mxu0 0.0
        %330 = vmatpush1.msra.mxu0 0.0
        %331 = vmatprep.subr.mxu0 0.0
        %332 = vmatpush1.msra.mxu0 0.0
        %333 = vmatprep.subr.mxu0 0.0
        %334 = vmatpush1.msra.mxu0 0.0
        %335 = vmatprep.subr.mxu0 0.0
        %336 = vmatpush1.msra.mxu0 0.0
        %337 = vmatprep.subr.mxu0 0.0
        %338 = vmatpush1.msra.mxu0 0.0
        %339 = vmatprep.subr.mxu0 0.0
        %340 = vmatpush1.msra.mxu0 0.0
        %341 = vmatprep.subr.mxu0 0.0
        %342 = vmatpush1.msra.mxu0 0.0
        %343 = vmatprep.subr.mxu0 0.0
        %344 = vmatpush1.msra.mxu0 0.0
        %345 = vmatprep.subr.mxu0 0.0
        %346 = vmatpush1.msra.mxu0 0.0
        %347 = vmatprep.subr.mxu0 0.0
        %348 = vmatpush1.msra.mxu0 0.0
        %349 = vmatprep.subr.mxu0 0.0
        %350 = vmatpush1.msra.mxu0 0.0
        %351 = vmatprep.subr.mxu0 0.0
        %352 = vmatpush1.msra.mxu0 0.0
        %353 = vmatprep.subr.mxu0 0.0
        %354 = vmatpush1.msra.mxu0 0.0
        %355 = vmatprep.subr.mxu0 0.0
        %356 = vmatpush1.msra.mxu0 0.0
        %357 = vmatprep.subr.mxu0 0.0
        %358 = vmatpush1.msra.mxu0 0.0
        %359 = vmatprep.mubr.f32.mxu0 0.0
        %360 = vmatmul.mubr.f32.gmra.mrb[0].mxu0 %v293
        %v361 = vpop.f32.mrb[0].mxu0
        %v362 = vadd.f32 0.0, %v361
        %v363 = vpop.f32.mrb[0].mxu0
        %v364 = vadd.f32 0.0, %v363
        %365 = vdwg.mxu0
        %v366 = vld [vmem:[#allocation2] sm:$0xff]
        %v367 = vld [vmem:[#allocation2 + $0x8] sm:$0xff]
        %v368 = vld [vmem:[#allocation2 + $0x10] sm:$0xff]
        %v369 = vld [vmem:[#allocation2 + $0x18] sm:$0xff]
        %v370 = vld [vmem:[#allocation2 + $0x20] sm:$0xff]
        %v371 = vld [vmem:[#allocation2 + $0x28] sm:$0xff]
        %v372 = vld [vmem:[#allocation2 + $0x30] sm:$0xff]
        %v373 = vld [vmem:[#allocation2 + $0x38] sm:$0xff]
        %v374 = vld [vmem:[#allocation2 + $0x40] sm:$0xff]
        %v375 = vld [vmem:[#allocation2 + $0x48] sm:$0xff]
        %v376 = vld [vmem:[#allocation2 + $0x50] sm:$0xff]
        %v377 = vld [vmem:[#allocation2 + $0x58] sm:$0xff]
        %v378 = vld [vmem:[#allocation2 + $0x60] sm:$0xff]
        %v379 = vld [vmem:[#allocation2 + $0x68] sm:$0xff]
        %v380 = vld [vmem:[#allocation2 + $0x70] sm:$0xff]
        %v381 = vld [vmem:[#allocation2 + $0x78] sm:$0xff]
        %v382 = vld [vmem:[#allocation2 + $0x80] sm:$0xff]
        %v383 = vld [vmem:[#allocation2 + $0x88] sm:$0xff]
        %v384 = vld [vmem:[#allocation2 + $0x90] sm:$0xff]
        %v385 = vld [vmem:[#allocation2 + $0x98] sm:$0xff]
        %v386 = vld [vmem:[#allocation2 + $0xa0] sm:$0xff]
        %v387 = vld [vmem:[#allocation2 + $0xa8] sm:$0xff]
        %v388 = vld [vmem:[#allocation2 + $0xb0] sm:$0xff]
        %v389 = vld [vmem:[#allocation2 + $0xb8] sm:$0xff]
        %v390 = vld [vmem:[#allocation2 + $0xc0] sm:$0xff]
        %v391 = vld [vmem:[#allocation2 + $0xc8] sm:$0xff]
        %v392 = vld [vmem:[#allocation2 + $0xd0] sm:$0xff]
        %v393 = vld [vmem:[#allocation2 + $0xd8] sm:$0xff]
        %v394 = vld [vmem:[#allocation2 + $0xe0] sm:$0xff]
        %v395 = vld [vmem:[#allocation2 + $0xe8] sm:$0xff]
        %v396 = vld [vmem:[#allocation2 + $0xf0] sm:$0xff]
        %v397 = vld [vmem:[#allocation2 + $0xf8] sm:$0xff]
        %v398 = vld [vmem:[#allocation2 + $0x100] sm:$0xff]
        %v399 = vld [vmem:[#allocation2 + $0x108] sm:$0xff]
        %v400 = vld [vmem:[#allocation2 + $0x110] sm:$0xff]
        %v401 = vld [vmem:[#allocation2 + $0x118] sm:$0xff]
        %v402 = vld [vmem:[#allocation2 + $0x120] sm:$0xff]
        %v403 = vld [vmem:[#allocation2 + $0x128] sm:$0xff]
        %v404 = vld [vmem:[#allocation2 + $0x130] sm:$0xff]
        %v405 = vld [vmem:[#allocation2 + $0x138] sm:$0xff]
        %v406 = vld [vmem:[#allocation2 + $0x140] sm:$0xff]
        %v407 = vld [vmem:[#allocation2 + $0x148] sm:$0xff]
        %v408 = vld [vmem:[#allocation2 + $0x150] sm:$0xff]
        %v409 = vld [vmem:[#allocation2 + $0x158] sm:$0xff]
        %v410 = vld [vmem:[#allocation2 + $0x160] sm:$0xff]
        %v411 = vld [vmem:[#allocation2 + $0x168] sm:$0xff]
        %v412 = vld [vmem:[#allocation2 + $0x170] sm:$0xff]
        %v413 = vld [vmem:[#allocation2 + $0x178] sm:$0xff]
        %v414 = vld [vmem:[#allocation2 + $0x180] sm:$0xff]
        %v415 = vld [vmem:[#allocation2 + $0x188] sm:$0xff]
        %v416 = vld [vmem:[#allocation2 + $0x190] sm:$0xff]
        %v417 = vld [vmem:[#allocation2 + $0x198] sm:$0xff]
        %v418 = vld [vmem:[#allocation2 + $0x1a0] sm:$0xff]
        %v419 = vld [vmem:[#allocation2 + $0x1a8] sm:$0xff]
        %v420 = vld [vmem:[#allocation2 + $0x1b0] sm:$0xff]
        %v421 = vld [vmem:[#allocation2 + $0x1b8] sm:$0xff]
        %v422 = vld [vmem:[#allocation2 + $0x1c0] sm:$0xff]
        %v423 = vld [vmem:[#allocation2 + $0x1c8] sm:$0xff]
        %v424 = vld [vmem:[#allocation2 + $0x1d0] sm:$0xff]
        %v425 = vld [vmem:[#allocation2 + $0x1d8] sm:$0xff]
        %v426 = vld [vmem:[#allocation2 + $0x1e0] sm:$0xff]
        %v427 = vld [vmem:[#allocation2 + $0x1e8] sm:$0xff]
        %v428 = vld [vmem:[#allocation2 + $0x1f0] sm:$0xff]
        %v429 = vld [vmem:[#allocation2 + $0x1f8] sm:$0xff]
        %v430 = vld [vmem:[#allocation2 + $0x200] sm:$0xff]
        %v431 = vld [vmem:[#allocation2 + $0x208] sm:$0xff]
        %v432 = vld [vmem:[#allocation2 + $0x210] sm:$0xff]
        %v433 = vld [vmem:[#allocation2 + $0x218] sm:$0xff]
        %v434 = vld [vmem:[#allocation2 + $0x220] sm:$0xff]
        %v435 = vld [vmem:[#allocation2 + $0x228] sm:$0xff]
        %v436 = vld [vmem:[#allocation2 + $0x230] sm:$0xff]
        %v437 = vld [vmem:[#allocation2 + $0x238] sm:$0xff]
        %v438 = vld [vmem:[#allocation2 + $0x240] sm:$0xff]
        %v439 = vld [vmem:[#allocation2 + $0x248] sm:$0xff]
        %v440 = vld [vmem:[#allocation2 + $0x250] sm:$0xff]
        %v441 = vld [vmem:[#allocation2 + $0x258] sm:$0xff]
        %v442 = vld [vmem:[#allocation2 + $0x260] sm:$0xff]
        %v443 = vld [vmem:[#allocation2 + $0x268] sm:$0xff]
        %v444 = vld [vmem:[#allocation2 + $0x270] sm:$0xff]
        %v445 = vld [vmem:[#allocation2 + $0x278] sm:$0xff]
        %v446 = vld [vmem:[#allocation2 + $0x280] sm:$0xff]
        %v447 = vld [vmem:[#allocation2 + $0x288] sm:$0xff]
        %v448 = vld [vmem:[#allocation2 + $0x290] sm:$0xff]
        %v449 = vld [vmem:[#allocation2 + $0x298] sm:$0xff]
        %v450 = vld [vmem:[#allocation2 + $0x2a0] sm:$0xff]
        %v451 = vld [vmem:[#allocation2 + $0x2a8] sm:$0xff]
        %v452 = vld [vmem:[#allocation2 + $0x2b0] sm:$0xff]
        %v453 = vld [vmem:[#allocation2 + $0x2b8] sm:$0xff]
        %v454 = vld [vmem:[#allocation2 + $0x2c0] sm:$0xff]
        %v455 = vld [vmem:[#allocation2 + $0x2c8] sm:$0xff]
        %v456 = vld [vmem:[#allocation2 + $0x2d0] sm:$0xff]
        %v457 = vld [vmem:[#allocation2 + $0x2d8] sm:$0xff]
        %v458 = vld [vmem:[#allocation2 + $0x2e0] sm:$0xff]
        %v459 = vld [vmem:[#allocation2 + $0x2e8] sm:$0xff]
        %v460 = vld [vmem:[#allocation2 + $0x2f0] sm:$0xff]
        %v461 = vld [vmem:[#allocation2 + $0x2f8] sm:$0xff]
        %v462 = vld [vmem:[#allocation2 + $0x300] sm:$0xff]
        %v463 = vld [vmem:[#allocation2 + $0x308] sm:$0xff]
        %v464 = vld [vmem:[#allocation2 + $0x310] sm:$0xff]
        %v465 = vld [vmem:[#allocation2 + $0x318] sm:$0xff]
        %v466 = vld [vmem:[#allocation2 + $0x320] sm:$0xff]
        %v467 = vld [vmem:[#allocation2 + $0x328] sm:$0xff]
        %v468 = vld [vmem:[#allocation2 + $0x330] sm:$0xff]
        %v469 = vld [vmem:[#allocation2 + $0x338] sm:$0xff]
        %v470 = vld [vmem:[#allocation2 + $0x340] sm:$0xff]
        %v471 = vld [vmem:[#allocation2 + $0x348] sm:$0xff]
        %v472 = vld [vmem:[#allocation2 + $0x350] sm:$0xff]
        %v473 = vld [vmem:[#allocation2 + $0x358] sm:$0xff]
        %v474 = vld [vmem:[#allocation2 + $0x360] sm:$0xff]
        %v475 = vld [vmem:[#allocation2 + $0x368] sm:$0xff]
        %v476 = vld [vmem:[#allocation2 + $0x370] sm:$0xff]
        %v477 = vld [vmem:[#allocation2 + $0x378] sm:$0xff]
        %v478 = vld [vmem:[#allocation2 + $0x380] sm:$0xff]
        %v479 = vld [vmem:[#allocation2 + $0x388] sm:$0xff]
        %v480 = vld [vmem:[#allocation2 + $0x390] sm:$0xff]
        %v481 = vld [vmem:[#allocation2 + $0x398] sm:$0xff]
        %v482 = vld [vmem:[#allocation2 + $0x3a0] sm:$0xff]
        %v483 = vld [vmem:[#allocation2 + $0x3a8] sm:$0xff]
        %v484 = vld [vmem:[#allocation2 + $0x3b0] sm:$0xff]
        %v485 = vld [vmem:[#allocation2 + $0x3b8] sm:$0xff]
        %v486 = vld [vmem:[#allocation2 + $0x3c0] sm:$0xff]
        %v487 = vld [vmem:[#allocation2 + $0x3c8] sm:$0xff]
        %v488 = vld [vmem:[#allocation2 + $0x3d0] sm:$0xff]
        %v489 = vld [vmem:[#allocation2 + $0x3d8] sm:$0xff]
        %v490 = vld [vmem:[#allocation2 + $0x3e0] sm:$0xff]
        %v491 = vld [vmem:[#allocation2 + $0x3e8] sm:$0xff]
        %v492 = vld [vmem:[#allocation2 + $0x3f0] sm:$0xff]
        %v493 = vld [vmem:[#allocation2 + $0x3f8] sm:$0xff]
        %v494 = vld [vmem:[#allocation2 + $0x400] sm:$0xff]
        %v495 = vld [vmem:[#allocation2 + $0x408] sm:$0xff]
        %v496 = vld [vmem:[#allocation2 + $0x410] sm:$0xff]
        %v497 = vld [vmem:[#allocation2 + $0x418] sm:$0xff]
        %v498 = vld [vmem:[#allocation2 + $0x420] sm:$0xff]
        %v499 = vld [vmem:[#allocation2 + $0x428] sm:$0xff]
        %v500 = vld [vmem:[#allocation2 + $0x430] sm:$0xff]
        %v501 = vld [vmem:[#allocation2 + $0x438] sm:$0xff]
        %v502 = vld [vmem:[#allocation2 + $0x440] sm:$0xff]
        %v503 = vld [vmem:[#allocation2 + $0x448] sm:$0xff]
        %v504 = vld [vmem:[#allocation2 + $0x450] sm:$0xff]
        %v505 = vld [vmem:[#allocation2 + $0x458] sm:$0xff]
        %v506 = vld [vmem:[#allocation2 + $0x460] sm:$0xff]
        %v507 = vld [vmem:[#allocation2 + $0x468] sm:$0xff]
        %v508 = vld [vmem:[#allocation2 + $0x470] sm:$0xff]
        %v509 = vld [vmem:[#allocation2 + $0x478] sm:$0xff]
        %v510 = vld [vmem:[#allocation2 + $0x480] sm:$0xff]
        %v511 = vld [vmem:[#allocation2 + $0x488] sm:$0xff]
        %v512 = vld [vmem:[#allocation2 + $0x490] sm:$0xff]
        %v513 = vld [vmem:[#allocation2 + $0x498] sm:$0xff]
        %v514 = vld [vmem:[#allocation2 + $0x4a0] sm:$0xff]
        %v515 = vld [vmem:[#allocation2 + $0x4a8] sm:$0xff]
        %v516 = vld [vmem:[#allocation2 + $0x4b0] sm:$0xff]
        %v517 = vld [vmem:[#allocation2 + $0x4b8] sm:$0xff]
        %v518 = vld [vmem:[#allocation2 + $0x4c0] sm:$0xff]
        %v519 = vld [vmem:[#allocation2 + $0x4c8] sm:$0xff]
        %v520 = vld [vmem:[#allocation2 + $0x4d0] sm:$0xff]
        %v521 = vld [vmem:[#allocation2 + $0x4d8] sm:$0xff]
        %v522 = vld [vmem:[#allocation2 + $0x4e0] sm:$0xff]
        %v523 = vld [vmem:[#allocation2 + $0x4e8] sm:$0xff]
        %v524 = vld [vmem:[#allocation2 + $0x4f0] sm:$0xff]
        %v525 = vld [vmem:[#allocation2 + $0x4f8] sm:$0xff]
        %v526 = vld [vmem:[#allocation2 + $0x500] sm:$0xff]
        %v527 = vld [vmem:[#allocation2 + $0x508] sm:$0xff]
        %v528 = vld [vmem:[#allocation2 + $0x510] sm:$0xff]
        %v529 = vld [vmem:[#allocation2 + $0x518] sm:$0xff]
        %v530 = vld [vmem:[#allocation2 + $0x520] sm:$0xff]
        %v531 = vld [vmem:[#allocation2 + $0x528] sm:$0xff]
        %v532 = vld [vmem:[#allocation2 + $0x530] sm:$0xff]
        %v533 = vld [vmem:[#allocation2 + $0x538] sm:$0xff]
        %v534 = vld [vmem:[#allocation2 + $0x540] sm:$0xff]
        %v535 = vld [vmem:[#allocation2 + $0x548] sm:$0xff]
        %v536 = vld [vmem:[#allocation2 + $0x550] sm:$0xff]
        %v537 = vld [vmem:[#allocation2 + $0x558] sm:$0xff]
        %v538 = vld [vmem:[#allocation2 + $0x560] sm:$0xff]
        %v539 = vld [vmem:[#allocation2 + $0x568] sm:$0xff]
        %v540 = vld [vmem:[#allocation2 + $0x570] sm:$0xff]
        %v541 = vld [vmem:[#allocation2 + $0x578] sm:$0xff]
        %v542 = vld [vmem:[#allocation2 + $0x580] sm:$0xff]
        %v543 = vld [vmem:[#allocation2 + $0x588] sm:$0xff]
        %v544 = vld [vmem:[#allocation2 + $0x590] sm:$0xff]
        %v545 = vld [vmem:[#allocation2 + $0x598] sm:$0xff]
        %v546 = vld [vmem:[#allocation2 + $0x5a0] sm:$0xff]
        %v547 = vld [vmem:[#allocation2 + $0x5a8] sm:$0xff]
        %v548 = vld [vmem:[#allocation2 + $0x5b0] sm:$0xff]
        %v549 = vld [vmem:[#allocation2 + $0x5b8] sm:$0xff]
        %v550 = vld [vmem:[#allocation2 + $0x5c0] sm:$0xff]
        %v551 = vld [vmem:[#allocation2 + $0x5c8] sm:$0xff]
        %v552 = vld [vmem:[#allocation2 + $0x5d0] sm:$0xff]
        %v553 = vld [vmem:[#allocation2 + $0x5d8] sm:$0xff]
        %v554 = vld [vmem:[#allocation2 + $0x5e0] sm:$0xff]
        %v555 = vld [vmem:[#allocation2 + $0x5e8] sm:$0xff]
        %v556 = vld [vmem:[#allocation2 + $0x5f0] sm:$0xff]
        %v557 = vld [vmem:[#allocation2 + $0x5f8] sm:$0xff]
        %v558 = vld [vmem:[#allocation2 + $0x600] sm:$0xff]
        %v559 = vld [vmem:[#allocation2 + $0x608] sm:$0xff]
        %v560 = vld [vmem:[#allocation2 + $0x610] sm:$0xff]
        %v561 = vld [vmem:[#allocation2 + $0x618] sm:$0xff]
        %v562 = vld [vmem:[#allocation2 + $0x620] sm:$0xff]
        %v563 = vld [vmem:[#allocation2 + $0x628] sm:$0xff]
        %v564 = vld [vmem:[#allocation2 + $0x630] sm:$0xff]
        %v565 = vld [vmem:[#allocation2 + $0x638] sm:$0xff]
        %v566 = vld [vmem:[#allocation2 + $0x640] sm:$0xff]
        %v567 = vld [vmem:[#allocation2 + $0x648] sm:$0xff]
        %v568 = vld [vmem:[#allocation2 + $0x650] sm:$0xff]
        %v569 = vld [vmem:[#allocation2 + $0x658] sm:$0xff]
        %v570 = vld [vmem:[#allocation2 + $0x660] sm:$0xff]
        %v571 = vld [vmem:[#allocation2 + $0x668] sm:$0xff]
        %v572 = vld [vmem:[#allocation2 + $0x670] sm:$0xff]
        %v573 = vld [vmem:[#allocation2 + $0x678] sm:$0xff]
        %v574 = vld [vmem:[#allocation2 + $0x680] sm:$0xff]
        %v575 = vld [vmem:[#allocation2 + $0x688] sm:$0xff]
        %v576 = vld [vmem:[#allocation2 + $0x690] sm:$0xff]
        %v577 = vld [vmem:[#allocation2 + $0x698] sm:$0xff]
        %v578 = vld [vmem:[#allocation2 + $0x6a0] sm:$0xff]
        %v579 = vld [vmem:[#allocation2 + $0x6a8] sm:$0xff]
        %v580 = vld [vmem:[#allocation2 + $0x6b0] sm:$0xff]
        %v581 = vld [vmem:[#allocation2 + $0x6b8] sm:$0xff]
        %v582 = vld [vmem:[#allocation2 + $0x6c0] sm:$0xff]
        %v583 = vld [vmem:[#allocation2 + $0x6c8] sm:$0xff]
        %v584 = vld [vmem:[#allocation2 + $0x6d0] sm:$0xff]
        %v585 = vld [vmem:[#allocation2 + $0x6d8] sm:$0xff]
        %v586 = vld [vmem:[#allocation2 + $0x6e0] sm:$0xff]
        %v587 = vld [vmem:[#allocation2 + $0x6e8] sm:$0xff]
        %v588 = vld [vmem:[#allocation2 + $0x6f0] sm:$0xff]
        %v589 = vld [vmem:[#allocation2 + $0x6f8] sm:$0xff]
        %v590 = vld [vmem:[#allocation2 + $0x700] sm:$0xff]
        %v591 = vld [vmem:[#allocation2 + $0x708] sm:$0xff]
        %v592 = vld [vmem:[#allocation2 + $0x710] sm:$0xff]
        %v593 = vld [vmem:[#allocation2 + $0x718] sm:$0xff]
        %v594 = vld [vmem:[#allocation2 + $0x720] sm:$0xff]
        %v595 = vld [vmem:[#allocation2 + $0x728] sm:$0xff]
        %v596 = vld [vmem:[#allocation2 + $0x730] sm:$0xff]
        %v597 = vld [vmem:[#allocation2 + $0x738] sm:$0xff]
        %v598 = vld [vmem:[#allocation2 + $0x740] sm:$0xff]
        %v599 = vld [vmem:[#allocation2 + $0x748] sm:$0xff]
        %v600 = vld [vmem:[#allocation2 + $0x750] sm:$0xff]
        %v601 = vld [vmem:[#allocation2 + $0x758] sm:$0xff]
        %v602 = vld [vmem:[#allocation2 + $0x760] sm:$0xff]
        %v603 = vld [vmem:[#allocation2 + $0x768] sm:$0xff]
        %v604 = vld [vmem:[#allocation2 + $0x770] sm:$0xff]
        %v605 = vld [vmem:[#allocation2 + $0x778] sm:$0xff]
        %v606 = vld [vmem:[#allocation2 + $0x780] sm:$0xff]
        %v607 = vld [vmem:[#allocation2 + $0x788] sm:$0xff]
        %v608 = vld [vmem:[#allocation2 + $0x790] sm:$0xff]
        %v609 = vld [vmem:[#allocation2 + $0x798] sm:$0xff]
        %v610 = vld [vmem:[#allocation2 + $0x7a0] sm:$0xff]
        %v611 = vld [vmem:[#allocation2 + $0x7a8] sm:$0xff]
        %v612 = vld [vmem:[#allocation2 + $0x7b0] sm:$0xff]
        %v613 = vld [vmem:[#allocation2 + $0x7b8] sm:$0xff]
        %v614 = vld [vmem:[#allocation2 + $0x7c0] sm:$0xff]
        %v615 = vld [vmem:[#allocation2 + $0x7c8] sm:$0xff]
        %v616 = vld [vmem:[#allocation2 + $0x7d0] sm:$0xff]
        %v617 = vld [vmem:[#allocation2 + $0x7d8] sm:$0xff]
        %v618 = vld [vmem:[#allocation2 + $0x7e0] sm:$0xff]
        %v619 = vld [vmem:[#allocation2 + $0x7e8] sm:$0xff]
        %v620 = vld [vmem:[#allocation2 + $0x7f0] sm:$0xff]
        %v621 = vld [vmem:[#allocation2 + $0x7f8] sm:$0xff]
        %s622 = scalar_lea.vmem %s0, 4
        %v623 = vld [vmem:[%s622] sm:$0xf]
        %v625 = vsel %vm291, %v623, 0
        %627 = vmatprep.subr.mxu0 %v289
        %628 = vmatpush1.msra.mxu0 %v288
        %629 = vmatprep.subr.mxu0 0.0
        %630 = vmatpush1.msra.mxu0 0.0
        %631 = vmatprep.subr.mxu0 0.0
        %632 = vmatpush1.msra.mxu0 0.0
        %633 = vmatprep.subr.mxu0 0.0
        %634 = vmatpush1.msra.mxu0 0.0
        %635 = vmatprep.subr.mxu0 0.0
        %636 = vmatpush1.msra.mxu0 0.0
        %637 = vmatprep.subr.mxu0 0.0
        %638 = vmatpush1.msra.mxu0 0.0
        %639 = vmatprep.subr.mxu0 0.0
        %640 = vmatpush1.msra.mxu0 0.0
        %641 = vmatprep.subr.mxu0 0.0
        %642 = vmatpush1.msra.mxu0 0.0
        %643 = vmatprep.subr.mxu0 0.0
        %644 = vmatpush1.msra.mxu0 0.0
        %645 = vmatprep.subr.mxu0 0.0
        %646 = vmatpush1.msra.mxu0 0.0
        %647 = vmatprep.subr.mxu0 0.0
        %648 = vmatpush1.msra.mxu0 0.0
        %649 = vmatprep.subr.mxu0 0.0
        %650 = vmatpush1.msra.mxu0 0.0
        %651 = vmatprep.subr.mxu0 0.0
        %652 = vmatpush1.msra.mxu0 0.0
        %653 = vmatprep.subr.mxu0 0.0
        %654 = vmatpush1.msra.mxu0 0.0
        %655 = vmatprep.subr.mxu0 0.0
        %656 = vmatpush1.msra.mxu0 0.0
        %657 = vmatprep.subr.mxu0 0.0
        %658 = vmatpush1.msra.mxu0 0.0
        %659 = vmatprep.subr.mxu0 0.0
        %660 = vmatpush1.msra.mxu0 0.0
        %661 = vmatprep.subr.mxu0 0.0
        %662 = vmatpush1.msra.mxu0 0.0
        %663 = vmatprep.subr.mxu0 0.0
        %664 = vmatpush1.msra.mxu0 0.0
        %665 = vmatprep.subr.mxu0 0.0
        %666 = vmatpush1.msra.mxu0 0.0
        %667 = vmatprep.subr.mxu0 0.0
        %668 = vmatpush1.msra.mxu0 0.0
        %669 = vmatprep.subr.mxu0 0.0
        %670 = vmatpush1.msra.mxu0 0.0
        %671 = vmatprep.subr.mxu0 0.0
        %672 = vmatpush1.msra.mxu0 0.0
        %673 = vmatprep.subr.mxu0 0.0
        %674 = vmatpush1.msra.mxu0 0.0
        %675 = vmatprep.subr.mxu0 0.0
        %676 = vmatpush1.msra.mxu0 0.0
        %677 = vmatprep.subr.mxu0 0.0
        %678 = vmatpush1.msra.mxu0 0.0
        %679 = vmatprep.subr.mxu0 0.0
        %680 = vmatpush1.msra.mxu0 0.0
        %681 = vmatprep.subr.mxu0 0.0
        %682 = vmatpush1.msra.mxu0 0.0
        %683 = vmatprep.subr.mxu0 0.0
        %684 = vmatpush1.msra.mxu0 0.0
        %685 = vmatprep.subr.mxu0 0.0
        %686 = vmatpush1.msra.mxu0 0.0
        %687 = vmatprep.subr.mxu0 0.0
        %688 = vmatpush1.msra.mxu0 0.0
        %689 = vmatprep.subr.mxu0 0.0
        %690 = vmatpush1.msra.mxu0 0.0
        %691 = vmatprep.mubr.f32.mxu0 0.0
        %692 = vmatmul.mubr.f32.gmra.mrb[0].mxu0 %v625
        %v693 = vpop.f32.mrb[0].mxu0
        %v694 = vadd.f32 0.0, %v693
        %v695 = vpop.f32.mrb[0].mxu0
        %v696 = vadd.f32 0.0, %v695
        %697 = vdwg.mxu0
        %s698 = scalar_lea.vmem [#allocation2], 2048
        %v699 = vld [vmem:[%s698] sm:$0xff]
        %v700 = vld [vmem:[%s698 + $0x8] sm:$0xff]
        %v701 = vld [vmem:[%s698 + $0x10] sm:$0xff]
        %v702 = vld [vmem:[%s698 + $0x18] sm:$0xff]
        %v703 = vld [vmem:[%s698 + $0x20] sm:$0xff]
        %v704 = vld [vmem:[%s698 + $0x28] sm:$0xff]
        %v705 = vld [vmem:[%s698 + $0x30] sm:$0xff]
        %v706 = vld [vmem:[%s698 + $0x38] sm:$0xff]
        %v707 = vld [vmem:[%s698 + $0x40] sm:$0xff]
        %v708 = vld [vmem:[%s698 + $0x48] sm:$0xff]
        %v709 = vld [vmem:[%s698 + $0x50] sm:$0xff]
        %v710 = vld [vmem:[%s698 + $0x58] sm:$0xff]
        %v711 = vld [vmem:[%s698 + $0x60] sm:$0xff]
        %v712 = vld [vmem:[%s698 + $0x68] sm:$0xff]
        %v713 = vld [vmem:[%s698 + $0x70] sm:$0xff]
        %v714 = vld [vmem:[%s698 + $0x78] sm:$0xff]
        %v715 = vld [vmem:[%s698 + $0x80] sm:$0xff]
        %v716 = vld [vmem:[%s698 + $0x88] sm:$0xff]
        %v717 = vld [vmem:[%s698 + $0x90] sm:$0xff]
        %v718 = vld [vmem:[%s698 + $0x98] sm:$0xff]
        %v719 = vld [vmem:[%s698 + $0xa0] sm:$0xff]
        %v720 = vld [vmem:[%s698 + $0xa8] sm:$0xff]
        %v721 = vld [vmem:[%s698 + $0xb0] sm:$0xff]
        %v722 = vld [vmem:[%s698 + $0xb8] sm:$0xff]
        %v723 = vld [vmem:[%s698 + $0xc0] sm:$0xff]
        %v724 = vld [vmem:[%s698 + $0xc8] sm:$0xff]
        %v725 = vld [vmem:[%s698 + $0xd0] sm:$0xff]
        %v726 = vld [vmem:[%s698 + $0xd8] sm:$0xff]
        %v727 = vld [vmem:[%s698 + $0xe0] sm:$0xff]
        %v728 = vld [vmem:[%s698 + $0xe8] sm:$0xff]
        %v729 = vld [vmem:[%s698 + $0xf0] sm:$0xff]
        %v730 = vld [vmem:[%s698 + $0xf8] sm:$0xff]
        %v731 = vld [vmem:[%s698 + $0x100] sm:$0xff]
        %v732 = vld [vmem:[%s698 + $0x108] sm:$0xff]
        %v733 = vld [vmem:[%s698 + $0x110] sm:$0xff]
        %v734 = vld [vmem:[%s698 + $0x118] sm:$0xff]
        %v735 = vld [vmem:[%s698 + $0x120] sm:$0xff]
        %v736 = vld [vmem:[%s698 + $0x128] sm:$0xff]
        %v737 = vld [vmem:[%s698 + $0x130] sm:$0xff]
        %v738 = vld [vmem:[%s698 + $0x138] sm:$0xff]
        %v739 = vld [vmem:[%s698 + $0x140] sm:$0xff]
        %v740 = vld [vmem:[%s698 + $0x148] sm:$0xff]
        %v741 = vld [vmem:[%s698 + $0x150] sm:$0xff]
        %v742 = vld [vmem:[%s698 + $0x158] sm:$0xff]
        %v743 = vld [vmem:[%s698 + $0x160] sm:$0xff]
        %v744 = vld [vmem:[%s698 + $0x168] sm:$0xff]
        %v745 = vld [vmem:[%s698 + $0x170] sm:$0xff]
        %v746 = vld [vmem:[%s698 + $0x178] sm:$0xff]
        %v747 = vld [vmem:[%s698 + $0x180] sm:$0xff]
        %v748 = vld [vmem:[%s698 + $0x188] sm:$0xff]
        %v749 = vld [vmem:[%s698 + $0x190] sm:$0xff]
        %v750 = vld [vmem:[%s698 + $0x198] sm:$0xff]
        %v751 = vld [vmem:[%s698 + $0x1a0] sm:$0xff]
        %v752 = vld [vmem:[%s698 + $0x1a8] sm:$0xff]
        %v753 = vld [vmem:[%s698 + $0x1b0] sm:$0xff]
        %v754 = vld [vmem:[%s698 + $0x1b8] sm:$0xff]
        %v755 = vld [vmem:[%s698 + $0x1c0] sm:$0xff]
        %v756 = vld [vmem:[%s698 + $0x1c8] sm:$0xff]
        %v757 = vld [vmem:[%s698 + $0x1d0] sm:$0xff]
        %v758 = vld [vmem:[%s698 + $0x1d8] sm:$0xff]
        %v759 = vld [vmem:[%s698 + $0x1e0] sm:$0xff]
        %v760 = vld [vmem:[%s698 + $0x1e8] sm:$0xff]
        %v761 = vld [vmem:[%s698 + $0x1f0] sm:$0xff]
        %v762 = vld [vmem:[%s698 + $0x1f8] sm:$0xff]
        %v763 = vld [vmem:[%s698 + $0x200] sm:$0xff]
        %v764 = vld [vmem:[%s698 + $0x208] sm:$0xff]
        %v765 = vld [vmem:[%s698 + $0x210] sm:$0xff]
        %v766 = vld [vmem:[%s698 + $0x218] sm:$0xff]
        %v767 = vld [vmem:[%s698 + $0x220] sm:$0xff]
        %v768 = vld [vmem:[%s698 + $0x228] sm:$0xff]
        %v769 = vld [vmem:[%s698 + $0x230] sm:$0xff]
        %v770 = vld [vmem:[%s698 + $0x238] sm:$0xff]
        %v771 = vld [vmem:[%s698 + $0x240] sm:$0xff]
        %v772 = vld [vmem:[%s698 + $0x248] sm:$0xff]
        %v773 = vld [vmem:[%s698 + $0x250] sm:$0xff]
        %v774 = vld [vmem:[%s698 + $0x258] sm:$0xff]
        %v775 = vld [vmem:[%s698 + $0x260] sm:$0xff]
        %v776 = vld [vmem:[%s698 + $0x268] sm:$0xff]
        %v777 = vld [vmem:[%s698 + $0x270] sm:$0xff]
        %v778 = vld [vmem:[%s698 + $0x278] sm:$0xff]
        %v779 = vld [vmem:[%s698 + $0x280] sm:$0xff]
        %v780 = vld [vmem:[%s698 + $0x288] sm:$0xff]
        %v781 = vld [vmem:[%s698 + $0x290] sm:$0xff]
        %v782 = vld [vmem:[%s698 + $0x298] sm:$0xff]
        %v783 = vld [vmem:[%s698 + $0x2a0] sm:$0xff]
        %v784 = vld [vmem:[%s698 + $0x2a8] sm:$0xff]
        %v785 = vld [vmem:[%s698 + $0x2b0] sm:$0xff]
        %v786 = vld [vmem:[%s698 + $0x2b8] sm:$0xff]
        %v787 = vld [vmem:[%s698 + $0x2c0] sm:$0xff]
        %v788 = vld [vmem:[%s698 + $0x2c8] sm:$0xff]
        %v789 = vld [vmem:[%s698 + $0x2d0] sm:$0xff]
        %v790 = vld [vmem:[%s698 + $0x2d8] sm:$0xff]
        %v791 = vld [vmem:[%s698 + $0x2e0] sm:$0xff]
        %v792 = vld [vmem:[%s698 + $0x2e8] sm:$0xff]
        %v793 = vld [vmem:[%s698 + $0x2f0] sm:$0xff]
        %v794 = vld [vmem:[%s698 + $0x2f8] sm:$0xff]
        %v795 = vld [vmem:[%s698 + $0x300] sm:$0xff]
        %v796 = vld [vmem:[%s698 + $0x308] sm:$0xff]
        %v797 = vld [vmem:[%s698 + $0x310] sm:$0xff]
        %v798 = vld [vmem:[%s698 + $0x318] sm:$0xff]
        %v799 = vld [vmem:[%s698 + $0x320] sm:$0xff]
        %v800 = vld [vmem:[%s698 + $0x328] sm:$0xff]
        %v801 = vld [vmem:[%s698 + $0x330] sm:$0xff]
        %v802 = vld [vmem:[%s698 + $0x338] sm:$0xff]
        %v803 = vld [vmem:[%s698 + $0x340] sm:$0xff]
        %v804 = vld [vmem:[%s698 + $0x348] sm:$0xff]
        %v805 = vld [vmem:[%s698 + $0x350] sm:$0xff]
        %v806 = vld [vmem:[%s698 + $0x358] sm:$0xff]
        %v807 = vld [vmem:[%s698 + $0x360] sm:$0xff]
        %v808 = vld [vmem:[%s698 + $0x368] sm:$0xff]
        %v809 = vld [vmem:[%s698 + $0x370] sm:$0xff]
        %v810 = vld [vmem:[%s698 + $0x378] sm:$0xff]
        %v811 = vld [vmem:[%s698 + $0x380] sm:$0xff]
        %v812 = vld [vmem:[%s698 + $0x388] sm:$0xff]
        %v813 = vld [vmem:[%s698 + $0x390] sm:$0xff]
        %v814 = vld [vmem:[%s698 + $0x398] sm:$0xff]
        %v815 = vld [vmem:[%s698 + $0x3a0] sm:$0xff]
        %v816 = vld [vmem:[%s698 + $0x3a8] sm:$0xff]
        %v817 = vld [vmem:[%s698 + $0x3b0] sm:$0xff]
        %v818 = vld [vmem:[%s698 + $0x3b8] sm:$0xff]
        %v819 = vld [vmem:[%s698 + $0x3c0] sm:$0xff]
        %v820 = vld [vmem:[%s698 + $0x3c8] sm:$0xff]
        %v821 = vld [vmem:[%s698 + $0x3d0] sm:$0xff]
        %v822 = vld [vmem:[%s698 + $0x3d8] sm:$0xff]
        %v823 = vld [vmem:[%s698 + $0x3e0] sm:$0xff]
        %v824 = vld [vmem:[%s698 + $0x3e8] sm:$0xff]
        %v825 = vld [vmem:[%s698 + $0x3f0] sm:$0xff]
        %v826 = vld [vmem:[%s698 + $0x3f8] sm:$0xff]
        %v827 = vld [vmem:[%s698 + $0x400] sm:$0xff]
        %v828 = vld [vmem:[%s698 + $0x408] sm:$0xff]
        %v829 = vld [vmem:[%s698 + $0x410] sm:$0xff]
        %v830 = vld [vmem:[%s698 + $0x418] sm:$0xff]
        %v831 = vld [vmem:[%s698 + $0x420] sm:$0xff]
        %v832 = vld [vmem:[%s698 + $0x428] sm:$0xff]
        %v833 = vld [vmem:[%s698 + $0x430] sm:$0xff]
        %v834 = vld [vmem:[%s698 + $0x438] sm:$0xff]
        %v835 = vld [vmem:[%s698 + $0x440] sm:$0xff]
        %v836 = vld [vmem:[%s698 + $0x448] sm:$0xff]
        %v837 = vld [vmem:[%s698 + $0x450] sm:$0xff]
        %v838 = vld [vmem:[%s698 + $0x458] sm:$0xff]
        %v839 = vld [vmem:[%s698 + $0x460] sm:$0xff]
        %v840 = vld [vmem:[%s698 + $0x468] sm:$0xff]
        %v841 = vld [vmem:[%s698 + $0x470] sm:$0xff]
        %v842 = vld [vmem:[%s698 + $0x478] sm:$0xff]
        %v843 = vld [vmem:[%s698 + $0x480] sm:$0xff]
        %v844 = vld [vmem:[%s698 + $0x488] sm:$0xff]
        %v845 = vld [vmem:[%s698 + $0x490] sm:$0xff]
        %v846 = vld [vmem:[%s698 + $0x498] sm:$0xff]
        %v847 = vld [vmem:[%s698 + $0x4a0] sm:$0xff]
        %v848 = vld [vmem:[%s698 + $0x4a8] sm:$0xff]
        %v849 = vld [vmem:[%s698 + $0x4b0] sm:$0xff]
        %v850 = vld [vmem:[%s698 + $0x4b8] sm:$0xff]
        %v851 = vld [vmem:[%s698 + $0x4c0] sm:$0xff]
        %v852 = vld [vmem:[%s698 + $0x4c8] sm:$0xff]
        %v853 = vld [vmem:[%s698 + $0x4d0] sm:$0xff]
        %v854 = vld [vmem:[%s698 + $0x4d8] sm:$0xff]
        %v855 = vld [vmem:[%s698 + $0x4e0] sm:$0xff]
        %v856 = vld [vmem:[%s698 + $0x4e8] sm:$0xff]
        %v857 = vld [vmem:[%s698 + $0x4f0] sm:$0xff]
        %v858 = vld [vmem:[%s698 + $0x4f8] sm:$0xff]
        %v859 = vld [vmem:[%s698 + $0x500] sm:$0xff]
        %v860 = vld [vmem:[%s698 + $0x508] sm:$0xff]
        %v861 = vld [vmem:[%s698 + $0x510] sm:$0xff]
        %v862 = vld [vmem:[%s698 + $0x518] sm:$0xff]
        %v863 = vld [vmem:[%s698 + $0x520] sm:$0xff]
        %v864 = vld [vmem:[%s698 + $0x528] sm:$0xff]
        %v865 = vld [vmem:[%s698 + $0x530] sm:$0xff]
        %v866 = vld [vmem:[%s698 + $0x538] sm:$0xff]
        %v867 = vld [vmem:[%s698 + $0x540] sm:$0xff]
        %v868 = vld [vmem:[%s698 + $0x548] sm:$0xff]
        %v869 = vld [vmem:[%s698 + $0x550] sm:$0xff]
        %v870 = vld [vmem:[%s698 + $0x558] sm:$0xff]
        %v871 = vld [vmem:[%s698 + $0x560] sm:$0xff]
        %v872 = vld [vmem:[%s698 + $0x568] sm:$0xff]
        %v873 = vld [vmem:[%s698 + $0x570] sm:$0xff]
        %v874 = vld [vmem:[%s698 + $0x578] sm:$0xff]
        %v875 = vld [vmem:[%s698 + $0x580] sm:$0xff]
        %v876 = vld [vmem:[%s698 + $0x588] sm:$0xff]
        %v877 = vld [vmem:[%s698 + $0x590] sm:$0xff]
        %v878 = vld [vmem:[%s698 + $0x598] sm:$0xff]
        %v879 = vld [vmem:[%s698 + $0x5a0] sm:$0xff]
        %v880 = vld [vmem:[%s698 + $0x5a8] sm:$0xff]
        %v881 = vld [vmem:[%s698 + $0x5b0] sm:$0xff]
        %v882 = vld [vmem:[%s698 + $0x5b8] sm:$0xff]
        %v883 = vld [vmem:[%s698 + $0x5c0] sm:$0xff]
        %v884 = vld [vmem:[%s698 + $0x5c8] sm:$0xff]
        %v885 = vld [vmem:[%s698 + $0x5d0] sm:$0xff]
        %v886 = vld [vmem:[%s698 + $0x5d8] sm:$0xff]
        %v887 = vld [vmem:[%s698 + $0x5e0] sm:$0xff]
        %v888 = vld [vmem:[%s698 + $0x5e8] sm:$0xff]
        %v889 = vld [vmem:[%s698 + $0x5f0] sm:$0xff]
        %v890 = vld [vmem:[%s698 + $0x5f8] sm:$0xff]
        %v891 = vld [vmem:[%s698 + $0x600] sm:$0xff]
        %v892 = vld [vmem:[%s698 + $0x608] sm:$0xff]
        %v893 = vld [vmem:[%s698 + $0x610] sm:$0xff]
        %v894 = vld [vmem:[%s698 + $0x618] sm:$0xff]
        %v895 = vld [vmem:[%s698 + $0x620] sm:$0xff]
        %v896 = vld [vmem:[%s698 + $0x628] sm:$0xff]
        %v897 = vld [vmem:[%s698 + $0x630] sm:$0xff]
        %v898 = vld [vmem:[%s698 + $0x638] sm:$0xff]
        %v899 = vld [vmem:[%s698 + $0x640] sm:$0xff]
        %v900 = vld [vmem:[%s698 + $0x648] sm:$0xff]
        %v901 = vld [vmem:[%s698 + $0x650] sm:$0xff]
        %v902 = vld [vmem:[%s698 + $0x658] sm:$0xff]
        %v903 = vld [vmem:[%s698 + $0x660] sm:$0xff]
        %v904 = vld [vmem:[%s698 + $0x668] sm:$0xff]
        %v905 = vld [vmem:[%s698 + $0x670] sm:$0xff]
        %v906 = vld [vmem:[%s698 + $0x678] sm:$0xff]
        %v907 = vld [vmem:[%s698 + $0x680] sm:$0xff]
        %v908 = vld [vmem:[%s698 + $0x688] sm:$0xff]
        %v909 = vld [vmem:[%s698 + $0x690] sm:$0xff]
        %v910 = vld [vmem:[%s698 + $0x698] sm:$0xff]
        %v911 = vld [vmem:[%s698 + $0x6a0] sm:$0xff]
        %v912 = vld [vmem:[%s698 + $0x6a8] sm:$0xff]
        %v913 = vld [vmem:[%s698 + $0x6b0] sm:$0xff]
        %v914 = vld [vmem:[%s698 + $0x6b8] sm:$0xff]
        %v915 = vld [vmem:[%s698 + $0x6c0] sm:$0xff]
        %v916 = vld [vmem:[%s698 + $0x6c8] sm:$0xff]
        %v917 = vld [vmem:[%s698 + $0x6d0] sm:$0xff]
        %v918 = vld [vmem:[%s698 + $0x6d8] sm:$0xff]
        %v919 = vld [vmem:[%s698 + $0x6e0] sm:$0xff]
        %v920 = vld [vmem:[%s698 + $0x6e8] sm:$0xff]
        %v921 = vld [vmem:[%s698 + $0x6f0] sm:$0xff]
        %v922 = vld [vmem:[%s698 + $0x6f8] sm:$0xff]
        %v923 = vld [vmem:[%s698 + $0x700] sm:$0xff]
        %v924 = vld [vmem:[%s698 + $0x708] sm:$0xff]
        %v925 = vld [vmem:[%s698 + $0x710] sm:$0xff]
        %v926 = vld [vmem:[%s698 + $0x718] sm:$0xff]
        %v927 = vld [vmem:[%s698 + $0x720] sm:$0xff]
        %v928 = vld [vmem:[%s698 + $0x728] sm:$0xff]
        %v929 = vld [vmem:[%s698 + $0x730] sm:$0xff]
        %v930 = vld [vmem:[%s698 + $0x738] sm:$0xff]
        %v931 = vld [vmem:[%s698 + $0x740] sm:$0xff]
        %v932 = vld [vmem:[%s698 + $0x748] sm:$0xff]
        %v933 = vld [vmem:[%s698 + $0x750] sm:$0xff]
        %v934 = vld [vmem:[%s698 + $0x758] sm:$0xff]
        %v935 = vld [vmem:[%s698 + $0x760] sm:$0xff]
        %v936 = vld [vmem:[%s698 + $0x768] sm:$0xff]
        %v937 = vld [vmem:[%s698 + $0x770] sm:$0xff]
        %v938 = vld [vmem:[%s698 + $0x778] sm:$0xff]
        %v939 = vld [vmem:[%s698 + $0x780] sm:$0xff]
        %v940 = vld [vmem:[%s698 + $0x788] sm:$0xff]
        %v941 = vld [vmem:[%s698 + $0x790] sm:$0xff]
        %v942 = vld [vmem:[%s698 + $0x798] sm:$0xff]
        %v943 = vld [vmem:[%s698 + $0x7a0] sm:$0xff]
        %v944 = vld [vmem:[%s698 + $0x7a8] sm:$0xff]
        %v945 = vld [vmem:[%s698 + $0x7b0] sm:$0xff]
        %v946 = vld [vmem:[%s698 + $0x7b8] sm:$0xff]
        %v947 = vld [vmem:[%s698 + $0x7c0] sm:$0xff]
        %v948 = vld [vmem:[%s698 + $0x7c8] sm:$0xff]
        %v949 = vld [vmem:[%s698 + $0x7d0] sm:$0xff]
        %v950 = vld [vmem:[%s698 + $0x7d8] sm:$0xff]
        %v951 = vld [vmem:[%s698 + $0x7e0] sm:$0xff]
        %v952 = vld [vmem:[%s698 + $0x7e8] sm:$0xff]
        %v953 = vld [vmem:[%s698 + $0x7f0] sm:$0xff]
        %v954 = vld [vmem:[%s698 + $0x7f8] sm:$0xff]
        %955 = vmatprep.subr.mxu0 %v700
        %956 = vmatpush1.msra.mxu0 %v699
        %957 = vmatprep.subr.mxu0 %v708
        %958 = vmatpush1.msra.mxu0 %v707
        %959 = vmatprep.subr.mxu0 %v716
        %960 = vmatpush1.msra.mxu0 %v715
        %961 = vmatprep.subr.mxu0 %v724
        %962 = vmatpush1.msra.mxu0 %v723
        %963 = vmatprep.subr.mxu0 %v732
        %964 = vmatpush1.msra.mxu0 %v731
        %965 = vmatprep.subr.mxu0 %v740
        %966 = vmatpush1.msra.mxu0 %v739
        %967 = vmatprep.subr.mxu0 %v748
        %968 = vmatpush1.msra.mxu0 %v747
        %969 = vmatprep.subr.mxu0 %v756
        %970 = vmatpush1.msra.mxu0 %v755
        %971 = vmatprep.subr.mxu0 %v764
        %972 = vmatpush1.msra.mxu0 %v763
        %973 = vmatprep.subr.mxu0 %v772
        %974 = vmatpush1.msra.mxu0 %v771
        %975 = vmatprep.subr.mxu0 %v780
        %976 = vmatpush1.msra.mxu0 %v779
        %977 = vmatprep.subr.mxu0 %v788
        %978 = vmatpush1.msra.mxu0 %v787
        %979 = vmatprep.subr.mxu0 %v796
        %980 = vmatpush1.msra.mxu0 %v795
        %981 = vmatprep.subr.mxu0 %v804
        %982 = vmatpush1.msra.mxu0 %v803
        %983 = vmatprep.subr.mxu0 %v812
        %984 = vmatpush1.msra.mxu0 %v811
        %985 = vmatprep.subr.mxu0 %v820
        %986 = vmatpush1.msra.mxu0 %v819
        %987 = vmatprep.subr.mxu0 %v828
        %988 = vmatpush1.msra.mxu0 %v827
        %989 = vmatprep.subr.mxu0 %v836
        %990 = vmatpush1.msra.mxu0 %v835
        %991 = vmatprep.subr.mxu0 %v844
        %992 = vmatpush1.msra.mxu0 %v843
        %993 = vmatprep.subr.mxu0 %v852
        %994 = vmatpush1.msra.mxu0 %v851
        %995 = vmatprep.subr.mxu0 %v860
        %996 = vmatpush1.msra.mxu0 %v859
        %997 = vmatprep.subr.mxu0 %v868
        %998 = vmatpush1.msra.mxu0 %v867
        %999 = vmatprep.subr.mxu0 %v876
        %1000 = vmatpush1.msra.mxu0 %v875
        %1001 = vmatprep.subr.mxu0 %v884
        %1002 = vmatpush1.msra.mxu0 %v883
        %1003 = vmatprep.subr.mxu0 %v892
        %1004 = vmatpush1.msra.mxu0 %v891
        %1005 = vmatprep.subr.mxu0 %v900
        %1006 = vmatpush1.msra.mxu0 %v899
        %1007 = vmatprep.subr.mxu0 %v908
        %1008 = vmatpush1.msra.mxu0 %v907
        %1009 = vmatprep.subr.mxu0 %v916
        %1010 = vmatpush1.msra.mxu0 %v915
        %1011 = vmatprep.subr.mxu0 %v924
        %1012 = vmatpush1.msra.mxu0 %v923
        %1013 = vmatprep.subr.mxu0 %v932
        %1014 = vmatpush1.msra.mxu0 %v931
        %1015 = vmatprep.subr.mxu0 %v940
        %1016 = vmatpush1.msra.mxu0 %v939
        %1017 = vmatprep.subr.mxu0 %v948
        %1018 = vmatpush1.msra.mxu0 %v947
        %1019 = vmatprep.mubr.f32.mxu0 %v696
        %1020 = vmatmul.mubr.f32.gmra.mrb[0].mxu0 %v694
        %v1021 = vpop.f32.mrb[0].mxu0
        %v1022 = vadd.f32 0.0, %v1021
        %v1023 = vpop.f32.mrb[0].mxu0
        %v1024 = vadd.f32 0.0, %v1023
        %1025 = vdwg.mxu0
        %1026 = vmatprep.subr.mxu0 %v702
        %1027 = vmatpush1.msra.mxu0 %v701
        %1028 = vmatprep.subr.mxu0 %v710
        %1029 = vmatpush1.msra.mxu0 %v709
        %1030 = vmatprep.subr.mxu0 %v718
        %1031 = vmatpush1.msra.mxu0 %v717
        %1032 = vmatprep.subr.mxu0 %v726
        %1033 = vmatpush1.msra.mxu0 %v725
        %1034 = vmatprep.subr.mxu0 %v734
        %1035 = vmatpush1.msra.mxu0 %v733
        %1036 = vmatprep.subr.mxu0 %v742
        %1037 = vmatpush1.msra.mxu0 %v741
        %1038 = vmatprep.subr.mxu0 %v750
        %1039 = vmatpush1.msra.mxu0 %v749
        %1040 = vmatprep.subr.mxu0 %v758
        %1041 = vmatpush1.msra.mxu0 %v757
        %1042 = vmatprep.subr.mxu0 %v766
        %1043 = vmatpush1.msra.mxu0 %v765
        %1044 = vmatprep.subr.mxu0 %v774
        %1045 = vmatpush1.msra.mxu0 %v773
        %1046 = vmatprep.subr.mxu0 %v782
        %1047 = vmatpush1.msra.mxu0 %v781
        %1048 = vmatprep.subr.mxu0 %v790
        %1049 = vmatpush1.msra.mxu0 %v789
        %1050 = vmatprep.subr.mxu0 %v798
        %1051 = vmatpush1.msra.mxu0 %v797
        %1052 = vmatprep.subr.mxu0 %v806
        %1053 = vmatpush1.msra.mxu0 %v805
        %1054 = vmatprep.subr.mxu0 %v814
        %1055 = vmatpush1.msra.mxu0 %v813
        %1056 = vmatprep.subr.mxu0 %v822
        %1057 = vmatpush1.msra.mxu0 %v821
        %1058 = vmatprep.subr.mxu0 %v830
        %1059 = vmatpush1.msra.mxu0 %v829
        %1060 = vmatprep.subr.mxu0 %v838
        %1061 = vmatpush1.msra.mxu0 %v837
        %1062 = vmatprep.subr.mxu0 %v846
        %1063 = vmatpush1.msra.mxu0 %v845
        %1064 = vmatprep.subr.mxu0 %v854
        %1065 = vmatpush1.msra.mxu0 %v853
        %1066 = vmatprep.subr.mxu0 %v862
        %1067 = vmatpush1.msra.mxu0 %v861
        %1068 = vmatprep.subr.mxu0 %v870
        %1069 = vmatpush1.msra.mxu0 %v869
        %1070 = vmatprep.subr.mxu0 %v878
        %1071 = vmatpush1.msra.mxu0 %v877
        %1072 = vmatprep.subr.mxu0 %v886
        %1073 = vmatpush1.msra.mxu0 %v885
        %1074 = vmatprep.subr.mxu0 %v894
        %1075 = vmatpush1.msra.mxu0 %v893
        %1076 = vmatprep.subr.mxu0 %v902
        %1077 = vmatpush1.msra.mxu0 %v901
        %1078 = vmatprep.subr.mxu0 %v910
        %1079 = vmatpush1.msra.mxu0 %v909
        %1080 = vmatprep.subr.mxu0 %v918
        %1081 = vmatpush1.msra.mxu0 %v917
        %1082 = vmatprep.subr.mxu0 %v926
        %1083 = vmatpush1.msra.mxu0 %v925
        %1084 = vmatprep.subr.mxu0 %v934
        %1085 = vmatpush1.msra.mxu0 %v933
        %1086 = vmatprep.subr.mxu0 %v942
        %1087 = vmatpush1.msra.mxu0 %v941
        %1088 = vmatprep.subr.mxu0 %v950
        %1089 = vmatpush1.msra.mxu0 %v949
        %1090 = vmatprep.mubr.f32.mxu0 %v696
        %1091 = vmatmul.mubr.f32.gmra.mrb[0].mxu0 %v694
        %v1092 = vpop.f32.mrb[0].mxu0
        %v1093 = vadd.f32 0.0, %v1092
        %v1094 = vpop.f32.mrb[0].mxu0
        %v1095 = vadd.f32 0.0, %v1094
        %1096 = vdwg.mxu0
        %1097 = vmatprep.subr.mxu0 %v704
        %1098 = vmatpush1.msra.mxu0 %v703
        %1099 = vmatprep.subr.mxu0 %v712
        %1100 = vmatpush1.msra.mxu0 %v711
        %1101 = vmatprep.subr.mxu0 %v720
        %1102 = vmatpush1.msra.mxu0 %v719
        %1103 = vmatprep.subr.mxu0 %v728
        %1104 = vmatpush1.msra.mxu0 %v727
        %1105 = vmatprep.subr.mxu0 %v736
        %1106 = vmatpush1.msra.mxu0 %v735
        %1107 = vmatprep.subr.mxu0 %v744
        %1108 = vmatpush1.msra.mxu0 %v743
        %1109 = vmatprep.subr.mxu0 %v752
        %1110 = vmatpush1.msra.mxu0 %v751
        %1111 = vmatprep.subr.mxu0 %v760
        %1112 = vmatpush1.msra.mxu0 %v759
        %1113 = vmatprep.subr.mxu0 %v768
        %1114 = vmatpush1.msra.mxu0 %v767
        %1115 = vmatprep.subr.mxu0 %v776
        %1116 = vmatpush1.msra.mxu0 %v775
        %1117 = vmatprep.subr.mxu0 %v784
        %1118 = vmatpush1.msra.mxu0 %v783
        %1119 = vmatprep.subr.mxu0 %v792
        %1120 = vmatpush1.msra.mxu0 %v791
        %1121 = vmatprep.subr.mxu0 %v800
        %1122 = vmatpush1.msra.mxu0 %v799
        %1123 = vmatprep.subr.mxu0 %v808
        %1124 = vmatpush1.msra.mxu0 %v807
        %1125 = vmatprep.subr.mxu0 %v816
        %1126 = vmatpush1.msra.mxu0 %v815
        %1127 = vmatprep.subr.mxu0 %v824
        %1128 = vmatpush1.msra.mxu0 %v823
        %1129 = vmatprep.subr.mxu0 %v832
        %1130 = vmatpush1.msra.mxu0 %v831
        %1131 = vmatprep.subr.mxu0 %v840
        %1132 = vmatpush1.msra.mxu0 %v839
        %1133 = vmatprep.subr.mxu0 %v848
        %1134 = vmatpush1.msra.mxu0 %v847
        %1135 = vmatprep.subr.mxu0 %v856
        %1136 = vmatpush1.msra.mxu0 %v855
        %1137 = vmatprep.subr.mxu0 %v864
        %1138 = vmatpush1.msra.mxu0 %v863
        %1139 = vmatprep.subr.mxu0 %v872
        %1140 = vmatpush1.msra.mxu0 %v871
        %1141 = vmatprep.subr.mxu0 %v880
        %1142 = vmatpush1.msra.mxu0 %v879
        %1143 = vmatprep.subr.mxu0 %v888
        %1144 = vmatpush1.msra.mxu0 %v887
        %1145 = vmatprep.subr.mxu0 %v896
        %1146 = vmatpush1.msra.mxu0 %v895
        %1147 = vmatprep.subr.mxu0 %v904
        %1148 = vmatpush1.msra.mxu0 %v903
        %1149 = vmatprep.subr.mxu0 %v912
        %1150 = vmatpush1.msra.mxu0 %v911
        %1151 = vmatprep.subr.mxu0 %v920
        %1152 = vmatpush1.msra.mxu0 %v919
        %1153 = vmatprep.subr.mxu0 %v928
        %1154 = vmatpush1.msra.mxu0 %v927
        %1155 = vmatprep.subr.mxu0 %v936
        %1156 = vmatpush1.msra.mxu0 %v935
        %1157 = vmatprep.subr.mxu0 %v944
        %1158 = vmatpush1.msra.mxu0 %v943
        %1159 = vmatprep.subr.mxu0 %v952
        %1160 = vmatpush1.msra.mxu0 %v951
        %1161 = vmatprep.mubr.f32.mxu0 %v696
        %1162 = vmatmul.mubr.f32.gmra.mrb[0].mxu0 %v694
        %v1163 = vpop.f32.mrb[0].mxu0
        %v1164 = vadd.f32 0.0, %v1163
        %v1165 = vpop.f32.mrb[0].mxu0
        %v1166 = vadd.f32 0.0, %v1165
        %1167 = vdwg.mxu0
        %1168 = vmatprep.subr.mxu0 %v706
        %1169 = vmatpush1.msra.mxu0 %v705
        %1170 = vmatprep.subr.mxu0 %v714
        %1171 = vmatpush1.msra.mxu0 %v713
        %1172 = vmatprep.subr.mxu0 %v722
        %1173 = vmatpush1.msra.mxu0 %v721
        %1174 = vmatprep.subr.mxu0 %v730
        %1175 = vmatpush1.msra.mxu0 %v729
        %1176 = vmatprep.subr.mxu0 %v738
        %1177 = vmatpush1.msra.mxu0 %v737
        %1178 = vmatprep.subr.mxu0 %v746
        %1179 = vmatpush1.msra.mxu0 %v745
        %1180 = vmatprep.subr.mxu0 %v754
        %1181 = vmatpush1.msra.mxu0 %v753
        %1182 = vmatprep.subr.mxu0 %v762
        %1183 = vmatpush1.msra.mxu0 %v761
        %1184 = vmatprep.subr.mxu0 %v770
        %1185 = vmatpush1.msra.mxu0 %v769
        %1186 = vmatprep.subr.mxu0 %v778
        %1187 = vmatpush1.msra.mxu0 %v777
        %1188 = vmatprep.subr.mxu0 %v786
        %1189 = vmatpush1.msra.mxu0 %v785
        %1190 = vmatprep.subr.mxu0 %v794
        %1191 = vmatpush1.msra.mxu0 %v793
        %1192 = vmatprep.subr.mxu0 %v802
        %1193 = vmatpush1.msra.mxu0 %v801
        %1194 = vmatprep.subr.mxu0 %v810
        %1195 = vmatpush1.msra.mxu0 %v809
        %1196 = vmatprep.subr.mxu0 %v818
        %1197 = vmatpush1.msra.mxu0 %v817
        %1198 = vmatprep.subr.mxu0 %v826
        %1199 = vmatpush1.msra.mxu0 %v825
        %1200 = vmatprep.subr.mxu0 %v834
        %1201 = vmatpush1.msra.mxu0 %v833
        %1202 = vmatprep.subr.mxu0 %v842
        %1203 = vmatpush1.msra.mxu0 %v841
        %1204 = vmatprep.subr.mxu0 %v850
        %1205 = vmatpush1.msra.mxu0 %v849
        %1206 = vmatprep.subr.mxu0 %v858
        %1207 = vmatpush1.msra.mxu0 %v857
        %1208 = vmatprep.subr.mxu0 %v866
        %1209 = vmatpush1.msra.mxu0 %v865
        %1210 = vmatprep.subr.mxu0 %v874
        %1211 = vmatpush1.msra.mxu0 %v873
        %1212 = vmatprep.subr.mxu0 %v882
        %1213 = vmatpush1.msra.mxu0 %v881
        %1214 = vmatprep.subr.mxu0 %v890
        %1215 = vmatpush1.msra.mxu0 %v889
        %1216 = vmatprep.subr.mxu0 %v898
        %1217 = vmatpush1.msra.mxu0 %v897
        %1218 = vmatprep.subr.mxu0 %v906
        %1219 = vmatpush1.msra.mxu0 %v905
        %1220 = vmatprep.subr.mxu0 %v914
        %1221 = vmatpush1.msra.mxu0 %v913
        %1222 = vmatprep.subr.mxu0 %v922
        %1223 = vmatpush1.msra.mxu0 %v921
        %1224 = vmatprep.subr.mxu0 %v930
        %1225 = vmatpush1.msra.mxu0 %v929
        %1226 = vmatprep.subr.mxu0 %v938
        %1227 = vmatpush1.msra.mxu0 %v937
        %1228 = vmatprep.subr.mxu0 %v946
        %1229 = vmatpush1.msra.mxu0 %v945
        %1230 = vmatprep.subr.mxu0 %v954
        %1231 = vmatpush1.msra.mxu0 %v953
        %1232 = vmatprep.mubr.f32.mxu0 %v696
        %1233 = vmatmul.mubr.f32.gmra.mrb[0].mxu0 %v694
        %v1234 = vpop.f32.mrb[0].mxu0
        %v1235 = vadd.f32 0.0, %v1234
        %v1236 = vpop.f32.mrb[0].mxu0
        %v1237 = vadd.f32 0.0, %v1236
        %1238 = vdwg.mxu0
        %1239 = vmatprep.subr.mxu0 %v367
        %1240 = vmatpush1.msra.mxu0 %v366
        %1241 = vmatprep.subr.mxu0 %v375
        %1242 = vmatpush1.msra.mxu0 %v374
        %1243 = vmatprep.subr.mxu0 %v383
        %1244 = vmatpush1.msra.mxu0 %v382
        %1245 = vmatprep.subr.mxu0 %v391
        %1246 = vmatpush1.msra.mxu0 %v390
        %1247 = vmatprep.subr.mxu0 %v399
        %1248 = vmatpush1.msra.mxu0 %v398
        %1249 = vmatprep.subr.mxu0 %v407
        %1250 = vmatpush1.msra.mxu0 %v406
        %1251 = vmatprep.subr.mxu0 %v415
        %1252 = vmatpush1.msra.mxu0 %v414
        %1253 = vmatprep.subr.mxu0 %v423
        %1254 = vmatpush1.msra.mxu0 %v422
        %1255 = vmatprep.subr.mxu0 %v431
        %1256 = vmatpush1.msra.mxu0 %v430
        %1257 = vmatprep.subr.mxu0 %v439
        %1258 = vmatpush1.msra.mxu0 %v438
        %1259 = vmatprep.subr.mxu0 %v447
        %1260 = vmatpush1.msra.mxu0 %v446
        %1261 = vmatprep.subr.mxu0 %v455
        %1262 = vmatpush1.msra.mxu0 %v454
        %1263 = vmatprep.subr.mxu0 %v463
        %1264 = vmatpush1.msra.mxu0 %v462
        %1265 = vmatprep.subr.mxu0 %v471
        %1266 = vmatpush1.msra.mxu0 %v470
        %1267 = vmatprep.subr.mxu0 %v479
        %1268 = vmatpush1.msra.mxu0 %v478
        %1269 = vmatprep.subr.mxu0 %v487
        %1270 = vmatpush1.msra.mxu0 %v486
        %1271 = vmatprep.subr.mxu0 %v495
        %1272 = vmatpush1.msra.mxu0 %v494
        %1273 = vmatprep.subr.mxu0 %v503
        %1274 = vmatpush1.msra.mxu0 %v502
        %1275 = vmatprep.subr.mxu0 %v511
        %1276 = vmatpush1.msra.mxu0 %v510
        %1277 = vmatprep.subr.mxu0 %v519
        %1278 = vmatpush1.msra.mxu0 %v518
        %1279 = vmatprep.subr.mxu0 %v527
        %1280 = vmatpush1.msra.mxu0 %v526
        %1281 = vmatprep.subr.mxu0 %v535
        %1282 = vmatpush1.msra.mxu0 %v534
        %1283 = vmatprep.subr.mxu0 %v543
        %1284 = vmatpush1.msra.mxu0 %v542
        %1285 = vmatprep.subr.mxu0 %v551
        %1286 = vmatpush1.msra.mxu0 %v550
        %1287 = vmatprep.subr.mxu0 %v559
        %1288 = vmatpush1.msra.mxu0 %v558
        %1289 = vmatprep.subr.mxu0 %v567
        %1290 = vmatpush1.msra.mxu0 %v566
        %1291 = vmatprep.subr.mxu0 %v575
        %1292 = vmatpush1.msra.mxu0 %v574
        %1293 = vmatprep.subr.mxu0 %v583
        %1294 = vmatpush1.msra.mxu0 %v582
        %1295 = vmatprep.subr.mxu0 %v591
        %1296 = vmatpush1.msra.mxu0 %v590
        %1297 = vmatprep.subr.mxu0 %v599
        %1298 = vmatpush1.msra.mxu0 %v598
        %1299 = vmatprep.subr.mxu0 %v607
        %1300 = vmatpush1.msra.mxu0 %v606
        %1301 = vmatprep.subr.mxu0 %v615
        %1302 = vmatpush1.msra.mxu0 %v614
        %1303 = vmatprep.mubr.f32.mxu0 %v364
        %1304 = vmatmul.mubr.f32.gmra.mrb[0].mxu0 %v362
        %v1305 = vpop.f32.mrb[0].mxu0
        %v1306 = vadd.f32 %v1022, %v1305
        %v1307 = vpop.f32.mrb[0].mxu0
        %v1308 = vadd.f32 %v1024, %v1307
        %1309 = vdwg.mxu0
        %1310 = vmatprep.subr.mxu0 %v369
        %1311 = vmatpush1.msra.mxu0 %v368
        %1312 = vmatprep.subr.mxu0 %v377
        %1313 = vmatpush1.msra.mxu0 %v376
        %1314 = vmatprep.subr.mxu0 %v385
        %1315 = vmatpush1.msra.mxu0 %v384
        %1316 = vmatprep.subr.mxu0 %v393
        %1317 = vmatpush1.msra.mxu0 %v392
        %1318 = vmatprep.subr.mxu0 %v401
        %1319 = vmatpush1.msra.mxu0 %v400
        %1320 = vmatprep.subr.mxu0 %v409
        %1321 = vmatpush1.msra.mxu0 %v408
        %1322 = vmatprep.subr.mxu0 %v417
        %1323 = vmatpush1.msra.mxu0 %v416
        %1324 = vmatprep.subr.mxu0 %v425
        %1325 = vmatpush1.msra.mxu0 %v424
        %1326 = vmatprep.subr.mxu0 %v433
        %1327 = vmatpush1.msra.mxu0 %v432
        %1328 = vmatprep.subr.mxu0 %v441
        %1329 = vmatpush1.msra.mxu0 %v440
        %1330 = vmatprep.subr.mxu0 %v449
        %1331 = vmatpush1.msra.mxu0 %v448
        %1332 = vmatprep.subr.mxu0 %v457
        %1333 = vmatpush1.msra.mxu0 %v456
        %1334 = vmatprep.subr.mxu0 %v465
        %1335 = vmatpush1.msra.mxu0 %v464
        %1336 = vmatprep.subr.mxu0 %v473
        %1337 = vmatpush1.msra.mxu0 %v472
        %1338 = vmatprep.subr.mxu0 %v481
        %1339 = vmatpush1.msra.mxu0 %v480
        %1340 = vmatprep.subr.mxu0 %v489
        %1341 = vmatpush1.msra.mxu0 %v488
        %1342 = vmatprep.subr.mxu0 %v497
        %1343 = vmatpush1.msra.mxu0 %v496
        %1344 = vmatprep.subr.mxu0 %v505
        %1345 = vmatpush1.msra.mxu0 %v504
        %1346 = vmatprep.subr.mxu0 %v513
        %1347 = vmatpush1.msra.mxu0 %v512
        %1348 = vmatprep.subr.mxu0 %v521
        %1349 = vmatpush1.msra.mxu0 %v520
        %1350 = vmatprep.subr.mxu0 %v529
        %1351 = vmatpush1.msra.mxu0 %v528
        %1352 = vmatprep.subr.mxu0 %v537
        %1353 = vmatpush1.msra.mxu0 %v536
        %1354 = vmatprep.subr.mxu0 %v545
        %1355 = vmatpush1.msra.mxu0 %v544
        %1356 = vmatprep.subr.mxu0 %v553
        %1357 = vmatpush1.msra.mxu0 %v552
        %1358 = vmatprep.subr.mxu0 %v561
        %1359 = vmatpush1.msra.mxu0 %v560
        %1360 = vmatprep.subr.mxu0 %v569
        %1361 = vmatpush1.msra.mxu0 %v568
        %1362 = vmatprep.subr.mxu0 %v577
        %1363 = vmatpush1.msra.mxu0 %v576
        %1364 = vmatprep.subr.mxu0 %v585
        %1365 = vmatpush1.msra.mxu0 %v584
        %1366 = vmatprep.subr.mxu0 %v593
        %1367 = vmatpush1.msra.mxu0 %v592
        %1368 = vmatprep.subr.mxu0 %v601
        %1369 = vmatpush1.msra.mxu0 %v600
        %1370 = vmatprep.subr.mxu0 %v609
        %1371 = vmatpush1.msra.mxu0 %v608
        %1372 = vmatprep.subr.mxu0 %v617
        %1373 = vmatpush1.msra.mxu0 %v616
        %1374 = vmatprep.mubr.f32.mxu0 %v364
        %1375 = vmatmul.mubr.f32.gmra.mrb[0].mxu0 %v362
        %v1376 = vpop.f32.mrb[0].mxu0
        %v1377 = vadd.f32 %v1093, %v1376
        %v1378 = vpop.f32.mrb[0].mxu0
        %v1379 = vadd.f32 %v1095, %v1378
        %1380 = vdwg.mxu0
        %1381 = vmatprep.subr.mxu0 %v371
        %1382 = vmatpush1.msra.mxu0 %v370
        %1383 = vmatprep.subr.mxu0 %v379
        %1384 = vmatpush1.msra.mxu0 %v378
        %1385 = vmatprep.subr.mxu0 %v387
        %1386 = vmatpush1.msra.mxu0 %v386
        %1387 = vmatprep.subr.mxu0 %v395
        %1388 = vmatpush1.msra.mxu0 %v394
        %1389 = vmatprep.subr.mxu0 %v403
        %1390 = vmatpush1.msra.mxu0 %v402
        %1391 = vmatprep.subr.mxu0 %v411
        %1392 = vmatpush1.msra.mxu0 %v410
        %1393 = vmatprep.subr.mxu0 %v419
        %1394 = vmatpush1.msra.mxu0 %v418
        %1395 = vmatprep.subr.mxu0 %v427
        %1396 = vmatpush1.msra.mxu0 %v426
        %1397 = vmatprep.subr.mxu0 %v435
        %1398 = vmatpush1.msra.mxu0 %v434
        %1399 = vmatprep.subr.mxu0 %v443
        %1400 = vmatpush1.msra.mxu0 %v442
        %1401 = vmatprep.subr.mxu0 %v451
        %1402 = vmatpush1.msra.mxu0 %v450
        %1403 = vmatprep.subr.mxu0 %v459
        %1404 = vmatpush1.msra.mxu0 %v458
        %1405 = vmatprep.subr.mxu0 %v467
        %1406 = vmatpush1.msra.mxu0 %v466
        %1407 = vmatprep.subr.mxu0 %v475
        %1408 = vmatpush1.msra.mxu0 %v474
        %1409 = vmatprep.subr.mxu0 %v483
        %1410 = vmatpush1.msra.mxu0 %v482
        %1411 = vmatprep.subr.mxu0 %v491
        %1412 = vmatpush1.msra.mxu0 %v490
        %1413 = vmatprep.subr.mxu0 %v499
        %1414 = vmatpush1.msra.mxu0 %v498
        %1415 = vmatprep.subr.mxu0 %v507
        %1416 = vmatpush1.msra.mxu0 %v506
        %1417 = vmatprep.subr.mxu0 %v515
        %1418 = vmatpush1.msra.mxu0 %v514
        %1419 = vmatprep.subr.mxu0 %v523
        %1420 = vmatpush1.msra.mxu0 %v522
        %1421 = vmatprep.subr.mxu0 %v531
        %1422 = vmatpush1.msra.mxu0 %v530
        %1423 = vmatprep.subr.mxu0 %v539
        %1424 = vmatpush1.msra.mxu0 %v538
        %1425 = vmatprep.subr.mxu0 %v547
        %1426 = vmatpush1.msra.mxu0 %v546
        %1427 = vmatprep.subr.mxu0 %v555
        %1428 = vmatpush1.msra.mxu0 %v554
        %1429 = vmatprep.subr.mxu0 %v563
        %1430 = vmatpush1.msra.mxu0 %v562
        %1431 = vmatprep.subr.mxu0 %v571
        %1432 = vmatpush1.msra.mxu0 %v570
        %1433 = vmatprep.subr.mxu0 %v579
        %1434 = vmatpush1.msra.mxu0 %v578
        %1435 = vmatprep.subr.mxu0 %v587
        %1436 = vmatpush1.msra.mxu0 %v586
        %1437 = vmatprep.subr.mxu0 %v595
        %1438 = vmatpush1.msra.mxu0 %v594
        %1439 = vmatprep.subr.mxu0 %v603
        %1440 = vmatpush1.msra.mxu0 %v602
        %1441 = vmatprep.subr.mxu0 %v611
        %1442 = vmatpush1.msra.mxu0 %v610
        %1443 = vmatprep.subr.mxu0 %v619
        %1444 = vmatpush1.msra.mxu0 %v618
        %1445 = vmatprep.mubr.f32.mxu0 %v364
        %1446 = vmatmul.mubr.f32.gmra.mrb[0].mxu0 %v362
        %v1447 = vpop.f32.mrb[0].mxu0
        %v1448 = vadd.f32 %v1164, %v1447
        %v1449 = vpop.f32.mrb[0].mxu0
        %v1450 = vadd.f32 %v1166, %v1449
        %1451 = vdwg.mxu0
        %1452 = vmatprep.subr.mxu0 %v373
        %1453 = vmatpush1.msra.mxu0 %v372
        %1454 = vmatprep.subr.mxu0 %v381
        %1455 = vmatpush1.msra.mxu0 %v380
        %1456 = vmatprep.subr.mxu0 %v389
        %1457 = vmatpush1.msra.mxu0 %v388
        %1458 = vmatprep.subr.mxu0 %v397
        %1459 = vmatpush1.msra.mxu0 %v396
        %1460 = vmatprep.subr.mxu0 %v405
        %1461 = vmatpush1.msra.mxu0 %v404
        %1462 = vmatprep.subr.mxu0 %v413
        %1463 = vmatpush1.msra.mxu0 %v412
        %1464 = vmatprep.subr.mxu0 %v421
        %1465 = vmatpush1.msra.mxu0 %v420
        %1466 = vmatprep.subr.mxu0 %v429
        %1467 = vmatpush1.msra.mxu0 %v428
        %1468 = vmatprep.subr.mxu0 %v437
        %1469 = vmatpush1.msra.mxu0 %v436
        %1470 = vmatprep.subr.mxu0 %v445
        %1471 = vmatpush1.msra.mxu0 %v444
        %1472 = vmatprep.subr.mxu0 %v453
        %1473 = vmatpush1.msra.mxu0 %v452
        %1474 = vmatprep.subr.mxu0 %v461
        %1475 = vmatpush1.msra.mxu0 %v460
        %1476 = vmatprep.subr.mxu0 %v469
        %1477 = vmatpush1.msra.mxu0 %v468
        %1478 = vmatprep.subr.mxu0 %v477
        %1479 = vmatpush1.msra.mxu0 %v476
        %1480 = vmatprep.subr.mxu0 %v485
        %1481 = vmatpush1.msra.mxu0 %v484
        %1482 = vmatprep.subr.mxu0 %v493
        %1483 = vmatpush1.msra.mxu0 %v492
        %1484 = vmatprep.subr.mxu0 %v501
        %1485 = vmatpush1.msra.mxu0 %v500
        %1486 = vmatprep.subr.mxu0 %v509
        %1487 = vmatpush1.msra.mxu0 %v508
        %1488 = vmatprep.subr.mxu0 %v517
        %1489 = vmatpush1.msra.mxu0 %v516
        %1490 = vmatprep.subr.mxu0 %v525
        %1491 = vmatpush1.msra.mxu0 %v524
        %1492 = vmatprep.subr.mxu0 %v533
        %1493 = vmatpush1.msra.mxu0 %v532
        %1494 = vmatprep.subr.mxu0 %v541
        %1495 = vmatpush1.msra.mxu0 %v540
        %1496 = vmatprep.subr.mxu0 %v549
        %1497 = vmatpush1.msra.mxu0 %v548
        %1498 = vmatprep.subr.mxu0 %v557
        %1499 = vmatpush1.msra.mxu0 %v556
        %1500 = vmatprep.subr.mxu0 %v565
        %1501 = vmatpush1.msra.mxu0 %v564
        %1502 = vmatprep.subr.mxu0 %v573
        %1503 = vmatpush1.msra.mxu0 %v572
        %1504 = vmatprep.subr.mxu0 %v581
        %1505 = vmatpush1.msra.mxu0 %v580
        %1506 = vmatprep.subr.mxu0 %v589
        %1507 = vmatpush1.msra.mxu0 %v588
        %1508 = vmatprep.subr.mxu0 %v597
        %1509 = vmatpush1.msra.mxu0 %v596
        %1510 = vmatprep.subr.mxu0 %v605
        %1511 = vmatpush1.msra.mxu0 %v604
        %1512 = vmatprep.subr.mxu0 %v613
        %1513 = vmatpush1.msra.mxu0 %v612
        %1514 = vmatprep.subr.mxu0 %v621
        %1515 = vmatpush1.msra.mxu0 %v620
        %1516 = vmatprep.mubr.f32.mxu0 %v364
        %1517 = vmatmul.mubr.f32.gmra.mrb[0].mxu0 %v362
        %v1518 = vpop.f32.mrb[0].mxu0
        %v1519 = vadd.f32 %v1235, %v1518
        %v1520 = vpop.f32.mrb[0].mxu0
        %v1521 = vadd.f32 %v1237, %v1520
        %1522 = vdwg.mxu0
        %s1523 = scalar_lea.vmem %s0, 8
        %v1524 = vld [vmem:[%s1523] sm:$0xf]
        %v1526 = vsel %vm291, %v1524, 0
        %1528 = vmatprep.subr.mxu0 %v289
        %1529 = vmatpush1.msra.mxu0 %v288
        %1530 = vmatprep.subr.mxu0 0.0
        %1531 = vmatpush1.msra.mxu0 0.0
        %1532 = vmatprep.subr.mxu0 0.0
        %1533 = vmatpush1.msra.mxu0 0.0
        %1534 = vmatprep.subr.mxu0 0.0
        %1535 = vmatpush1.msra.mxu0 0.0
        %1536 = vmatprep.subr.mxu0 0.0
        %1537 = vmatpush1.msra.mxu0 0.0
        %1538 = vmatprep.subr.mxu0 0.0
        %1539 = vmatpush1.msra.mxu0 0.0
        %1540 = vmatprep.subr.mxu0 0.0
        %1541 = vmatpush1.msra.mxu0 0.0
        %1542 = vmatprep.subr.mxu0 0.0
        %1543 = vmatpush1.msra.mxu0 0.0
        %1544 = vmatprep.subr.mxu0 0.0
        %1545 = vmatpush1.msra.mxu0 0.0
        %1546 = vmatprep.subr.mxu0 0.0
        %1547 = vmatpush1.msra.mxu0 0.0
        %1548 = vmatprep.subr.mxu0 0.0
        %1549 = vmatpush1.msra.mxu0 0.0
        %1550 = vmatprep.subr.mxu0 0.0
        %1551 = vmatpush1.msra.mxu0 0.0
        %1552 = vmatprep.subr.mxu0 0.0
        %1553 = vmatpush1.msra.mxu0 0.0
        %1554 = vmatprep.subr.mxu0 0.0
        %1555 = vmatpush1.msra.mxu0 0.0
        %1556 = vmatprep.subr.mxu0 0.0
        %1557 = vmatpush1.msra.mxu0 0.0
        %1558 = vmatprep.subr.mxu0 0.0
        %1559 = vmatpush1.msra.mxu0 0.0
        %1560 = vmatprep.subr.mxu0 0.0
        %1561 = vmatpush1.msra.mxu0 0.0
        %1562 = vmatprep.subr.mxu0 0.0
        %1563 = vmatpush1.msra.mxu0 0.0
        %1564 = vmatprep.subr.mxu0 0.0
        %1565 = vmatpush1.msra.mxu0 0.0
        %1566 = vmatprep.subr.mxu0 0.0
        %1567 = vmatpush1.msra.mxu0 0.0
        %1568 = vmatprep.subr.mxu0 0.0
        %1569 = vmatpush1.msra.mxu0 0.0
        %1570 = vmatprep.subr.mxu0 0.0
        %1571 = vmatpush1.msra.mxu0 0.0
        %1572 = vmatprep.subr.mxu0 0.0
        %1573 = vmatpush1.msra.mxu0 0.0
        %1574 = vmatprep.subr.mxu0 0.0
        %1575 = vmatpush1.msra.mxu0 0.0
        %1576 = vmatprep.subr.mxu0 0.0
        %1577 = vmatpush1.msra.mxu0 0.0
        %1578 = vmatprep.subr.mxu0 0.0
        %1579 = vmatpush1.msra.mxu0 0.0
        %1580 = vmatprep.subr.mxu0 0.0
        %1581 = vmatpush1.msra.mxu0 0.0
        %1582 = vmatprep.subr.mxu0 0.0
        %1583 = vmatpush1.msra.mxu0 0.0
        %1584 = vmatprep.subr.mxu0 0.0
        %1585 = vmatpush1.msra.mxu0 0.0
        %1586 = vmatprep.subr.mxu0 0.0
        %1587 = vmatpush1.msra.mxu0 0.0
        %1588 = vmatprep.subr.mxu0 0.0
        %1589 = vmatpush1.msra.mxu0 0.0
        %1590 = vmatprep.subr.mxu0 0.0
        %1591 = vmatpush1.msra.mxu0 0.0
        %1592 = vmatprep.mubr.f32.mxu0 0.0
        %1593 = vmatmul.mubr.f32.gmra.mrb[0].mxu0 %v1526
        %v1594 = vpop.f32.mrb[0].mxu0
        %v1595 = vadd.f32 0.0, %v1594
        %v1596 = vpop.f32.mrb[0].mxu0
        %v1597 = vadd.f32 0.0, %v1596
        %1598 = vdwg.mxu0
        %s1599 = scalar_lea.vmem [#allocation2], 4096
        %v1600 = vld [vmem:[%s1599] sm:$0xff]
        %v1601 = vld [vmem:[%s1599 + $0x8] sm:$0xff]
        %v1602 = vld [vmem:[%s1599 + $0x10] sm:$0xff]
        %v1603 = vld [vmem:[%s1599 + $0x18] sm:$0xff]
        %v1604 = vld [vmem:[%s1599 + $0x20] sm:$0xff]
        %v1605 = vld [vmem:[%s1599 + $0x28] sm:$0xff]
        %v1606 = vld [vmem:[%s1599 + $0x30] sm:$0xff]
        %v1607 = vld [vmem:[%s1599 + $0x38] sm:$0xff]
        %v1608 = vld [vmem:[%s1599 + $0x40] sm:$0xff]
        %v1609 = vld [vmem:[%s1599 + $0x48] sm:$0xff]
        %v1610 = vld [vmem:[%s1599 + $0x50] sm:$0xff]
        %v1611 = vld [vmem:[%s1599 + $0x58] sm:$0xff]
        %v1612 = vld [vmem:[%s1599 + $0x60] sm:$0xff]
        %v1613 = vld [vmem:[%s1599 + $0x68] sm:$0xff]
        %v1614 = vld [vmem:[%s1599 + $0x70] sm:$0xff]
        %v1615 = vld [vmem:[%s1599 + $0x78] sm:$0xff]
        %v1616 = vld [vmem:[%s1599 + $0x80] sm:$0xff]
        %v1617 = vld [vmem:[%s1599 + $0x88] sm:$0xff]
        %v1618 = vld [vmem:[%s1599 + $0x90] sm:$0xff]
        %v1619 = vld [vmem:[%s1599 + $0x98] sm:$0xff]
        %v1620 = vld [vmem:[%s1599 + $0xa0] sm:$0xff]
        %v1621 = vld [vmem:[%s1599 + $0xa8] sm:$0xff]
        %v1622 = vld [vmem:[%s1599 + $0xb0] sm:$0xff]
        %v1623 = vld [vmem:[%s1599 + $0xb8] sm:$0xff]
        %v1624 = vld [vmem:[%s1599 + $0xc0] sm:$0xff]
        %v1625 = vld [vmem:[%s1599 + $0xc8] sm:$0xff]
        %v1626 = vld [vmem:[%s1599 + $0xd0] sm:$0xff]
        %v1627 = vld [vmem:[%s1599 + $0xd8] sm:$0xff]
        %v1628 = vld [vmem:[%s1599 + $0xe0] sm:$0xff]
        %v1629 = vld [vmem:[%s1599 + $0xe8] sm:$0xff]
        %v1630 = vld [vmem:[%s1599 + $0xf0] sm:$0xff]
        %v1631 = vld [vmem:[%s1599 + $0xf8] sm:$0xff]
        %v1632 = vld [vmem:[%s1599 + $0x100] sm:$0xff]
        %v1633 = vld [vmem:[%s1599 + $0x108] sm:$0xff]
        %v1634 = vld [vmem:[%s1599 + $0x110] sm:$0xff]
        %v1635 = vld [vmem:[%s1599 + $0x118] sm:$0xff]
        %v1636 = vld [vmem:[%s1599 + $0x120] sm:$0xff]
        %v1637 = vld [vmem:[%s1599 + $0x128] sm:$0xff]
        %v1638 = vld [vmem:[%s1599 + $0x130] sm:$0xff]
        %v1639 = vld [vmem:[%s1599 + $0x138] sm:$0xff]
        %v1640 = vld [vmem:[%s1599 + $0x140] sm:$0xff]
        %v1641 = vld [vmem:[%s1599 + $0x148] sm:$0xff]
        %v1642 = vld [vmem:[%s1599 + $0x150] sm:$0xff]
        %v1643 = vld [vmem:[%s1599 + $0x158] sm:$0xff]
        %v1644 = vld [vmem:[%s1599 + $0x160] sm:$0xff]
        %v1645 = vld [vmem:[%s1599 + $0x168] sm:$0xff]
        %v1646 = vld [vmem:[%s1599 + $0x170] sm:$0xff]
        %v1647 = vld [vmem:[%s1599 + $0x178] sm:$0xff]
        %v1648 = vld [vmem:[%s1599 + $0x180] sm:$0xff]
        %v1649 = vld [vmem:[%s1599 + $0x188] sm:$0xff]
        %v1650 = vld [vmem:[%s1599 + $0x190] sm:$0xff]
        %v1651 = vld [vmem:[%s1599 + $0x198] sm:$0xff]
        %v1652 = vld [vmem:[%s1599 + $0x1a0] sm:$0xff]
        %v1653 = vld [vmem:[%s1599 + $0x1a8] sm:$0xff]
        %v1654 = vld [vmem:[%s1599 + $0x1b0] sm:$0xff]
        %v1655 = vld [vmem:[%s1599 + $0x1b8] sm:$0xff]
        %v1656 = vld [vmem:[%s1599 + $0x1c0] sm:$0xff]
        %v1657 = vld [vmem:[%s1599 + $0x1c8] sm:$0xff]
        %v1658 = vld [vmem:[%s1599 + $0x1d0] sm:$0xff]
        %v1659 = vld [vmem:[%s1599 + $0x1d8] sm:$0xff]
        %v1660 = vld [vmem:[%s1599 + $0x1e0] sm:$0xff]
        %v1661 = vld [vmem:[%s1599 + $0x1e8] sm:$0xff]
        %v1662 = vld [vmem:[%s1599 + $0x1f0] sm:$0xff]
        %v1663 = vld [vmem:[%s1599 + $0x1f8] sm:$0xff]
        %v1664 = vld [vmem:[%s1599 + $0x200] sm:$0xff]
        %v1665 = vld [vmem:[%s1599 + $0x208] sm:$0xff]
        %v1666 = vld [vmem:[%s1599 + $0x210] sm:$0xff]
        %v1667 = vld [vmem:[%s1599 + $0x218] sm:$0xff]
        %v1668 = vld [vmem:[%s1599 + $0x220] sm:$0xff]
        %v1669 = vld [vmem:[%s1599 + $0x228] sm:$0xff]
        %v1670 = vld [vmem:[%s1599 + $0x230] sm:$0xff]
        %v1671 = vld [vmem:[%s1599 + $0x238] sm:$0xff]
        %v1672 = vld [vmem:[%s1599 + $0x240] sm:$0xff]
        %v1673 = vld [vmem:[%s1599 + $0x248] sm:$0xff]
        %v1674 = vld [vmem:[%s1599 + $0x250] sm:$0xff]
        %v1675 = vld [vmem:[%s1599 + $0x258] sm:$0xff]
        %v1676 = vld [vmem:[%s1599 + $0x260] sm:$0xff]
        %v1677 = vld [vmem:[%s1599 + $0x268] sm:$0xff]
        %v1678 = vld [vmem:[%s1599 + $0x270] sm:$0xff]
        %v1679 = vld [vmem:[%s1599 + $0x278] sm:$0xff]
        %v1680 = vld [vmem:[%s1599 + $0x280] sm:$0xff]
        %v1681 = vld [vmem:[%s1599 + $0x288] sm:$0xff]
        %v1682 = vld [vmem:[%s1599 + $0x290] sm:$0xff]
        %v1683 = vld [vmem:[%s1599 + $0x298] sm:$0xff]
        %v1684 = vld [vmem:[%s1599 + $0x2a0] sm:$0xff]
        %v1685 = vld [vmem:[%s1599 + $0x2a8] sm:$0xff]
        %v1686 = vld [vmem:[%s1599 + $0x2b0] sm:$0xff]
        %v1687 = vld [vmem:[%s1599 + $0x2b8] sm:$0xff]
        %v1688 = vld [vmem:[%s1599 + $0x2c0] sm:$0xff]
        %v1689 = vld [vmem:[%s1599 + $0x2c8] sm:$0xff]
        %v1690 = vld [vmem:[%s1599 + $0x2d0] sm:$0xff]
        %v1691 = vld [vmem:[%s1599 + $0x2d8] sm:$0xff]
        %v1692 = vld [vmem:[%s1599 + $0x2e0] sm:$0xff]
        %v1693 = vld [vmem:[%s1599 + $0x2e8] sm:$0xff]
        %v1694 = vld [vmem:[%s1599 + $0x2f0] sm:$0xff]
        %v1695 = vld [vmem:[%s1599 + $0x2f8] sm:$0xff]
        %v1696 = vld [vmem:[%s1599 + $0x300] sm:$0xff]
        %v1697 = vld [vmem:[%s1599 + $0x308] sm:$0xff]
        %v1698 = vld [vmem:[%s1599 + $0x310] sm:$0xff]
        %v1699 = vld [vmem:[%s1599 + $0x318] sm:$0xff]
        %v1700 = vld [vmem:[%s1599 + $0x320] sm:$0xff]
        %v1701 = vld [vmem:[%s1599 + $0x328] sm:$0xff]
        %v1702 = vld [vmem:[%s1599 + $0x330] sm:$0xff]
        %v1703 = vld [vmem:[%s1599 + $0x338] sm:$0xff]
        %v1704 = vld [vmem:[%s1599 + $0x340] sm:$0xff]
        %v1705 = vld [vmem:[%s1599 + $0x348] sm:$0xff]
        %v1706 = vld [vmem:[%s1599 + $0x350] sm:$0xff]
        %v1707 = vld [vmem:[%s1599 + $0x358] sm:$0xff]
        %v1708 = vld [vmem:[%s1599 + $0x360] sm:$0xff]
        %v1709 = vld [vmem:[%s1599 + $0x368] sm:$0xff]
        %v1710 = vld [vmem:[%s1599 + $0x370] sm:$0xff]
        %v1711 = vld [vmem:[%s1599 + $0x378] sm:$0xff]
        %v1712 = vld [vmem:[%s1599 + $0x380] sm:$0xff]
        %v1713 = vld [vmem:[%s1599 + $0x388] sm:$0xff]
        %v1714 = vld [vmem:[%s1599 + $0x390] sm:$0xff]
        %v1715 = vld [vmem:[%s1599 + $0x398] sm:$0xff]
        %v1716 = vld [vmem:[%s1599 + $0x3a0] sm:$0xff]
        %v1717 = vld [vmem:[%s1599 + $0x3a8] sm:$0xff]
        %v1718 = vld [vmem:[%s1599 + $0x3b0] sm:$0xff]
        %v1719 = vld [vmem:[%s1599 + $0x3b8] sm:$0xff]
        %v1720 = vld [vmem:[%s1599 + $0x3c0] sm:$0xff]
        %v1721 = vld [vmem:[%s1599 + $0x3c8] sm:$0xff]
        %v1722 = vld [vmem:[%s1599 + $0x3d0] sm:$0xff]
        %v1723 = vld [vmem:[%s1599 + $0x3d8] sm:$0xff]
        %v1724 = vld [vmem:[%s1599 + $0x3e0] sm:$0xff]
        %v1725 = vld [vmem:[%s1599 + $0x3e8] sm:$0xff]
        %v1726 = vld [vmem:[%s1599 + $0x3f0] sm:$0xff]
        %v1727 = vld [vmem:[%s1599 + $0x3f8] sm:$0xff]
        %v1728 = vld [vmem:[%s1599 + $0x400] sm:$0xff]
        %v1729 = vld [vmem:[%s1599 + $0x408] sm:$0xff]
        %v1730 = vld [vmem:[%s1599 + $0x410] sm:$0xff]
        %v1731 = vld [vmem:[%s1599 + $0x418] sm:$0xff]
        %v1732 = vld [vmem:[%s1599 + $0x420] sm:$0xff]
        %v1733 = vld [vmem:[%s1599 + $0x428] sm:$0xff]
        %v1734 = vld [vmem:[%s1599 + $0x430] sm:$0xff]
        %v1735 = vld [vmem:[%s1599 + $0x438] sm:$0xff]
        %v1736 = vld [vmem:[%s1599 + $0x440] sm:$0xff]
        %v1737 = vld [vmem:[%s1599 + $0x448] sm:$0xff]
        %v1738 = vld [vmem:[%s1599 + $0x450] sm:$0xff]
        %v1739 = vld [vmem:[%s1599 + $0x458] sm:$0xff]
        %v1740 = vld [vmem:[%s1599 + $0x460] sm:$0xff]
        %v1741 = vld [vmem:[%s1599 + $0x468] sm:$0xff]
        %v1742 = vld [vmem:[%s1599 + $0x470] sm:$0xff]
        %v1743 = vld [vmem:[%s1599 + $0x478] sm:$0xff]
        %v1744 = vld [vmem:[%s1599 + $0x480] sm:$0xff]
        %v1745 = vld [vmem:[%s1599 + $0x488] sm:$0xff]
        %v1746 = vld [vmem:[%s1599 + $0x490] sm:$0xff]
        %v1747 = vld [vmem:[%s1599 + $0x498] sm:$0xff]
        %v1748 = vld [vmem:[%s1599 + $0x4a0] sm:$0xff]
        %v1749 = vld [vmem:[%s1599 + $0x4a8] sm:$0xff]
        %v1750 = vld [vmem:[%s1599 + $0x4b0] sm:$0xff]
        %v1751 = vld [vmem:[%s1599 + $0x4b8] sm:$0xff]
        %v1752 = vld [vmem:[%s1599 + $0x4c0] sm:$0xff]
        %v1753 = vld [vmem:[%s1599 + $0x4c8] sm:$0xff]
        %v1754 = vld [vmem:[%s1599 + $0x4d0] sm:$0xff]
        %v1755 = vld [vmem:[%s1599 + $0x4d8] sm:$0xff]
        %v1756 = vld [vmem:[%s1599 + $0x4e0] sm:$0xff]
        %v1757 = vld [vmem:[%s1599 + $0x4e8] sm:$0xff]
        %v1758 = vld [vmem:[%s1599 + $0x4f0] sm:$0xff]
        %v1759 = vld [vmem:[%s1599 + $0x4f8] sm:$0xff]
        %v1760 = vld [vmem:[%s1599 + $0x500] sm:$0xff]
        %v1761 = vld [vmem:[%s1599 + $0x508] sm:$0xff]
        %v1762 = vld [vmem:[%s1599 + $0x510] sm:$0xff]
        %v1763 = vld [vmem:[%s1599 + $0x518] sm:$0xff]
        %v1764 = vld [vmem:[%s1599 + $0x520] sm:$0xff]
        %v1765 = vld [vmem:[%s1599 + $0x528] sm:$0xff]
        %v1766 = vld [vmem:[%s1599 + $0x530] sm:$0xff]
        %v1767 = vld [vmem:[%s1599 + $0x538] sm:$0xff]
        %v1768 = vld [vmem:[%s1599 + $0x540] sm:$0xff]
        %v1769 = vld [vmem:[%s1599 + $0x548] sm:$0xff]
        %v1770 = vld [vmem:[%s1599 + $0x550] sm:$0xff]
        %v1771 = vld [vmem:[%s1599 + $0x558] sm:$0xff]
        %v1772 = vld [vmem:[%s1599 + $0x560] sm:$0xff]
        %v1773 = vld [vmem:[%s1599 + $0x568] sm:$0xff]
        %v1774 = vld [vmem:[%s1599 + $0x570] sm:$0xff]
        %v1775 = vld [vmem:[%s1599 + $0x578] sm:$0xff]
        %v1776 = vld [vmem:[%s1599 + $0x580] sm:$0xff]
        %v1777 = vld [vmem:[%s1599 + $0x588] sm:$0xff]
        %v1778 = vld [vmem:[%s1599 + $0x590] sm:$0xff]
        %v1779 = vld [vmem:[%s1599 + $0x598] sm:$0xff]
        %v1780 = vld [vmem:[%s1599 + $0x5a0] sm:$0xff]
        %v1781 = vld [vmem:[%s1599 + $0x5a8] sm:$0xff]
        %v1782 = vld [vmem:[%s1599 + $0x5b0] sm:$0xff]
        %v1783 = vld [vmem:[%s1599 + $0x5b8] sm:$0xff]
        %v1784 = vld [vmem:[%s1599 + $0x5c0] sm:$0xff]
        %v1785 = vld [vmem:[%s1599 + $0x5c8] sm:$0xff]
        %v1786 = vld [vmem:[%s1599 + $0x5d0] sm:$0xff]
        %v1787 = vld [vmem:[%s1599 + $0x5d8] sm:$0xff]
        %v1788 = vld [vmem:[%s1599 + $0x5e0] sm:$0xff]
        %v1789 = vld [vmem:[%s1599 + $0x5e8] sm:$0xff]
        %v1790 = vld [vmem:[%s1599 + $0x5f0] sm:$0xff]
        %v1791 = vld [vmem:[%s1599 + $0x5f8] sm:$0xff]
        %v1792 = vld [vmem:[%s1599 + $0x600] sm:$0xff]
        %v1793 = vld [vmem:[%s1599 + $0x608] sm:$0xff]
        %v1794 = vld [vmem:[%s1599 + $0x610] sm:$0xff]
        %v1795 = vld [vmem:[%s1599 + $0x618] sm:$0xff]
        %v1796 = vld [vmem:[%s1599 + $0x620] sm:$0xff]
        %v1797 = vld [vmem:[%s1599 + $0x628] sm:$0xff]
        %v1798 = vld [vmem:[%s1599 + $0x630] sm:$0xff]
        %v1799 = vld [vmem:[%s1599 + $0x638] sm:$0xff]
        %v1800 = vld [vmem:[%s1599 + $0x640] sm:$0xff]
        %v1801 = vld [vmem:[%s1599 + $0x648] sm:$0xff]
        %v1802 = vld [vmem:[%s1599 + $0x650] sm:$0xff]
        %v1803 = vld [vmem:[%s1599 + $0x658] sm:$0xff]
        %v1804 = vld [vmem:[%s1599 + $0x660] sm:$0xff]
        %v1805 = vld [vmem:[%s1599 + $0x668] sm:$0xff]
        %v1806 = vld [vmem:[%s1599 + $0x670] sm:$0xff]
        %v1807 = vld [vmem:[%s1599 + $0x678] sm:$0xff]
        %v1808 = vld [vmem:[%s1599 + $0x680] sm:$0xff]
        %v1809 = vld [vmem:[%s1599 + $0x688] sm:$0xff]
        %v1810 = vld [vmem:[%s1599 + $0x690] sm:$0xff]
        %v1811 = vld [vmem:[%s1599 + $0x698] sm:$0xff]
        %v1812 = vld [vmem:[%s1599 + $0x6a0] sm:$0xff]
        %v1813 = vld [vmem:[%s1599 + $0x6a8] sm:$0xff]
        %v1814 = vld [vmem:[%s1599 + $0x6b0] sm:$0xff]
        %v1815 = vld [vmem:[%s1599 + $0x6b8] sm:$0xff]
        %v1816 = vld [vmem:[%s1599 + $0x6c0] sm:$0xff]
        %v1817 = vld [vmem:[%s1599 + $0x6c8] sm:$0xff]
        %v1818 = vld [vmem:[%s1599 + $0x6d0] sm:$0xff]
        %v1819 = vld [vmem:[%s1599 + $0x6d8] sm:$0xff]
        %v1820 = vld [vmem:[%s1599 + $0x6e0] sm:$0xff]
        %v1821 = vld [vmem:[%s1599 + $0x6e8] sm:$0xff]
        %v1822 = vld [vmem:[%s1599 + $0x6f0] sm:$0xff]
        %v1823 = vld [vmem:[%s1599 + $0x6f8] sm:$0xff]
        %v1824 = vld [vmem:[%s1599 + $0x700] sm:$0xff]
        %v1825 = vld [vmem:[%s1599 + $0x708] sm:$0xff]
        %v1826 = vld [vmem:[%s1599 + $0x710] sm:$0xff]
        %v1827 = vld [vmem:[%s1599 + $0x718] sm:$0xff]
        %v1828 = vld [vmem:[%s1599 + $0x720] sm:$0xff]
        %v1829 = vld [vmem:[%s1599 + $0x728] sm:$0xff]
        %v1830 = vld [vmem:[%s1599 + $0x730] sm:$0xff]
        %v1831 = vld [vmem:[%s1599 + $0x738] sm:$0xff]
        %v1832 = vld [vmem:[%s1599 + $0x740] sm:$0xff]
        %v1833 = vld [vmem:[%s1599 + $0x748] sm:$0xff]
        %v1834 = vld [vmem:[%s1599 + $0x750] sm:$0xff]
        %v1835 = vld [vmem:[%s1599 + $0x758] sm:$0xff]
        %v1836 = vld [vmem:[%s1599 + $0x760] sm:$0xff]
        %v1837 = vld [vmem:[%s1599 + $0x768] sm:$0xff]
        %v1838 = vld [vmem:[%s1599 + $0x770] sm:$0xff]
        %v1839 = vld [vmem:[%s1599 + $0x778] sm:$0xff]
        %v1840 = vld [vmem:[%s1599 + $0x780] sm:$0xff]
        %v1841 = vld [vmem:[%s1599 + $0x788] sm:$0xff]
        %v1842 = vld [vmem:[%s1599 + $0x790] sm:$0xff]
        %v1843 = vld [vmem:[%s1599 + $0x798] sm:$0xff]
        %v1844 = vld [vmem:[%s1599 + $0x7a0] sm:$0xff]
        %v1845 = vld [vmem:[%s1599 + $0x7a8] sm:$0xff]
        %v1846 = vld [vmem:[%s1599 + $0x7b0] sm:$0xff]
        %v1847 = vld [vmem:[%s1599 + $0x7b8] sm:$0xff]
        %v1848 = vld [vmem:[%s1599 + $0x7c0] sm:$0xff]
        %v1849 = vld [vmem:[%s1599 + $0x7c8] sm:$0xff]
        %v1850 = vld [vmem:[%s1599 + $0x7d0] sm:$0xff]
        %v1851 = vld [vmem:[%s1599 + $0x7d8] sm:$0xff]
        %v1852 = vld [vmem:[%s1599 + $0x7e0] sm:$0xff]
        %v1853 = vld [vmem:[%s1599 + $0x7e8] sm:$0xff]
        %v1854 = vld [vmem:[%s1599 + $0x7f0] sm:$0xff]
        %v1855 = vld [vmem:[%s1599 + $0x7f8] sm:$0xff]
        %1856 = vmatprep.subr.mxu0 %v1601
        %1857 = vmatpush1.msra.mxu0 %v1600
        %1858 = vmatprep.subr.mxu0 %v1609
        %1859 = vmatpush1.msra.mxu0 %v1608
        %1860 = vmatprep.subr.mxu0 %v1617
        %1861 = vmatpush1.msra.mxu0 %v1616
        %1862 = vmatprep.subr.mxu0 %v1625
        %1863 = vmatpush1.msra.mxu0 %v1624
        %1864 = vmatprep.subr.mxu0 %v1633
        %1865 = vmatpush1.msra.mxu0 %v1632
        %1866 = vmatprep.subr.mxu0 %v1641
        %1867 = vmatpush1.msra.mxu0 %v1640
        %1868 = vmatprep.subr.mxu0 %v1649
        %1869 = vmatpush1.msra.mxu0 %v1648
        %1870 = vmatprep.subr.mxu0 %v1657
        %1871 = vmatpush1.msra.mxu0 %v1656
        %1872 = vmatprep.subr.mxu0 %v1665
        %1873 = vmatpush1.msra.mxu0 %v1664
        %1874 = vmatprep.subr.mxu0 %v1673
        %1875 = vmatpush1.msra.mxu0 %v1672
        %1876 = vmatprep.subr.mxu0 %v1681
        %1877 = vmatpush1.msra.mxu0 %v1680
        %1878 = vmatprep.subr.mxu0 %v1689
        %1879 = vmatpush1.msra.mxu0 %v1688
        %1880 = vmatprep.subr.mxu0 %v1697
        %1881 = vmatpush1.msra.mxu0 %v1696
        %1882 = vmatprep.subr.mxu0 %v1705
        %1883 = vmatpush1.msra.mxu0 %v1704
        %1884 = vmatprep.subr.mxu0 %v1713
        %1885 = vmatpush1.msra.mxu0 %v1712
        %1886 = vmatprep.subr.mxu0 %v1721
        %1887 = vmatpush1.msra.mxu0 %v1720
        %1888 = vmatprep.subr.mxu0 %v1729
        %1889 = vmatpush1.msra.mxu0 %v1728
        %1890 = vmatprep.subr.mxu0 %v1737
        %1891 = vmatpush1.msra.mxu0 %v1736
        %1892 = vmatprep.subr.mxu0 %v1745
        %1893 = vmatpush1.msra.mxu0 %v1744
        %1894 = vmatprep.subr.mxu0 %v1753
        %1895 = vmatpush1.msra.mxu0 %v1752
        %1896 = vmatprep.subr.mxu0 %v1761
        %1897 = vmatpush1.msra.mxu0 %v1760
        %1898 = vmatprep.subr.mxu0 %v1769
        %1899 = vmatpush1.msra.mxu0 %v1768
        %1900 = vmatprep.subr.mxu0 %v1777
        %1901 = vmatpush1.msra.mxu0 %v1776
        %1902 = vmatprep.subr.mxu0 %v1785
        %1903 = vmatpush1.msra.mxu0 %v1784
        %1904 = vmatprep.subr.mxu0 %v1793
        %1905 = vmatpush1.msra.mxu0 %v1792
        %1906 = vmatprep.subr.mxu0 %v1801
        %1907 = vmatpush1.msra.mxu0 %v1800
        %1908 = vmatprep.subr.mxu0 %v1809
        %1909 = vmatpush1.msra.mxu0 %v1808
        %1910 = vmatprep.subr.mxu0 %v1817
        %1911 = vmatpush1.msra.mxu0 %v1816
        %1912 = vmatprep.subr.mxu0 %v1825
        %1913 = vmatpush1.msra.mxu0 %v1824
        %1914 = vmatprep.subr.mxu0 %v1833
        %1915 = vmatpush1.msra.mxu0 %v1832
        %1916 = vmatprep.subr.mxu0 %v1841
        %1917 = vmatpush1.msra.mxu0 %v1840
        %1918 = vmatprep.subr.mxu0 %v1849
        %1919 = vmatpush1.msra.mxu0 %v1848
        %1920 = vmatprep.mubr.f32.mxu0 %v1597
        %1921 = vmatmul.mubr.f32.gmra.mrb[0].mxu0 %v1595
        %v1922 = vpop.f32.mrb[0].mxu0
        %v1923 = vadd.f32 0.0, %v1922
        %v1924 = vpop.f32.mrb[0].mxu0
        %v1925 = vadd.f32 0.0, %v1924
        %1926 = vdwg.mxu0
        %1927 = vmatprep.subr.mxu0 %v1603
        %1928 = vmatpush1.msra.mxu0 %v1602
        %1929 = vmatprep.subr.mxu0 %v1611
        %1930 = vmatpush1.msra.mxu0 %v1610
        %1931 = vmatprep.subr.mxu0 %v1619
        %1932 = vmatpush1.msra.mxu0 %v1618
        %1933 = vmatprep.subr.mxu0 %v1627
        %1934 = vmatpush1.msra.mxu0 %v1626
        %1935 = vmatprep.subr.mxu0 %v1635
        %1936 = vmatpush1.msra.mxu0 %v1634
        %1937 = vmatprep.subr.mxu0 %v1643
        %1938 = vmatpush1.msra.mxu0 %v1642
        %1939 = vmatprep.subr.mxu0 %v1651
        %1940 = vmatpush1.msra.mxu0 %v1650
        %1941 = vmatprep.subr.mxu0 %v1659
        %1942 = vmatpush1.msra.mxu0 %v1658
        %1943 = vmatprep.subr.mxu0 %v1667
        %1944 = vmatpush1.msra.mxu0 %v1666
        %1945 = vmatprep.subr.mxu0 %v1675
        %1946 = vmatpush1.msra.mxu0 %v1674
        %1947 = vmatprep.subr.mxu0 %v1683
        %1948 = vmatpush1.msra.mxu0 %v1682
        %1949 = vmatprep.subr.mxu0 %v1691
        %1950 = vmatpush1.msra.mxu0 %v1690
        %1951 = vmatprep.subr.mxu0 %v1699
        %1952 = vmatpush1.msra.mxu0 %v1698
        %1953 = vmatprep.subr.mxu0 %v1707
        %1954 = vmatpush1.msra.mxu0 %v1706
        %1955 = vmatprep.subr.mxu0 %v1715
        %1956 = vmatpush1.msra.mxu0 %v1714
        %1957 = vmatprep.subr.mxu0 %v1723
        %1958 = vmatpush1.msra.mxu0 %v1722
        %1959 = vmatprep.subr.mxu0 %v1731
        %1960 = vmatpush1.msra.mxu0 %v1730
        %1961 = vmatprep.subr.mxu0 %v1739
        %1962 = vmatpush1.msra.mxu0 %v1738
        %1963 = vmatprep.subr.mxu0 %v1747
        %1964 = vmatpush1.msra.mxu0 %v1746
        %1965 = vmatprep.subr.mxu0 %v1755
        %1966 = vmatpush1.msra.mxu0 %v1754
        %1967 = vmatprep.subr.mxu0 %v1763
        %1968 = vmatpush1.msra.mxu0 %v1762
        %1969 = vmatprep.subr.mxu0 %v1771
        %1970 = vmatpush1.msra.mxu0 %v1770
        %1971 = vmatprep.subr.mxu0 %v1779
        %1972 = vmatpush1.msra.mxu0 %v1778
        %1973 = vmatprep.subr.mxu0 %v1787
        %1974 = vmatpush1.msra.mxu0 %v1786
        %1975 = vmatprep.subr.mxu0 %v1795
        %1976 = vmatpush1.msra.mxu0 %v1794
        %1977 = vmatprep.subr.mxu0 %v1803
        %1978 = vmatpush1.msra.mxu0 %v1802
        %1979 = vmatprep.subr.mxu0 %v1811
        %1980 = vmatpush1.msra.mxu0 %v1810
        %1981 = vmatprep.subr.mxu0 %v1819
        %1982 = vmatpush1.msra.mxu0 %v1818
        %1983 = vmatprep.subr.mxu0 %v1827
        %1984 = vmatpush1.msra.mxu0 %v1826
        %1985 = vmatprep.subr.mxu0 %v1835
        %1986 = vmatpush1.msra.mxu0 %v1834
        %1987 = vmatprep.subr.mxu0 %v1843
        %1988 = vmatpush1.msra.mxu0 %v1842
        %1989 = vmatprep.subr.mxu0 %v1851
        %1990 = vmatpush1.msra.mxu0 %v1850
        %1991 = vmatprep.mubr.f32.mxu0 %v1597
        %1992 = vmatmul.mubr.f32.gmra.mrb[0].mxu0 %v1595
        %v1993 = vpop.f32.mrb[0].mxu0
        %v1994 = vadd.f32 0.0, %v1993
        %v1995 = vpop.f32.mrb[0].mxu0
        %v1996 = vadd.f32 0.0, %v1995
        %1997 = vdwg.mxu0
        %1998 = vmatprep.subr.mxu0 %v1605
        %1999 = vmatpush1.msra.mxu0 %v1604
        %2000 = vmatprep.subr.mxu0 %v1613
        %2001 = vmatpush1.msra.mxu0 %v1612
        %2002 = vmatprep.subr.mxu0 %v1621
        %2003 = vmatpush1.msra.mxu0 %v1620
        %2004 = vmatprep.subr.mxu0 %v1629
        %2005 = vmatpush1.msra.mxu0 %v1628
        %2006 = vmatprep.subr.mxu0 %v1637
        %2007 = vmatpush1.msra.mxu0 %v1636
        %2008 = vmatprep.subr.mxu0 %v1645
        %2009 = vmatpush1.msra.mxu0 %v1644
        %2010 = vmatprep.subr.mxu0 %v1653
        %2011 = vmatpush1.msra.mxu0 %v1652
        %2012 = vmatprep.subr.mxu0 %v1661
        %2013 = vmatpush1.msra.mxu0 %v1660
        %2014 = vmatprep.subr.mxu0 %v1669
        %2015 = vmatpush1.msra.mxu0 %v1668
        %2016 = vmatprep.subr.mxu0 %v1677
        %2017 = vmatpush1.msra.mxu0 %v1676
        %2018 = vmatprep.subr.mxu0 %v1685
        %2019 = vmatpush1.msra.mxu0 %v1684
        %2020 = vmatprep.subr.mxu0 %v1693
        %2021 = vmatpush1.msra.mxu0 %v1692
        %2022 = vmatprep.subr.mxu0 %v1701
        %2023 = vmatpush1.msra.mxu0 %v1700
        %2024 = vmatprep.subr.mxu0 %v1709
        %2025 = vmatpush1.msra.mxu0 %v1708
        %2026 = vmatprep.subr.mxu0 %v1717
        %2027 = vmatpush1.msra.mxu0 %v1716
        %2028 = vmatprep.subr.mxu0 %v1725
        %2029 = vmatpush1.msra.mxu0 %v1724
        %2030 = vmatprep.subr.mxu0 %v1733
        %2031 = vmatpush1.msra.mxu0 %v1732
        %2032 = vmatprep.subr.mxu0 %v1741
        %2033 = vmatpush1.msra.mxu0 %v1740
        %2034 = vmatprep.subr.mxu0 %v1749
        %2035 = vmatpush1.msra.mxu0 %v1748
        %2036 = vmatprep.subr.mxu0 %v1757
        %2037 = vmatpush1.msra.mxu0 %v1756
        %2038 = vmatprep.subr.mxu0 %v1765
        %2039 = vmatpush1.msra.mxu0 %v1764
        %2040 = vmatprep.subr.mxu0 %v1773
        %2041 = vmatpush1.msra.mxu0 %v1772
        %2042 = vmatprep.subr.mxu0 %v1781
        %2043 = vmatpush1.msra.mxu0 %v1780
        %2044 = vmatprep.subr.mxu0 %v1789
        %2045 = vmatpush1.msra.mxu0 %v1788
        %2046 = vmatprep.subr.mxu0 %v1797
        %2047 = vmatpush1.msra.mxu0 %v1796
        %2048 = vmatprep.subr.mxu0 %v1805
        %2049 = vmatpush1.msra.mxu0 %v1804
        %2050 = vmatprep.subr.mxu0 %v1813
        %2051 = vmatpush1.msra.mxu0 %v1812
        %2052 = vmatprep.subr.mxu0 %v1821
        %2053 = vmatpush1.msra.mxu0 %v1820
        %2054 = vmatprep.subr.mxu0 %v1829
        %2055 = vmatpush1.msra.mxu0 %v1828
        %2056 = vmatprep.subr.mxu0 %v1837
        %2057 = vmatpush1.msra.mxu0 %v1836
        %2058 = vmatprep.subr.mxu0 %v1845
        %2059 = vmatpush1.msra.mxu0 %v1844
        %2060 = vmatprep.subr.mxu0 %v1853
        %2061 = vmatpush1.msra.mxu0 %v1852
        %2062 = vmatprep.mubr.f32.mxu0 %v1597
        %2063 = vmatmul.mubr.f32.gmra.mrb[0].mxu0 %v1595
        %v2064 = vpop.f32.mrb[0].mxu0
        %v2065 = vadd.f32 0.0, %v2064
        %v2066 = vpop.f32.mrb[0].mxu0
        %v2067 = vadd.f32 0.0, %v2066
        %2068 = vdwg.mxu0
        %2069 = vmatprep.subr.mxu0 %v1607
        %2070 = vmatpush1.msra.mxu0 %v1606
        %2071 = vmatprep.subr.mxu0 %v1615
        %2072 = vmatpush1.msra.mxu0 %v1614
        %2073 = vmatprep.subr.mxu0 %v1623
        %2074 = vmatpush1.msra.mxu0 %v1622
        %2075 = vmatprep.subr.mxu0 %v1631
        %2076 = vmatpush1.msra.mxu0 %v1630
        %2077 = vmatprep.subr.mxu0 %v1639
        %2078 = vmatpush1.msra.mxu0 %v1638
        %2079 = vmatprep.subr.mxu0 %v1647
        %2080 = vmatpush1.msra.mxu0 %v1646
        %2081 = vmatprep.subr.mxu0 %v1655
        %2082 = vmatpush1.msra.mxu0 %v1654
        %2083 = vmatprep.subr.mxu0 %v1663
        %2084 = vmatpush1.msra.mxu0 %v1662
        %2085 = vmatprep.subr.mxu0 %v1671
        %2086 = vmatpush1.msra.mxu0 %v1670
        %2087 = vmatprep.subr.mxu0 %v1679
        %2088 = vmatpush1.msra.mxu0 %v1678
        %2089 = vmatprep.subr.mxu0 %v1687
        %2090 = vmatpush1.msra.mxu0 %v1686
        %2091 = vmatprep.subr.mxu0 %v1695
        %2092 = vmatpush1.msra.mxu0 %v1694
        %2093 = vmatprep.subr.mxu0 %v1703
        %2094 = vmatpush1.msra.mxu0 %v1702
        %2095 = vmatprep.subr.mxu0 %v1711
        %2096 = vmatpush1.msra.mxu0 %v1710
        %2097 = vmatprep.subr.mxu0 %v1719
        %2098 = vmatpush1.msra.mxu0 %v1718
        %2099 = vmatprep.subr.mxu0 %v1727
        %2100 = vmatpush1.msra.mxu0 %v1726
        %2101 = vmatprep.subr.mxu0 %v1735
        %2102 = vmatpush1.msra.mxu0 %v1734
        %2103 = vmatprep.subr.mxu0 %v1743
        %2104 = vmatpush1.msra.mxu0 %v1742
        %2105 = vmatprep.subr.mxu0 %v1751
        %2106 = vmatpush1.msra.mxu0 %v1750
        %2107 = vmatprep.subr.mxu0 %v1759
        %2108 = vmatpush1.msra.mxu0 %v1758
        %2109 = vmatprep.subr.mxu0 %v1767
        %2110 = vmatpush1.msra.mxu0 %v1766
        %2111 = vmatprep.subr.mxu0 %v1775
        %2112 = vmatpush1.msra.mxu0 %v1774
        %2113 = vmatprep.subr.mxu0 %v1783
        %2114 = vmatpush1.msra.mxu0 %v1782
        %2115 = vmatprep.subr.mxu0 %v1791
        %2116 = vmatpush1.msra.mxu0 %v1790
        %2117 = vmatprep.subr.mxu0 %v1799
        %2118 = vmatpush1.msra.mxu0 %v1798
        %2119 = vmatprep.subr.mxu0 %v1807
        %2120 = vmatpush1.msra.mxu0 %v1806
        %2121 = vmatprep.subr.mxu0 %v1815
        %2122 = vmatpush1.msra.mxu0 %v1814
        %2123 = vmatprep.subr.mxu0 %v1823
        %2124 = vmatpush1.msra.mxu0 %v1822
        %2125 = vmatprep.subr.mxu0 %v1831
        %2126 = vmatpush1.msra.mxu0 %v1830
        %2127 = vmatprep.subr.mxu0 %v1839
        %2128 = vmatpush1.msra.mxu0 %v1838
        %2129 = vmatprep.subr.mxu0 %v1847
        %2130 = vmatpush1.msra.mxu0 %v1846
        %2131 = vmatprep.subr.mxu0 %v1855
        %2132 = vmatpush1.msra.mxu0 %v1854
        %2133 = vmatprep.mubr.f32.mxu0 %v1597
        %2134 = vmatmul.mubr.f32.gmra.mrb[0].mxu0 %v1595
        %v2135 = vpop.f32.mrb[0].mxu0
        %v2136 = vadd.f32 0.0, %v2135
        %v2137 = vpop.f32.mrb[0].mxu0
        %v2138 = vadd.f32 0.0, %v2137
        %2139 = vdwg.mxu0
        %v2140 = vadd.f32 %v1306, %v1923
        %v2141 = vadd.f32 %v1308, %v1925
        %v2142 = vadd.f32 %v1377, %v1994
        %v2143 = vadd.f32 %v1379, %v1996
        %v2144 = vadd.f32 %v1448, %v2065
        %v2145 = vadd.f32 %v1450, %v2067
        %v2146 = vadd.f32 %v1519, %v2136
        %v2147 = vadd.f32 %v1521, %v2138
        %s2148 = scalar_lea.vmem %s0, 12
        %v2149 = vld [vmem:[%s2148] sm:$0xf]
        %v2151 = vsel %vm291, %v2149, 0
        %2153 = vmatprep.subr.mxu0 %v289
        %2154 = vmatpush1.msra.mxu0 %v288
        %2155 = vmatprep.subr.mxu0 0.0
        %2156 = vmatpush1.msra.mxu0 0.0
        %2157 = vmatprep.subr.mxu0 0.0
        %2158 = vmatpush1.msra.mxu0 0.0
        %2159 = vmatprep.subr.mxu0 0.0
        %2160 = vmatpush1.msra.mxu0 0.0
        %2161 = vmatprep.subr.mxu0 0.0
        %2162 = vmatpush1.msra.mxu0 0.0
        %2163 = vmatprep.subr.mxu0 0.0
        %2164 = vmatpush1.msra.mxu0 0.0
        %2165 = vmatprep.subr.mxu0 0.0
        %2166 = vmatpush1.msra.mxu0 0.0
        %2167 = vmatprep.subr.mxu0 0.0
        %2168 = vmatpush1.msra.mxu0 0.0
        %2169 = vmatprep.subr.mxu0 0.0
        %2170 = vmatpush1.msra.mxu0 0.0
        %2171 = vmatprep.subr.mxu0 0.0
        %2172 = vmatpush1.msra.mxu0 0.0
        %2173 = vmatprep.subr.mxu0 0.0
        %2174 = vmatpush1.msra.mxu0 0.0
        %2175 = vmatprep.subr.mxu0 0.0
        %2176 = vmatpush1.msra.mxu0 0.0
        %2177 = vmatprep.subr.mxu0 0.0
        %2178 = vmatpush1.msra.mxu0 0.0
        %2179 = vmatprep.subr.mxu0 0.0
        %2180 = vmatpush1.msra.mxu0 0.0
        %2181 = vmatprep.subr.mxu0 0.0
        %2182 = vmatpush1.msra.mxu0 0.0
        %2183 = vmatprep.subr.mxu0 0.0
        %2184 = vmatpush1.msra.mxu0 0.0
        %2185 = vmatprep.subr.mxu0 0.0
        %2186 = vmatpush1.msra.mxu0 0.0
        %2187 = vmatprep.subr.mxu0 0.0
        %2188 = vmatpush1.msra.mxu0 0.0
        %2189 = vmatprep.subr.mxu0 0.0
        %2190 = vmatpush1.msra.mxu0 0.0
        %2191 = vmatprep.subr.mxu0 0.0
        %2192 = vmatpush1.msra.mxu0 0.0
        %2193 = vmatprep.subr.mxu0 0.0
        %2194 = vmatpush1.msra.mxu0 0.0
        %2195 = vmatprep.subr.mxu0 0.0
        %2196 = vmatpush1.msra.mxu0 0.0
        %2197 = vmatprep.subr.mxu0 0.0
        %2198 = vmatpush1.msra.mxu0 0.0
        %2199 = vmatprep.subr.mxu0 0.0
        %2200 = vmatpush1.msra.mxu0 0.0
        %2201 = vmatprep.subr.mxu0 0.0
        %2202 = vmatpush1.msra.mxu0 0.0
        %2203 = vmatprep.subr.mxu0 0.0
        %2204 = vmatpush1.msra.mxu0 0.0
        %2205 = vmatprep.subr.mxu0 0.0
        %2206 = vmatpush1.msra.mxu0 0.0
        %2207 = vmatprep.subr.mxu0 0.0
        %2208 = vmatpush1.msra.mxu0 0.0
        %2209 = vmatprep.subr.mxu0 0.0
        %2210 = vmatpush1.msra.mxu0 0.0
        %2211 = vmatprep.subr.mxu0 0.0
        %2212 = vmatpush1.msra.mxu0 0.0
        %2213 = vmatprep.subr.mxu0 0.0
        %2214 = vmatpush1.msra.mxu0 0.0
        %2215 = vmatprep.subr.mxu0 0.0
        %2216 = vmatpush1.msra.mxu0 0.0
        %2217 = vmatprep.mubr.f32.mxu0 0.0
        %2218 = vmatmul.mubr.f32.gmra.mrb[0].mxu0 %v2151
        %v2219 = vpop.f32.mrb[0].mxu0
        %v2220 = vadd.f32 0.0, %v2219
        %v2221 = vpop.f32.mrb[0].mxu0
        %v2222 = vadd.f32 0.0, %v2221
        %2223 = vdwg.mxu0
        %s2224 = scalar_lea.vmem [#allocation2], 6144
        %v2225 = vld [vmem:[%s2224] sm:$0xff]
        %v2226 = vld [vmem:[%s2224 + $0x8] sm:$0xff]
        %v2227 = vld [vmem:[%s2224 + $0x10] sm:$0xff]
        %v2228 = vld [vmem:[%s2224 + $0x18] sm:$0xff]
        %v2229 = vld [vmem:[%s2224 + $0x20] sm:$0xff]
        %v2230 = vld [vmem:[%s2224 + $0x28] sm:$0xff]
        %v2231 = vld [vmem:[%s2224 + $0x30] sm:$0xff]
        %v2232 = vld [vmem:[%s2224 + $0x38] sm:$0xff]
        %v2233 = vld [vmem:[%s2224 + $0x40] sm:$0xff]
        %v2234 = vld [vmem:[%s2224 + $0x48] sm:$0xff]
        %v2235 = vld [vmem:[%s2224 + $0x50] sm:$0xff]
        %v2236 = vld [vmem:[%s2224 + $0x58] sm:$0xff]
        %v2237 = vld [vmem:[%s2224 + $0x60] sm:$0xff]
        %v2238 = vld [vmem:[%s2224 + $0x68] sm:$0xff]
        %v2239 = vld [vmem:[%s2224 + $0x70] sm:$0xff]
        %v2240 = vld [vmem:[%s2224 + $0x78] sm:$0xff]
        %v2241 = vld [vmem:[%s2224 + $0x80] sm:$0xff]
        %v2242 = vld [vmem:[%s2224 + $0x88] sm:$0xff]
        %v2243 = vld [vmem:[%s2224 + $0x90] sm:$0xff]
        %v2244 = vld [vmem:[%s2224 + $0x98] sm:$0xff]
        %v2245 = vld [vmem:[%s2224 + $0xa0] sm:$0xff]
        %v2246 = vld [vmem:[%s2224 + $0xa8] sm:$0xff]
        %v2247 = vld [vmem:[%s2224 + $0xb0] sm:$0xff]
        %v2248 = vld [vmem:[%s2224 + $0xb8] sm:$0xff]
        %v2249 = vld [vmem:[%s2224 + $0xc0] sm:$0xff]
        %v2250 = vld [vmem:[%s2224 + $0xc8] sm:$0xff]
        %v2251 = vld [vmem:[%s2224 + $0xd0] sm:$0xff]
        %v2252 = vld [vmem:[%s2224 + $0xd8] sm:$0xff]
        %v2253 = vld [vmem:[%s2224 + $0xe0] sm:$0xff]
        %v2254 = vld [vmem:[%s2224 + $0xe8] sm:$0xff]
        %v2255 = vld [vmem:[%s2224 + $0xf0] sm:$0xff]
        %v2256 = vld [vmem:[%s2224 + $0xf8] sm:$0xff]
        %v2257 = vld [vmem:[%s2224 + $0x100] sm:$0xff]
        %v2258 = vld [vmem:[%s2224 + $0x108] sm:$0xff]
        %v2259 = vld [vmem:[%s2224 + $0x110] sm:$0xff]
        %v2260 = vld [vmem:[%s2224 + $0x118] sm:$0xff]
        %v2261 = vld [vmem:[%s2224 + $0x120] sm:$0xff]
        %v2262 = vld [vmem:[%s2224 + $0x128] sm:$0xff]
        %v2263 = vld [vmem:[%s2224 + $0x130] sm:$0xff]
        %v2264 = vld [vmem:[%s2224 + $0x138] sm:$0xff]
        %v2265 = vld [vmem:[%s2224 + $0x140] sm:$0xff]
        %v2266 = vld [vmem:[%s2224 + $0x148] sm:$0xff]
        %v2267 = vld [vmem:[%s2224 + $0x150] sm:$0xff]
        %v2268 = vld [vmem:[%s2224 + $0x158] sm:$0xff]
        %v2269 = vld [vmem:[%s2224 + $0x160] sm:$0xff]
        %v2270 = vld [vmem:[%s2224 + $0x168] sm:$0xff]
        %v2271 = vld [vmem:[%s2224 + $0x170] sm:$0xff]
        %v2272 = vld [vmem:[%s2224 + $0x178] sm:$0xff]
        %v2273 = vld [vmem:[%s2224 + $0x180] sm:$0xff]
        %v2274 = vld [vmem:[%s2224 + $0x188] sm:$0xff]
        %v2275 = vld [vmem:[%s2224 + $0x190] sm:$0xff]
        %v2276 = vld [vmem:[%s2224 + $0x198] sm:$0xff]
        %v2277 = vld [vmem:[%s2224 + $0x1a0] sm:$0xff]
        %v2278 = vld [vmem:[%s2224 + $0x1a8] sm:$0xff]
        %v2279 = vld [vmem:[%s2224 + $0x1b0] sm:$0xff]
        %v2280 = vld [vmem:[%s2224 + $0x1b8] sm:$0xff]
        %v2281 = vld [vmem:[%s2224 + $0x1c0] sm:$0xff]
        %v2282 = vld [vmem:[%s2224 + $0x1c8] sm:$0xff]
        %v2283 = vld [vmem:[%s2224 + $0x1d0] sm:$0xff]
        %v2284 = vld [vmem:[%s2224 + $0x1d8] sm:$0xff]
        %v2285 = vld [vmem:[%s2224 + $0x1e0] sm:$0xff]
        %v2286 = vld [vmem:[%s2224 + $0x1e8] sm:$0xff]
        %v2287 = vld [vmem:[%s2224 + $0x1f0] sm:$0xff]
        %v2288 = vld [vmem:[%s2224 + $0x1f8] sm:$0xff]
        %v2289 = vld [vmem:[%s2224 + $0x200] sm:$0xff]
        %v2290 = vld [vmem:[%s2224 + $0x208] sm:$0xff]
        %v2291 = vld [vmem:[%s2224 + $0x210] sm:$0xff]
        %v2292 = vld [vmem:[%s2224 + $0x218] sm:$0xff]
        %v2293 = vld [vmem:[%s2224 + $0x220] sm:$0xff]
        %v2294 = vld [vmem:[%s2224 + $0x228] sm:$0xff]
        %v2295 = vld [vmem:[%s2224 + $0x230] sm:$0xff]
        %v2296 = vld [vmem:[%s2224 + $0x238] sm:$0xff]
        %v2297 = vld [vmem:[%s2224 + $0x240] sm:$0xff]
        %v2298 = vld [vmem:[%s2224 + $0x248] sm:$0xff]
        %v2299 = vld [vmem:[%s2224 + $0x250] sm:$0xff]
        %v2300 = vld [vmem:[%s2224 + $0x258] sm:$0xff]
        %v2301 = vld [vmem:[%s2224 + $0x260] sm:$0xff]
        %v2302 = vld [vmem:[%s2224 + $0x268] sm:$0xff]
        %v2303 = vld [vmem:[%s2224 + $0x270] sm:$0xff]
        %v2304 = vld [vmem:[%s2224 + $0x278] sm:$0xff]
        %v2305 = vld [vmem:[%s2224 + $0x280] sm:$0xff]
        %v2306 = vld [vmem:[%s2224 + $0x288] sm:$0xff]
        %v2307 = vld [vmem:[%s2224 + $0x290] sm:$0xff]
        %v2308 = vld [vmem:[%s2224 + $0x298] sm:$0xff]
        %v2309 = vld [vmem:[%s2224 + $0x2a0] sm:$0xff]
        %v2310 = vld [vmem:[%s2224 + $0x2a8] sm:$0xff]
        %v2311 = vld [vmem:[%s2224 + $0x2b0] sm:$0xff]
        %v2312 = vld [vmem:[%s2224 + $0x2b8] sm:$0xff]
        %v2313 = vld [vmem:[%s2224 + $0x2c0] sm:$0xff]
        %v2314 = vld [vmem:[%s2224 + $0x2c8] sm:$0xff]
        %v2315 = vld [vmem:[%s2224 + $0x2d0] sm:$0xff]
        %v2316 = vld [vmem:[%s2224 + $0x2d8] sm:$0xff]
        %v2317 = vld [vmem:[%s2224 + $0x2e0] sm:$0xff]
        %v2318 = vld [vmem:[%s2224 + $0x2e8] sm:$0xff]
        %v2319 = vld [vmem:[%s2224 + $0x2f0] sm:$0xff]
        %v2320 = vld [vmem:[%s2224 + $0x2f8] sm:$0xff]
        %v2321 = vld [vmem:[%s2224 + $0x300] sm:$0xff]
        %v2322 = vld [vmem:[%s2224 + $0x308] sm:$0xff]
        %v2323 = vld [vmem:[%s2224 + $0x310] sm:$0xff]
        %v2324 = vld [vmem:[%s2224 + $0x318] sm:$0xff]
        %v2325 = vld [vmem:[%s2224 + $0x320] sm:$0xff]
        %v2326 = vld [vmem:[%s2224 + $0x328] sm:$0xff]
        %v2327 = vld [vmem:[%s2224 + $0x330] sm:$0xff]
        %v2328 = vld [vmem:[%s2224 + $0x338] sm:$0xff]
        %v2329 = vld [vmem:[%s2224 + $0x340] sm:$0xff]
        %v2330 = vld [vmem:[%s2224 + $0x348] sm:$0xff]
        %v2331 = vld [vmem:[%s2224 + $0x350] sm:$0xff]
        %v2332 = vld [vmem:[%s2224 + $0x358] sm:$0xff]
        %v2333 = vld [vmem:[%s2224 + $0x360] sm:$0xff]
        %v2334 = vld [vmem:[%s2224 + $0x368] sm:$0xff]
        %v2335 = vld [vmem:[%s2224 + $0x370] sm:$0xff]
        %v2336 = vld [vmem:[%s2224 + $0x378] sm:$0xff]
        %v2337 = vld [vmem:[%s2224 + $0x380] sm:$0xff]
        %v2338 = vld [vmem:[%s2224 + $0x388] sm:$0xff]
        %v2339 = vld [vmem:[%s2224 + $0x390] sm:$0xff]
        %v2340 = vld [vmem:[%s2224 + $0x398] sm:$0xff]
        %v2341 = vld [vmem:[%s2224 + $0x3a0] sm:$0xff]
        %v2342 = vld [vmem:[%s2224 + $0x3a8] sm:$0xff]
        %v2343 = vld [vmem:[%s2224 + $0x3b0] sm:$0xff]
        %v2344 = vld [vmem:[%s2224 + $0x3b8] sm:$0xff]
        %v2345 = vld [vmem:[%s2224 + $0x3c0] sm:$0xff]
        %v2346 = vld [vmem:[%s2224 + $0x3c8] sm:$0xff]
        %v2347 = vld [vmem:[%s2224 + $0x3d0] sm:$0xff]
        %v2348 = vld [vmem:[%s2224 + $0x3d8] sm:$0xff]
        %v2349 = vld [vmem:[%s2224 + $0x3e0] sm:$0xff]
        %v2350 = vld [vmem:[%s2224 + $0x3e8] sm:$0xff]
        %v2351 = vld [vmem:[%s2224 + $0x3f0] sm:$0xff]
        %v2352 = vld [vmem:[%s2224 + $0x3f8] sm:$0xff]
        %v2353 = vld [vmem:[%s2224 + $0x400] sm:$0xff]
        %v2354 = vld [vmem:[%s2224 + $0x408] sm:$0xff]
        %v2355 = vld [vmem:[%s2224 + $0x410] sm:$0xff]
        %v2356 = vld [vmem:[%s2224 + $0x418] sm:$0xff]
        %v2357 = vld [vmem:[%s2224 + $0x420] sm:$0xff]
        %v2358 = vld [vmem:[%s2224 + $0x428] sm:$0xff]
        %v2359 = vld [vmem:[%s2224 + $0x430] sm:$0xff]
        %v2360 = vld [vmem:[%s2224 + $0x438] sm:$0xff]
        %v2361 = vld [vmem:[%s2224 + $0x440] sm:$0xff]
        %v2362 = vld [vmem:[%s2224 + $0x448] sm:$0xff]
        %v2363 = vld [vmem:[%s2224 + $0x450] sm:$0xff]
        %v2364 = vld [vmem:[%s2224 + $0x458] sm:$0xff]
        %v2365 = vld [vmem:[%s2224 + $0x460] sm:$0xff]
        %v2366 = vld [vmem:[%s2224 + $0x468] sm:$0xff]
        %v2367 = vld [vmem:[%s2224 + $0x470] sm:$0xff]
        %v2368 = vld [vmem:[%s2224 + $0x478] sm:$0xff]
        %v2369 = vld [vmem:[%s2224 + $0x480] sm:$0xff]
        %v2370 = vld [vmem:[%s2224 + $0x488] sm:$0xff]
        %v2371 = vld [vmem:[%s2224 + $0x490] sm:$0xff]
        %v2372 = vld [vmem:[%s2224 + $0x498] sm:$0xff]
        %v2373 = vld [vmem:[%s2224 + $0x4a0] sm:$0xff]
        %v2374 = vld [vmem:[%s2224 + $0x4a8] sm:$0xff]
        %v2375 = vld [vmem:[%s2224 + $0x4b0] sm:$0xff]
        %v2376 = vld [vmem:[%s2224 + $0x4b8] sm:$0xff]
        %v2377 = vld [vmem:[%s2224 + $0x4c0] sm:$0xff]
        %v2378 = vld [vmem:[%s2224 + $0x4c8] sm:$0xff]
        %v2379 = vld [vmem:[%s2224 + $0x4d0] sm:$0xff]
        %v2380 = vld [vmem:[%s2224 + $0x4d8] sm:$0xff]
        %v2381 = vld [vmem:[%s2224 + $0x4e0] sm:$0xff]
        %v2382 = vld [vmem:[%s2224 + $0x4e8] sm:$0xff]
        %v2383 = vld [vmem:[%s2224 + $0x4f0] sm:$0xff]
        %v2384 = vld [vmem:[%s2224 + $0x4f8] sm:$0xff]
        %v2385 = vld [vmem:[%s2224 + $0x500] sm:$0xff]
        %v2386 = vld [vmem:[%s2224 + $0x508] sm:$0xff]
        %v2387 = vld [vmem:[%s2224 + $0x510] sm:$0xff]
        %v2388 = vld [vmem:[%s2224 + $0x518] sm:$0xff]
        %v2389 = vld [vmem:[%s2224 + $0x520] sm:$0xff]
        %v2390 = vld [vmem:[%s2224 + $0x528] sm:$0xff]
        %v2391 = vld [vmem:[%s2224 + $0x530] sm:$0xff]
        %v2392 = vld [vmem:[%s2224 + $0x538] sm:$0xff]
        %v2393 = vld [vmem:[%s2224 + $0x540] sm:$0xff]
        %v2394 = vld [vmem:[%s2224 + $0x548] sm:$0xff]
        %v2395 = vld [vmem:[%s2224 + $0x550] sm:$0xff]
        %v2396 = vld [vmem:[%s2224 + $0x558] sm:$0xff]
        %v2397 = vld [vmem:[%s2224 + $0x560] sm:$0xff]
        %v2398 = vld [vmem:[%s2224 + $0x568] sm:$0xff]
        %v2399 = vld [vmem:[%s2224 + $0x570] sm:$0xff]
        %v2400 = vld [vmem:[%s2224 + $0x578] sm:$0xff]
        %v2401 = vld [vmem:[%s2224 + $0x580] sm:$0xff]
        %v2402 = vld [vmem:[%s2224 + $0x588] sm:$0xff]
        %v2403 = vld [vmem:[%s2224 + $0x590] sm:$0xff]
        %v2404 = vld [vmem:[%s2224 + $0x598] sm:$0xff]
        %v2405 = vld [vmem:[%s2224 + $0x5a0] sm:$0xff]
        %v2406 = vld [vmem:[%s2224 + $0x5a8] sm:$0xff]
        %v2407 = vld [vmem:[%s2224 + $0x5b0] sm:$0xff]
        %v2408 = vld [vmem:[%s2224 + $0x5b8] sm:$0xff]
        %v2409 = vld [vmem:[%s2224 + $0x5c0] sm:$0xff]
        %v2410 = vld [vmem:[%s2224 + $0x5c8] sm:$0xff]
        %v2411 = vld [vmem:[%s2224 + $0x5d0] sm:$0xff]
        %v2412 = vld [vmem:[%s2224 + $0x5d8] sm:$0xff]
        %v2413 = vld [vmem:[%s2224 + $0x5e0] sm:$0xff]
        %v2414 = vld [vmem:[%s2224 + $0x5e8] sm:$0xff]
        %v2415 = vld [vmem:[%s2224 + $0x5f0] sm:$0xff]
        %v2416 = vld [vmem:[%s2224 + $0x5f8] sm:$0xff]
        %v2417 = vld [vmem:[%s2224 + $0x600] sm:$0xff]
        %v2418 = vld [vmem:[%s2224 + $0x608] sm:$0xff]
        %v2419 = vld [vmem:[%s2224 + $0x610] sm:$0xff]
        %v2420 = vld [vmem:[%s2224 + $0x618] sm:$0xff]
        %v2421 = vld [vmem:[%s2224 + $0x620] sm:$0xff]
        %v2422 = vld [vmem:[%s2224 + $0x628] sm:$0xff]
        %v2423 = vld [vmem:[%s2224 + $0x630] sm:$0xff]
        %v2424 = vld [vmem:[%s2224 + $0x638] sm:$0xff]
        %v2425 = vld [vmem:[%s2224 + $0x640] sm:$0xff]
        %v2426 = vld [vmem:[%s2224 + $0x648] sm:$0xff]
        %v2427 = vld [vmem:[%s2224 + $0x650] sm:$0xff]
        %v2428 = vld [vmem:[%s2224 + $0x658] sm:$0xff]
        %v2429 = vld [vmem:[%s2224 + $0x660] sm:$0xff]
        %v2430 = vld [vmem:[%s2224 + $0x668] sm:$0xff]
        %v2431 = vld [vmem:[%s2224 + $0x670] sm:$0xff]
        %v2432 = vld [vmem:[%s2224 + $0x678] sm:$0xff]
        %v2433 = vld [vmem:[%s2224 + $0x680] sm:$0xff]
        %v2434 = vld [vmem:[%s2224 + $0x688] sm:$0xff]
        %v2435 = vld [vmem:[%s2224 + $0x690] sm:$0xff]
        %v2436 = vld [vmem:[%s2224 + $0x698] sm:$0xff]
        %v2437 = vld [vmem:[%s2224 + $0x6a0] sm:$0xff]
        %v2438 = vld [vmem:[%s2224 + $0x6a8] sm:$0xff]
        %v2439 = vld [vmem:[%s2224 + $0x6b0] sm:$0xff]
        %v2440 = vld [vmem:[%s2224 + $0x6b8] sm:$0xff]
        %v2441 = vld [vmem:[%s2224 + $0x6c0] sm:$0xff]
        %v2442 = vld [vmem:[%s2224 + $0x6c8] sm:$0xff]
        %v2443 = vld [vmem:[%s2224 + $0x6d0] sm:$0xff]
        %v2444 = vld [vmem:[%s2224 + $0x6d8] sm:$0xff]
        %v2445 = vld [vmem:[%s2224 + $0x6e0] sm:$0xff]
        %v2446 = vld [vmem:[%s2224 + $0x6e8] sm:$0xff]
        %v2447 = vld [vmem:[%s2224 + $0x6f0] sm:$0xff]
        %v2448 = vld [vmem:[%s2224 + $0x6f8] sm:$0xff]
        %v2449 = vld [vmem:[%s2224 + $0x700] sm:$0xff]
        %v2450 = vld [vmem:[%s2224 + $0x708] sm:$0xff]
        %v2451 = vld [vmem:[%s2224 + $0x710] sm:$0xff]
        %v2452 = vld [vmem:[%s2224 + $0x718] sm:$0xff]
        %v2453 = vld [vmem:[%s2224 + $0x720] sm:$0xff]
        %v2454 = vld [vmem:[%s2224 + $0x728] sm:$0xff]
        %v2455 = vld [vmem:[%s2224 + $0x730] sm:$0xff]
        %v2456 = vld [vmem:[%s2224 + $0x738] sm:$0xff]
        %v2457 = vld [vmem:[%s2224 + $0x740] sm:$0xff]
        %v2458 = vld [vmem:[%s2224 + $0x748] sm:$0xff]
        %v2459 = vld [vmem:[%s2224 + $0x750] sm:$0xff]
        %v2460 = vld [vmem:[%s2224 + $0x758] sm:$0xff]
        %v2461 = vld [vmem:[%s2224 + $0x760] sm:$0xff]
        %v2462 = vld [vmem:[%s2224 + $0x768] sm:$0xff]
        %v2463 = vld [vmem:[%s2224 + $0x770] sm:$0xff]
        %v2464 = vld [vmem:[%s2224 + $0x778] sm:$0xff]
        %v2465 = vld [vmem:[%s2224 + $0x780] sm:$0xff]
        %v2466 = vld [vmem:[%s2224 + $0x788] sm:$0xff]
        %v2467 = vld [vmem:[%s2224 + $0x790] sm:$0xff]
        %v2468 = vld [vmem:[%s2224 + $0x798] sm:$0xff]
        %v2469 = vld [vmem:[%s2224 + $0x7a0] sm:$0xff]
        %v2470 = vld [vmem:[%s2224 + $0x7a8] sm:$0xff]
        %v2471 = vld [vmem:[%s2224 + $0x7b0] sm:$0xff]
        %v2472 = vld [vmem:[%s2224 + $0x7b8] sm:$0xff]
        %v2473 = vld [vmem:[%s2224 + $0x7c0] sm:$0xff]
        %v2474 = vld [vmem:[%s2224 + $0x7c8] sm:$0xff]
        %v2475 = vld [vmem:[%s2224 + $0x7d0] sm:$0xff]
        %v2476 = vld [vmem:[%s2224 + $0x7d8] sm:$0xff]
        %v2477 = vld [vmem:[%s2224 + $0x7e0] sm:$0xff]
        %v2478 = vld [vmem:[%s2224 + $0x7e8] sm:$0xff]
        %v2479 = vld [vmem:[%s2224 + $0x7f0] sm:$0xff]
        %v2480 = vld [vmem:[%s2224 + $0x7f8] sm:$0xff]
        %2481 = vmatprep.subr.mxu0 %v2226
        %2482 = vmatpush1.msra.mxu0 %v2225
        %2483 = vmatprep.subr.mxu0 %v2234
        %2484 = vmatpush1.msra.mxu0 %v2233
        %2485 = vmatprep.subr.mxu0 %v2242
        %2486 = vmatpush1.msra.mxu0 %v2241
        %2487 = vmatprep.subr.mxu0 %v2250
        %2488 = vmatpush1.msra.mxu0 %v2249
        %2489 = vmatprep.subr.mxu0 %v2258
        %2490 = vmatpush1.msra.mxu0 %v2257
        %2491 = vmatprep.subr.mxu0 %v2266
        %2492 = vmatpush1.msra.mxu0 %v2265
        %2493 = vmatprep.subr.mxu0 %v2274
        %2494 = vmatpush1.msra.mxu0 %v2273
        %2495 = vmatprep.subr.mxu0 %v2282
        %2496 = vmatpush1.msra.mxu0 %v2281
        %2497 = vmatprep.subr.mxu0 %v2290
        %2498 = vmatpush1.msra.mxu0 %v2289
        %2499 = vmatprep.subr.mxu0 %v2298
        %2500 = vmatpush1.msra.mxu0 %v2297
        %2501 = vmatprep.subr.mxu0 %v2306
        %2502 = vmatpush1.msra.mxu0 %v2305
        %2503 = vmatprep.subr.mxu0 %v2314
        %2504 = vmatpush1.msra.mxu0 %v2313
        %2505 = vmatprep.subr.mxu0 %v2322
        %2506 = vmatpush1.msra.mxu0 %v2321
        %2507 = vmatprep.subr.mxu0 %v2330
        %2508 = vmatpush1.msra.mxu0 %v2329
        %2509 = vmatprep.subr.mxu0 %v2338
        %2510 = vmatpush1.msra.mxu0 %v2337
        %2511 = vmatprep.subr.mxu0 %v2346
        %2512 = vmatpush1.msra.mxu0 %v2345
        %2513 = vmatprep.subr.mxu0 %v2354
        %2514 = vmatpush1.msra.mxu0 %v2353
        %2515 = vmatprep.subr.mxu0 %v2362
        %2516 = vmatpush1.msra.mxu0 %v2361
        %2517 = vmatprep.subr.mxu0 %v2370
        %2518 = vmatpush1.msra.mxu0 %v2369
        %2519 = vmatprep.subr.mxu0 %v2378
        %2520 = vmatpush1.msra.mxu0 %v2377
        %2521 = vmatprep.subr.mxu0 %v2386
        %2522 = vmatpush1.msra.mxu0 %v2385
        %2523 = vmatprep.subr.mxu0 %v2394
        %2524 = vmatpush1.msra.mxu0 %v2393
        %2525 = vmatprep.subr.mxu0 %v2402
        %2526 = vmatpush1.msra.mxu0 %v2401
        %2527 = vmatprep.subr.mxu0 %v2410
        %2528 = vmatpush1.msra.mxu0 %v2409
        %2529 = vmatprep.subr.mxu0 %v2418
        %2530 = vmatpush1.msra.mxu0 %v2417
        %2531 = vmatprep.subr.mxu0 %v2426
        %2532 = vmatpush1.msra.mxu0 %v2425
        %2533 = vmatprep.subr.mxu0 %v2434
        %2534 = vmatpush1.msra.mxu0 %v2433
        %2535 = vmatprep.subr.mxu0 %v2442
        %2536 = vmatpush1.msra.mxu0 %v2441
        %2537 = vmatprep.subr.mxu0 %v2450
        %2538 = vmatpush1.msra.mxu0 %v2449
        %2539 = vmatprep.subr.mxu0 %v2458
        %2540 = vmatpush1.msra.mxu0 %v2457
        %2541 = vmatprep.subr.mxu0 %v2466
        %2542 = vmatpush1.msra.mxu0 %v2465
        %2543 = vmatprep.subr.mxu0 %v2474
        %2544 = vmatpush1.msra.mxu0 %v2473
        %2545 = vmatprep.mubr.f32.mxu0 %v2222
        %2546 = vmatmul.mubr.f32.gmra.mrb[0].mxu0 %v2220
        %v2547 = vpop.f32.mrb[0].mxu0
        %v2548 = vadd.f32 0.0, %v2547
        %v2549 = vpop.f32.mrb[0].mxu0
        %v2550 = vadd.f32 0.0, %v2549
        %2551 = vdwg.mxu0
        %2552 = vmatprep.subr.mxu0 %v2228
        %2553 = vmatpush1.msra.mxu0 %v2227
        %2554 = vmatprep.subr.mxu0 %v2236
        %2555 = vmatpush1.msra.mxu0 %v2235
        %2556 = vmatprep.subr.mxu0 %v2244
        %2557 = vmatpush1.msra.mxu0 %v2243
        %2558 = vmatprep.subr.mxu0 %v2252
        %2559 = vmatpush1.msra.mxu0 %v2251
        %2560 = vmatprep.subr.mxu0 %v2260
        %2561 = vmatpush1.msra.mxu0 %v2259
        %2562 = vmatprep.subr.mxu0 %v2268
        %2563 = vmatpush1.msra.mxu0 %v2267
        %2564 = vmatprep.subr.mxu0 %v2276
        %2565 = vmatpush1.msra.mxu0 %v2275
        %2566 = vmatprep.subr.mxu0 %v2284
        %2567 = vmatpush1.msra.mxu0 %v2283
        %2568 = vmatprep.subr.mxu0 %v2292
        %2569 = vmatpush1.msra.mxu0 %v2291
        %2570 = vmatprep.subr.mxu0 %v2300
        %2571 = vmatpush1.msra.mxu0 %v2299
        %2572 = vmatprep.subr.mxu0 %v2308
        %2573 = vmatpush1.msra.mxu0 %v2307
        %2574 = vmatprep.subr.mxu0 %v2316
        %2575 = vmatpush1.msra.mxu0 %v2315
        %2576 = vmatprep.subr.mxu0 %v2324
        %2577 = vmatpush1.msra.mxu0 %v2323
        %2578 = vmatprep.subr.mxu0 %v2332
        %2579 = vmatpush1.msra.mxu0 %v2331
        %2580 = vmatprep.subr.mxu0 %v2340
        %2581 = vmatpush1.msra.mxu0 %v2339
        %2582 = vmatprep.subr.mxu0 %v2348
        %2583 = vmatpush1.msra.mxu0 %v2347
        %2584 = vmatprep.subr.mxu0 %v2356
        %2585 = vmatpush1.msra.mxu0 %v2355
        %2586 = vmatprep.subr.mxu0 %v2364
        %2587 = vmatpush1.msra.mxu0 %v2363
        %2588 = vmatprep.subr.mxu0 %v2372
        %2589 = vmatpush1.msra.mxu0 %v2371
        %2590 = vmatprep.subr.mxu0 %v2380
        %2591 = vmatpush1.msra.mxu0 %v2379
        %2592 = vmatprep.subr.mxu0 %v2388
        %2593 = vmatpush1.msra.mxu0 %v2387
        %2594 = vmatprep.subr.mxu0 %v2396
        %2595 = vmatpush1.msra.mxu0 %v2395
        %2596 = vmatprep.subr.mxu0 %v2404
        %2597 = vmatpush1.msra.mxu0 %v2403
        %2598 = vmatprep.subr.mxu0 %v2412
        %2599 = vmatpush1.msra.mxu0 %v2411
        %2600 = vmatprep.subr.mxu0 %v2420
        %2601 = vmatpush1.msra.mxu0 %v2419
        %2602 = vmatprep.subr.mxu0 %v2428
        %2603 = vmatpush1.msra.mxu0 %v2427
        %2604 = vmatprep.subr.mxu0 %v2436
        %2605 = vmatpush1.msra.mxu0 %v2435
        %2606 = vmatprep.subr.mxu0 %v2444
        %2607 = vmatpush1.msra.mxu0 %v2443
        %2608 = vmatprep.subr.mxu0 %v2452
        %2609 = vmatpush1.msra.mxu0 %v2451
        %2610 = vmatprep.subr.mxu0 %v2460
        %2611 = vmatpush1.msra.mxu0 %v2459
        %2612 = vmatprep.subr.mxu0 %v2468
        %2613 = vmatpush1.msra.mxu0 %v2467
        %2614 = vmatprep.subr.mxu0 %v2476
        %2615 = vmatpush1.msra.mxu0 %v2475
        %2616 = vmatprep.mubr.f32.mxu0 %v2222
        %2617 = vmatmul.mubr.f32.gmra.mrb[0].mxu0 %v2220
        %v2618 = vpop.f32.mrb[0].mxu0
        %v2619 = vadd.f32 0.0, %v2618
        %v2620 = vpop.f32.mrb[0].mxu0
        %v2621 = vadd.f32 0.0, %v2620
        %2622 = vdwg.mxu0
        %2623 = vmatprep.subr.mxu0 %v2230
        %2624 = vmatpush1.msra.mxu0 %v2229
        %2625 = vmatprep.subr.mxu0 %v2238
        %2626 = vmatpush1.msra.mxu0 %v2237
        %2627 = vmatprep.subr.mxu0 %v2246
        %2628 = vmatpush1.msra.mxu0 %v2245
        %2629 = vmatprep.subr.mxu0 %v2254
        %2630 = vmatpush1.msra.mxu0 %v2253
        %2631 = vmatprep.subr.mxu0 %v2262
        %2632 = vmatpush1.msra.mxu0 %v2261
        %2633 = vmatprep.subr.mxu0 %v2270
        %2634 = vmatpush1.msra.mxu0 %v2269
        %2635 = vmatprep.subr.mxu0 %v2278
        %2636 = vmatpush1.msra.mxu0 %v2277
        %2637 = vmatprep.subr.mxu0 %v2286
        %2638 = vmatpush1.msra.mxu0 %v2285
        %2639 = vmatprep.subr.mxu0 %v2294
        %2640 = vmatpush1.msra.mxu0 %v2293
        %2641 = vmatprep.subr.mxu0 %v2302
        %2642 = vmatpush1.msra.mxu0 %v2301
        %2643 = vmatprep.subr.mxu0 %v2310
        %2644 = vmatpush1.msra.mxu0 %v2309
        %2645 = vmatprep.subr.mxu0 %v2318
        %2646 = vmatpush1.msra.mxu0 %v2317
        %2647 = vmatprep.subr.mxu0 %v2326
        %2648 = vmatpush1.msra.mxu0 %v2325
        %2649 = vmatprep.subr.mxu0 %v2334
        %2650 = vmatpush1.msra.mxu0 %v2333
        %2651 = vmatprep.subr.mxu0 %v2342
        %2652 = vmatpush1.msra.mxu0 %v2341
        %2653 = vmatprep.subr.mxu0 %v2350
        %2654 = vmatpush1.msra.mxu0 %v2349
        %2655 = vmatprep.subr.mxu0 %v2358
        %2656 = vmatpush1.msra.mxu0 %v2357
        %2657 = vmatprep.subr.mxu0 %v2366
        %2658 = vmatpush1.msra.mxu0 %v2365
        %2659 = vmatprep.subr.mxu0 %v2374
        %2660 = vmatpush1.msra.mxu0 %v2373
        %2661 = vmatprep.subr.mxu0 %v2382
        %2662 = vmatpush1.msra.mxu0 %v2381
        %2663 = vmatprep.subr.mxu0 %v2390
        %2664 = vmatpush1.msra.mxu0 %v2389
        %2665 = vmatprep.subr.mxu0 %v2398
        %2666 = vmatpush1.msra.mxu0 %v2397
        %2667 = vmatprep.subr.mxu0 %v2406
        %2668 = vmatpush1.msra.mxu0 %v2405
        %2669 = vmatprep.subr.mxu0 %v2414
        %2670 = vmatpush1.msra.mxu0 %v2413
        %2671 = vmatprep.subr.mxu0 %v2422
        %2672 = vmatpush1.msra.mxu0 %v2421
        %2673 = vmatprep.subr.mxu0 %v2430
        %2674 = vmatpush1.msra.mxu0 %v2429
        %2675 = vmatprep.subr.mxu0 %v2438
        %2676 = vmatpush1.msra.mxu0 %v2437
        %2677 = vmatprep.subr.mxu0 %v2446
        %2678 = vmatpush1.msra.mxu0 %v2445
        %2679 = vmatprep.subr.mxu0 %v2454
        %2680 = vmatpush1.msra.mxu0 %v2453
        %2681 = vmatprep.subr.mxu0 %v2462
        %2682 = vmatpush1.msra.mxu0 %v2461
        %2683 = vmatprep.subr.mxu0 %v2470
        %2684 = vmatpush1.msra.mxu0 %v2469
        %2685 = vmatprep.subr.mxu0 %v2478
        %2686 = vmatpush1.msra.mxu0 %v2477
        %2687 = vmatprep.mubr.f32.mxu0 %v2222
        %2688 = vmatmul.mubr.f32.gmra.mrb[0].mxu0 %v2220
        %v2689 = vpop.f32.mrb[0].mxu0
        %v2690 = vadd.f32 0.0, %v2689
        %v2691 = vpop.f32.mrb[0].mxu0
        %v2692 = vadd.f32 0.0, %v2691
        %2693 = vdwg.mxu0
        %2694 = vmatprep.subr.mxu0 %v2232
        %2695 = vmatpush1.msra.mxu0 %v2231
        %2696 = vmatprep.subr.mxu0 %v2240
        %2697 = vmatpush1.msra.mxu0 %v2239
        %2698 = vmatprep.subr.mxu0 %v2248
        %2699 = vmatpush1.msra.mxu0 %v2247
        %2700 = vmatprep.subr.mxu0 %v2256
        %2701 = vmatpush1.msra.mxu0 %v2255
        %2702 = vmatprep.subr.mxu0 %v2264
        %2703 = vmatpush1.msra.mxu0 %v2263
        %2704 = vmatprep.subr.mxu0 %v2272
        %2705 = vmatpush1.msra.mxu0 %v2271
        %2706 = vmatprep.subr.mxu0 %v2280
        %2707 = vmatpush1.msra.mxu0 %v2279
        %2708 = vmatprep.subr.mxu0 %v2288
        %2709 = vmatpush1.msra.mxu0 %v2287
        %2710 = vmatprep.subr.mxu0 %v2296
        %2711 = vmatpush1.msra.mxu0 %v2295
        %2712 = vmatprep.subr.mxu0 %v2304
        %2713 = vmatpush1.msra.mxu0 %v2303
        %2714 = vmatprep.subr.mxu0 %v2312
        %2715 = vmatpush1.msra.mxu0 %v2311
        %2716 = vmatprep.subr.mxu0 %v2320
        %2717 = vmatpush1.msra.mxu0 %v2319
        %2718 = vmatprep.subr.mxu0 %v2328
        %2719 = vmatpush1.msra.mxu0 %v2327
        %2720 = vmatprep.subr.mxu0 %v2336
        %2721 = vmatpush1.msra.mxu0 %v2335
        %2722 = vmatprep.subr.mxu0 %v2344
        %2723 = vmatpush1.msra.mxu0 %v2343
        %2724 = vmatprep.subr.mxu0 %v2352
        %2725 = vmatpush1.msra.mxu0 %v2351
        %2726 = vmatprep.subr.mxu0 %v2360
        %2727 = vmatpush1.msra.mxu0 %v2359
        %2728 = vmatprep.subr.mxu0 %v2368
        %2729 = vmatpush1.msra.mxu0 %v2367
        %2730 = vmatprep.subr.mxu0 %v2376
        %2731 = vmatpush1.msra.mxu0 %v2375
        %2732 = vmatprep.subr.mxu0 %v2384
        %2733 = vmatpush1.msra.mxu0 %v2383
        %2734 = vmatprep.subr.mxu0 %v2392
        %2735 = vmatpush1.msra.mxu0 %v2391
        %2736 = vmatprep.subr.mxu0 %v2400
        %2737 = vmatpush1.msra.mxu0 %v2399
        %2738 = vmatprep.subr.mxu0 %v2408
        %2739 = vmatpush1.msra.mxu0 %v2407
        %2740 = vmatprep.subr.mxu0 %v2416
        %2741 = vmatpush1.msra.mxu0 %v2415
        %2742 = vmatprep.subr.mxu0 %v2424
        %2743 = vmatpush1.msra.mxu0 %v2423
        %2744 = vmatprep.subr.mxu0 %v2432
        %2745 = vmatpush1.msra.mxu0 %v2431
        %2746 = vmatprep.subr.mxu0 %v2440
        %2747 = vmatpush1.msra.mxu0 %v2439
        %2748 = vmatprep.subr.mxu0 %v2448
        %2749 = vmatpush1.msra.mxu0 %v2447
        %2750 = vmatprep.subr.mxu0 %v2456
        %2751 = vmatpush1.msra.mxu0 %v2455
        %2752 = vmatprep.subr.mxu0 %v2464
        %2753 = vmatpush1.msra.mxu0 %v2463
        %2754 = vmatprep.subr.mxu0 %v2472
        %2755 = vmatpush1.msra.mxu0 %v2471
        %2756 = vmatprep.subr.mxu0 %v2480
        %2757 = vmatpush1.msra.mxu0 %v2479
        %2758 = vmatprep.mubr.f32.mxu0 %v2222
        %2759 = vmatmul.mubr.f32.gmra.mrb[0].mxu0 %v2220
        %v2760 = vpop.f32.mrb[0].mxu0
        %v2761 = vadd.f32 0.0, %v2760
        %v2762 = vpop.f32.mrb[0].mxu0
        %v2763 = vadd.f32 0.0, %v2762
        %2764 = vdwg.mxu0
        %v2765 = vadd.f32 %v2140, %v2548
        %v2766 = vadd.f32 %v2141, %v2550
        %v2767 = vadd.f32 %v2142, %v2619
        %v2768 = vadd.f32 %v2143, %v2621
        %v2769 = vadd.f32 %v2144, %v2690
        %v2770 = vadd.f32 %v2145, %v2692
        %v2771 = vadd.f32 %v2146, %v2761
        %v2772 = vadd.f32 %v2147, %v2763
        %v2781 = vcombine.low %v2765, %v2766
        %v2782 = vcombine.low %v2767, %v2768
        %v2783 = vcombine.low %v2769, %v2770
        %v2784 = vcombine.low %v2771, %v2772
        %2789 = vst [vmem:[%s286] sm:$0xff] %v2781
        %2790 = vst [vmem:[%s286 + $0x8] sm:$0xff] %v2782
        %2791 = vst [vmem:[%s286 + $0x10] sm:$0xff] %v2783
        %2792 = vst [vmem:[%s286 + $0x18] sm:$0xff] %v2784
        %v2793 = vld [vmem:[%s276] sm:$0xff]
        %v2794 = vld [vmem:[%s276 + $0x8] sm:$0xff]
        %v2795 = vld [vmem:[%s276 + $0x10] sm:$0xff]
        %v2796 = vld [vmem:[%s276 + $0x18] sm:$0xff]
        %s2797 = scalar_lea.vmem %s286, 32
        %2798 = vst [vmem:[%s2797] sm:$0xff] %v2793
        %2799 = vst [vmem:[%s2797 + $0x8] sm:$0xff] %v2794
        %2800 = vst [vmem:[%s2797 + $0x10] sm:$0xff] %v2795
        %2801 = vst [vmem:[%s2797 + $0x18] sm:$0xff] %v2796
        %s2802 = smul.u32 8, %s21
        %p2803 = scmp.lt.s32.totalorder %s20, 1
        %s2804 = scalar_select %p2803, %s20, 1
        %p2805 = scmp.lt.s32.totalorder %s2802, 7
        %s2806 = scalar_select %p2805, %s2802, 7
        %s2807 = smul.addr %s2804, 16
        %s2808 = sadd.s32 %s2806, %s2807
        %s2809 = smul.addr %s2808, 4
        %s2810 = scalar_lea.vmem %s4, %s2809
        // Predicated region
        $region41: #{upsample_forward.1} parent=35 // pred_check
          %p2811 = pneg %p146
        $region42: #{upsample_forward.1} parent=35 // pred_check_branch
          %2813 = sbr.rel (%p2811) target = $region44
        $region43: #{upsample_forward.1} parent=35 // pred_region
          %s2814 = smul.u32 8, %s21
        $region44: #{upsample_forward.1} parent=35 // pred_fallthru
          _
      $region36: #{upsample_forward.1} parent=5 // pred_fallthru
        _
      %p2815 = scmp.le.s32.totalorder 2, %s11
      // Predicated region
      $region45: #{upsample_forward.1} parent=5 // pred_check
        %p2816 = pneg %p2815
      $region46: #{upsample_forward.1} parent=5 // pred_check_branch
        %2818 = sbr.rel (%p2816) target = $region48
      $region47: #{upsample_forward.1} parent=5 // pred_region
        %s2819 = ssub.s32 %s11, 2
        // Predicated region
        $region49: #{upsample_forward.1} parent=47 // pred_check
          %p2820 = pneg %p152
        $region50: #{upsample_forward.1} parent=47 // pred_check_branch
          %2822 = sbr.rel (%p2820) target = $region52
        $region51: #{upsample_forward.1} parent=47 // pred_region
          %s2823 = smul.u32 8, %s23
          %p2824 = scmp.lt.s32.totalorder %s22, 1
          %s2825 = scalar_select %p2824, %s22, 1
          %p2826 = scmp.lt.s32.totalorder %s2823, 7
          %s2827 = scalar_select %p2826, %s2823, 7
          %s2828 = smul.addr %s2825, 16
          %s2829 = sadd.s32 %s2827, %s2828
          %s2830 = smul.addr %s2829, 4
          %s2831 = scalar_lea.vmem %s4, %s2830
        $region52: #{upsample_forward.1} parent=47 // pred_fallthru
          _
      $region48: #{upsample_forward.1} parent=5 // pred_fallthru
        _
    $region6: #{upsample_forward.1} parent=1 // loop_footer
      %s15 = sadd.s32 1, %s11
    $region7: #{upsample_forward.1} parent=1 // loop_footer_branch
      %10 = sbr.rel target = $region3
    $region8: #{upsample_forward.1} parent=1 // loop_exit
      _
    %2832 = vsyncpa [#allocation3], 1
    %s2833 = scalar_lea.sflag [#allocation3], 1
    %2834 = vsyncpa %s2833, 1

</llo_original>
